<compile_context>
chip_gen: v7x
topology: tpu7x:2x2x1
jax: 0.10.0
libtpu: 0.0.40
codegen_flags: <defaults>
</compile_context>

<pallas_src>
import functools

import jax
import jax.numpy as jnp
from jax.experimental import pallas as pl
from jax.experimental.pallas import tpu as pltpu

_LN_EPS = 1e-6          # signjoey transformer_layers.py: nn.LayerNorm(size, eps=1e-6)
_NEG_INF = -1e9
_LANE = 128


def _round_up(n, m=_LANE):
    return ((n + m - 1) // m) * m


# ------------------------------ in-kernel helpers ------------------------------ #

def _ln_padded(v, g, b, n_real):
    """LayerNorm over the last axis where `v` is zero-padded beyond n_real lanes.

    Uses E[x^2] - mu^2 with a 1/n_real denominator so the zero padding contributes
    nothing; padded gamma/beta are zero so padded lanes stay exactly zero.
    """
    inv_n = 1.0 / float(n_real)
    mu = jnp.sum(v, axis=-1, keepdims=True) * inv_n
    var = jnp.maximum(jnp.sum(v * v, axis=-1, keepdims=True) * inv_n - mu * mu, 0.0)
    return (v - mu) * jax.lax.rsqrt(var + _LN_EPS) * g + b


# ------------------------------ the fused kernel ------------------------------- #

def _fused_model_kernel(x_ref, bias_ref, maskf_ref, pe_ref, we_ref, be_ref,
                        ln1_g_ref, ln1_b_ref, wqkv_ref, bqkv_ref, wo_ref, bo_ref,
                        ln2_g_ref, ln2_b_ref, w1_ref, b1_ref, w2_ref, b2_ref,
                        lnf_g_ref, lnf_b_ref, hw1_ref, hb1_ref, hw2_ref, hb2_ref,
                        out_ref, h_scr,
                        *, num_heads, d_model, head_dim):
    layer = pl.program_id(1)
    n_layers = pl.num_programs(1)
    Bb, T, Fp = x_ref.shape
    Dp = h_scr.shape[-1]
    rows = Bb * T

    # ---- SpatialEmbeddings (Linear) + positional encoding, layer 0 only -----------
    # TODO(synk): optional norm_type / activation_type / scale of SpatialEmbeddings not
    #             modeled (defaults off in the reference config).
    @pl.when(layer == 0)
    def _():
        x = x_ref[...].reshape(rows, Fp)
        e = jnp.dot(x, we_ref[...], preferred_element_type=jnp.float32) + be_ref[...]
        h_scr[...] = e.reshape(Bb, T, Dp) + pe_ref[...][None, :, :]

    # ---- pre-LN encoder layer `layer` (activation stays resident in VMEM) ---------
    hf = h_scr[...].reshape(rows, Dp)

    xn = _ln_padded(hf, ln1_g_ref[0], ln1_b_ref[0], d_model)
    qkv = jnp.dot(xn, wqkv_ref[0], preferred_element_type=jnp.float32) + bqkv_ref[0]
    q = qkv[:, :Dp].reshape(Bb, T, Dp)            # 1/sqrt(dh) folded into Wq / bq
    k = qkv[:, Dp:2 * Dp].reshape(Bb, T, Dp)
    v = qkv[:, 2 * Dp:].reshape(Bb, T, Dp)

    bias = bias_ref[...]                          # (Bb, 1, T) additive key mask
    ctx_parts = []
    for hh in range(num_heads):                   # static unroll; batch handled by einsum
        lo = hh * head_dim
        qh = q[:, :, lo:lo + head_dim]
        kh = k[:, :, lo:lo + head_dim]
        vh = v[:, :, lo:lo + head_dim]
        s = jnp.einsum('bqd,bkd->bqk', qh, kh,
                       preferred_element_type=jnp.float32) + bias
        s = s - jnp.max(s, axis=-1, keepdims=True)
        p = jnp.exp(s)
        p = p / jnp.sum(p, axis=-1, keepdims=True)
        ctx_parts.append(jnp.einsum('bqk,bkd->bqd', p, vh,
                                    preferred_element_type=jnp.float32))
    pad_lanes = Dp - num_heads * head_dim
    if pad_lanes:
        ctx_parts.append(jnp.zeros((Bb, T, pad_lanes), jnp.float32))
    ctx = jnp.concatenate(ctx_parts, axis=-1).reshape(rows, Dp)

    attn = jnp.dot(ctx, wo_ref[0], preferred_element_type=jnp.float32) + bo_ref[0]
    h1 = hf + attn

    xn2 = _ln_padded(h1, ln2_g_ref[0], ln2_b_ref[0], d_model)
    ff = jnp.maximum(jnp.dot(xn2, w1_ref[0], preferred_element_type=jnp.float32)
                     + b1_ref[0], 0.0)
    ff = jnp.dot(ff, w2_ref[0], preferred_element_type=jnp.float32) + b2_ref[0]
    h2 = h1 + ff
    h_scr[...] = h2.reshape(Bb, T, Dp)

    # ---- final encoder LN + masked mean-pool + MLP head, last layer only ----------
    # TODO(synk): MLPHead internals not shown in the reference source; masked mean-pool
    #             + Linear-ReLU-Linear assumed.
    @pl.when(layer == n_layers - 1)
    def _():
        hn = _ln_padded(h2, lnf_g_ref[...], lnf_b_ref[...], d_model).reshape(Bb, T, Dp)
        m = maskf_ref[...]                        # (Bb, T, 1)
        denom = jnp.maximum(jnp.sum(m, axis=1), 1.0)
        pooled = jnp.sum(hn * m, axis=1) / denom  # (Bb, Dp)
        z = jnp.maximum(jnp.dot(pooled, hw1_ref[...],
                                preferred_element_type=jnp.float32) + hb1_ref[...], 0.0)
        out_ref[0] = (jnp.dot(z, hw2_ref[...], preferred_element_type=jnp.float32)
                      + hb2_ref[...]).astype(out_ref.dtype)


# ------------------------------ host-side wrappers ------------------------------ #

def sinusoidal_pe(T, D):
    pos = jnp.arange(T, dtype=jnp.float32)[:, None]
    i = jnp.arange(0, D, 2, dtype=jnp.float32)[None, :]
    angle = pos / jnp.power(10000.0, i / D)
    pe = jnp.zeros((T, D), jnp.float32)
    pe = pe.at[:, 0::2].set(jnp.sin(angle))
    pe = pe.at[:, 1::2].set(jnp.cos(angle))
    return pe


def _pick_block_b(batch, seq):
    """Pack batch rows into the MXU M dim, but keep >=2 batch blocks when possible
    so the 'parallel' grid axis feeds both v7x TensorCores."""
    bb = max(1, min(batch, pl.cdiv(128, max(seq, 1))))
    while batch % bb:
        bb -= 1
    while bb > 1 and batch // bb < 2:
        bb -= 1
        while batch % bb:
            bb -= 1
    return bb


def pack_params(params, num_heads):
    """Pad every weight to 128-lane multiples, fold 1/sqrt(dh) into Wq/bq, fuse QKV and
    stack per-layer tensors along a leading L axis for layer-streamed BlockSpecs."""
    F, D = params['embed']['w'].shape
    FF = params['layers'][0]['w1'].shape[1]
    HH = params['head']['w1'].shape[1]
    C = params['head']['w2'].shape[1]
    dh = D // num_heads
    scale = 1.0 / float(dh) ** 0.5
    Dp, Fp, FFp, HHp, Cp = (_round_up(n) for n in (D, F, FF, HH, C))

    def pad2(a, r, c):
        return jnp.pad(a, ((0, r - a.shape[0]), (0, c - a.shape[1])))

    def padv(a, c):
        a = a.reshape(1, -1)
        return jnp.pad(a, ((0, 0), (0, c - a.shape[1])))

    def stack(fn):
        return jnp.stack([fn(lp) for lp in params['layers']], axis=0)

    p = {
        'we': pad2(params['embed']['w'], Fp, Dp),
        'be': padv(params['embed']['b'], Dp),
        'ln1_g': stack(lambda lp: padv(lp['ln1_g'], Dp)),
        'ln1_b': stack(lambda lp: padv(lp['ln1_b'], Dp)),
        'wqkv': stack(lambda lp: jnp.concatenate(
            [pad2(lp['wq'] * scale, Dp, Dp), pad2(lp['wk'], Dp, Dp),
             pad2(lp['wv'], Dp, Dp)], axis=1)),
        'bqkv': stack(lambda lp: jnp.concatenate(
            [padv(lp['bq'] * scale, Dp), padv(lp['bk'], Dp), padv(lp['bv'], Dp)], axis=1)),
        'wo': stack(lambda lp: pad2(lp['wo'], Dp, Dp)),
        'bo': stack(lambda lp: padv(lp['bo'], Dp)),
        'ln2_g': stack(lambda lp: padv(lp['ln2_g'], Dp)),
        'ln2_b': stack(lambda lp: padv(lp['ln2_b'], Dp)),
        'w1': stack(lambda lp: pad2(lp['w1'], Dp, FFp)),
        'b1': stack(lambda lp: padv(lp['b1'], FFp)),
        'w2': stack(lambda lp: pad2(lp['w2'], FFp, Dp)),
        'b2': stack(lambda lp: padv(lp['b2'], Dp)),
        'lnf_g': padv(params['ln_f_g'], Dp),
        'lnf_b': padv(params['ln_f_b'], Dp),
        'hw1': pad2(params['head']['w1'], Dp, HHp),
        'hb1': padv(params['head']['b1'], HHp),
        'hw2': pad2(params['head']['w2'], HHp, Cp),
        'hb2': padv(params['head']['b2'], Cp),
    }
    dims = dict(D=D, F=F, FF=FF, HH=HH, C=C, H=num_heads, dh=dh,
                Dp=Dp, Fp=Fp, FFp=FFp, HHp=HHp, Cp=Cp, L=len(params['layers']))
    return p, dims


def pallas_classification_forward(packed, x, mask, *, dims):
    B, T, F = x.shape
    D, Dp, Fp, Cp, C = dims['D'], dims['Dp'], dims['Fp'], dims['Cp'], dims['C']
    H, dh, L, HHp = dims['H'], dims['dh'], dims['L'], dims['HHp']

    xp = jnp.pad(x.astype(jnp.float32), ((0, 0), (0, 0), (0, Fp - F)))
    pe = jnp.pad(sinusoidal_pe(T, D), ((0, 0), (0, Dp - D)))
    add_bias = jnp.where(mask, 0.0, _NEG_INF).astype(jnp.float32).reshape(B, 1, T)
    maskf = mask.astype(jnp.float32).reshape(B, T, 1)

    Bb = _pick_block_b(B, T)
    n_blocks = B // Bb

    def batch_spec(shape):
        nd = len(shape)
        return pl.BlockSpec(shape, lambda b, l, _n=nd: (b,) + (0,) * (_n - 1))

    def const_spec(shape):
        nd = len(shape)
        return pl.BlockSpec(shape, lambda b, l, _n=nd: (0,) * _n)

    def layer_spec(arr):
        nd = arr.ndim
        return pl.BlockSpec((1,) + arr.shape[1:],
                            lambda b, l, _n=nd: (l,) + (0,) * (_n - 1))

    in_specs = [
        batch_spec((Bb, T, Fp)),          # x
        batch_spec((Bb, 1, T)),           # additive key mask
        batch_spec((Bb, T, 1)),           # pooling mask
        const_spec((T, Dp)),              # positional encoding
        const_spec((Fp, Dp)), const_spec((1, Dp)),          # embed W / b
    ] + [layer_spec(packed[k]) for k in
         ('ln1_g', 'ln1_b', 'wqkv', 'bqkv', 'wo', 'bo',
          'ln2_g', 'ln2_b', 'w1', 'b1', 'w2', 'b2')] + [
        const_spec((1, Dp)), const_spec((1, Dp)),            # final LN
        const_spec((Dp, HHp)), const_spec((1, HHp)),          # head W1 / b1
        const_spec((HHp, Cp)), const_spec((1, Cp)),           # head W2 / b2
    ]

    kernel = functools.partial(_fused_model_kernel, num_heads=H, d_model=D, head_dim=dh)

    logits_padded = pl.pallas_call(
        kernel,
        out_shape=jax.ShapeDtypeStruct((n_blocks, Bb, Cp), jnp.float32),
        grid=(n_blocks, L),
        in_specs=in_specs,
        out_specs=pl.BlockSpec((1, Bb, Cp), lambda b, l: (b, 0, 0)),
        scratch_shapes=[pltpu.VMEM((Bb, T, Dp), jnp.float32)],
        compiler_params=pltpu.CompilerParams(
            dimension_semantics=("parallel", "arbitrary")),
    )(xp, add_bias, maskf, pe, packed['we'], packed['be'],
      packed['ln1_g'], packed['ln1_b'], packed['wqkv'], packed['bqkv'],
      packed['wo'], packed['bo'], packed['ln2_g'], packed['ln2_b'],
      packed['w1'], packed['b1'], packed['w2'], packed['b2'],
      packed['lnf_g'], packed['lnf_b'],
      packed['hw1'], packed['hb1'], packed['hw2'], packed['hb2'])

    return logits_padded.reshape(B, Cp)[:, :C]


# ------------------------------ pure-JAX reference ------------------------------ #

def _ln_ref(v, g, b):
    mu = jnp.mean(v, axis=-1, keepdims=True)
    var = jnp.mean((v - mu) ** 2, axis=-1, keepdims=True)
    return (v - mu) * jax.lax.rsqrt(var + _LN_EPS) * g + b


def reference_forward(params, x, mask, *, num_heads):
    D = params['embed']['w'].shape[1]
    dh = D // num_heads
    scale = 1.0 / float(dh) ** 0.5
    B, T, _ = x.shape
    with jax.default_matmul_precision('highest'):
        h = x @ params['embed']['w'] + params['embed']['b'] + sinusoidal_pe(T, D)[None]
        bias = jnp.where(mask, 0.0, _NEG_INF)[:, None, None, :]
        for lp in params['layers']:
            xn = _ln_ref(h, lp['ln1_g'], lp['ln1_b'])
            q = ((xn @ lp['wq'] + lp['bq']) * scale).reshape(B, T, num_heads, dh)
            k = (xn @ lp['wk'] + lp['bk']).reshape(B, T, num_heads, dh)
            v = (xn @ lp['wv'] + lp['bv']).reshape(B, T, num_heads, dh)
            s = jnp.einsum('bqhd,bkhd->bhqk', q, k) + bias
            p = jax.nn.softmax(s, axis=-1)
            ctx = jnp.einsum('bhqk,bkhd->bqhd', p, v).reshape(B, T, D)
            h = h + ctx @ lp['wo'] + lp['bo']
            xn2 = _ln_ref(h, lp['ln2_g'], lp['ln2_b'])
            h = h + jnp.maximum(xn2 @ lp['w1'] + lp['b1'], 0.0) @ lp['w2'] + lp['b2']
        hn = _ln_ref(h, params['ln_f_g'], params['ln_f_b'])
        m = mask.astype(jnp.float32)[..., None]
        pooled = (hn * m).sum(axis=1) / jnp.maximum(m.sum(axis=1), 1.0)
        z = jnp.maximum(pooled @ params['head']['w1'] + params['head']['b1'], 0.0)
        return z @ params['head']['w2'] + params['head']['b2']


# ------------------------------ parameter init ---------------------------------- #

def init_params(key, feat, d, heads, ff, layers, head_hidden, classes):
    assert d % 2 == 0, "sinusoidal PE assumes an even embedding_dim"
    assert d % heads == 0

    def dense(k, din, dout):
        kw, kb = jax.random.split(k)
        return (0.1 * jax.random.normal(kw, (din, dout), jnp.float32),
                0.1 * jax.random.normal(kb, (dout,), jnp.float32))

    keys = iter(jax.random.split(key, 6 * layers + 3))
    params = {'layers': []}
    w, b = dense(next(keys), feat, d)
    params['embed'] = {'w': w, 'b': b}
    for _ in range(layers):
        lp = {'ln1_g': jnp.ones((d,), jnp.float32), 'ln1_b': jnp.zeros((d,), jnp.float32),
              'ln2_g': jnp.ones((d,), jnp.float32), 'ln2_b': jnp.zeros((d,), jnp.float32)}
        lp['wq'], lp['bq'] = dense(next(keys), d, d)
        lp['wk'], lp['bk'] = dense(next(keys), d, d)
        lp['wv'], lp['bv'] = dense(next(keys), d, d)
        lp['wo'], lp['bo'] = dense(next(keys), d, d)
        lp['w1'], lp['b1'] = dense(next(keys), d, ff)
        lp['w2'], lp['b2'] = dense(next(keys), ff, d)
        params['layers'].append(lp)
    params['ln_f_g'] = jnp.ones((d,), jnp.float32)
    params['ln_f_b'] = jnp.zeros((d,), jnp.float32)
    hw1, hb1 = dense(next(keys), d, head_hidden)
    hw2, hb2 = dense(next(keys), head_hidden, classes)
    params['head'] = {'w1': hw1, 'b1': hb1, 'w2': hw2, 'b2': hb2}
    return params


# ----------------------------------- main ---------------------------------------- #

if __name__ == "__main__":
    B, T, F = 2, 8, 16            # batch, frames, feature_size
    D, H, FF, L = 32, 4, 64, 2    # embedding_dim, num_heads, ff_size, num_layers
    HEAD_HIDDEN, C = 32, 10       # MLP head hidden size, num_classes

    key = jax.random.PRNGKey(0)
    k_x, k_p = jax.random.split(key)
    x = jax.random.normal(k_x, (B, T, F), jnp.float32)
    lengths = jnp.array([T, T - 2], jnp.int32)
    mask = jnp.arange(T)[None, :] < lengths[:, None]          # (B, T) bool, True = valid

    params = init_params(k_p, F, D, H, FF, L, HEAD_HIDDEN, C)
    packed, dims = pack_params(params, num_heads=H)

    fwd = jax.jit(functools.partial(pallas_classification_forward, dims=dims))
    logits = jax.block_until_ready(fwd(packed, x, mask))

    assert logits.shape == (B, C)
    assert bool(jnp.all(jnp.isfinite(logits)))

    ref = reference_forward(params, x, mask, num_heads=H)
    err = float(jnp.max(jnp.abs(logits - ref)))
    assert err < 2e-2, f"kernel vs reference mismatch: max abs err = {err}"
    print("KERNEL_OK")
</pallas_src>

<mosaic_0001>
module attributes {stable_mosaic.version = 11 : i64} {
  func.func @_fused_model_kernel(%arg0: i32, %arg1: i32, %arg2: memref<1x8x128xf32, #tpu.memory_space<vmem>>, %arg3: memref<1x1x8xf32, #tpu.memory_space<vmem>>, %arg4: memref<1x8x1xf32, #tpu.memory_space<vmem>>, %arg5: memref<8x128xf32, #tpu.memory_space<vmem>>, %arg6: memref<128x128xf32, #tpu.memory_space<vmem>>, %arg7: memref<1x128xf32, #tpu.memory_space<vmem>>, %arg8: memref<1x1x128xf32, #tpu.memory_space<vmem>>, %arg9: memref<1x1x128xf32, #tpu.memory_space<vmem>>, %arg10: memref<1x128x384xf32, #tpu.memory_space<vmem>>, %arg11: memref<1x1x384xf32, #tpu.memory_space<vmem>>, %arg12: memref<1x128x128xf32, #tpu.memory_space<vmem>>, %arg13: memref<1x1x128xf32, #tpu.memory_space<vmem>>, %arg14: memref<1x1x128xf32, #tpu.memory_space<vmem>>, %arg15: memref<1x1x128xf32, #tpu.memory_space<vmem>>, %arg16: memref<1x128x128xf32, #tpu.memory_space<vmem>>, %arg17: memref<1x1x128xf32, #tpu.memory_space<vmem>>, %arg18: memref<1x128x128xf32, #tpu.memory_space<vmem>>, %arg19: memref<1x1x128xf32, #tpu.memory_space<vmem>>, %arg20: memref<1x128xf32, #tpu.memory_space<vmem>>, %arg21: memref<1x128xf32, #tpu.memory_space<vmem>>, %arg22: memref<128x128xf32, #tpu.memory_space<vmem>>, %arg23: memref<1x128xf32, #tpu.memory_space<vmem>>, %arg24: memref<128x128xf32, #tpu.memory_space<vmem>>, %arg25: memref<1x128xf32, #tpu.memory_space<vmem>>, %arg26: memref<1x1x128xf32, #tpu.memory_space<vmem>>, %arg27: memref<1x8x128xf32, #tpu.memory_space<vmem>>) attributes {dimension_semantics = [#tpu.dimension_semantics<parallel>, #tpu.dimension_semantics<arbitrary>], iteration_bounds = array<i64: 2, 2>, scalar_prefetch = 0 : i64, scratch_operands = 1 : i64, tpu.core_type = #tpu.core_type<tc>, window_params = [{transform_indices = @transform_0, window_bounds = array<i64: 1, 8, 128>}, {transform_indices = @transform_1, window_bounds = array<i64: 1, 1, 8>}, {transform_indices = @transform_2, window_bounds = array<i64: 1, 8, 1>}, {pipeline_mode = #tpu.pipeline_mode<synchronous>, transform_indices = @transform_3, window_bounds = array<i64: 8, 128>}, {pipeline_mode = #tpu.pipeline_mode<synchronous>, transform_indices = @transform_4, window_bounds = array<i64: 128, 128>}, {pipeline_mode = #tpu.pipeline_mode<synchronous>, transform_indices = @transform_5, window_bounds = array<i64: 1, 128>}, {transform_indices = @transform_6, window_bounds = array<i64: 1, 1, 128>}, {transform_indices = @transform_7, window_bounds = array<i64: 1, 1, 128>}, {transform_indices = @transform_8, window_bounds = array<i64: 1, 128, 384>}, {transform_indices = @transform_9, window_bounds = array<i64: 1, 1, 384>}, {transform_indices = @transform_10, window_bounds = array<i64: 1, 128, 128>}, {transform_indices = @transform_11, window_bounds = array<i64: 1, 1, 128>}, {transform_indices = @transform_12, window_bounds = array<i64: 1, 1, 128>}, {transform_indices = @transform_13, window_bounds = array<i64: 1, 1, 128>}, {transform_indices = @transform_14, window_bounds = array<i64: 1, 128, 128>}, {transform_indices = @transform_15, window_bounds = array<i64: 1, 1, 128>}, {transform_indices = @transform_16, window_bounds = array<i64: 1, 128, 128>}, {transform_indices = @transform_17, window_bounds = array<i64: 1, 1, 128>}, {pipeline_mode = #tpu.pipeline_mode<synchronous>, transform_indices = @transform_18, window_bounds = array<i64: 1, 128>}, {pipeline_mode = #tpu.pipeline_mode<synchronous>, transform_indices = @transform_19, window_bounds = array<i64: 1, 128>}, {pipeline_mode = #tpu.pipeline_mode<synchronous>, transform_indices = @transform_20, window_bounds = array<i64: 128, 128>}, {pipeline_mode = #tpu.pipeline_mode<synchronous>, transform_indices = @transform_21, window_bounds = array<i64: 1, 128>}, {pipeline_mode = #tpu.pipeline_mode<synchronous>, transform_indices = @transform_22, window_bounds = array<i64: 128, 128>}, {pipeline_mode = #tpu.pipeline_mode<synchronous>, transform_indices = @transform_23, window_bounds = array<i64: 1, 128>}, {transform_indices = @transform_24, window_bounds = array<i64: 1, 1, 128>}]} {
    %c0_i32 = arith.constant 0 : i32
    %0 = arith.cmpi eq, %arg1, %c0_i32 : i32
    %1 = arith.extui %0 : i1 to i32
    %c0_i32_0 = arith.constant 0 : i32
    %2 = arith.cmpi ne, %1, %c0_i32_0 : i32
    scf.if %2 {
      %c0_79 = arith.constant 0 : index
      %c0_80 = arith.constant 0 : index
      %c0_81 = arith.constant 0 : index
      %172 = vector.load %arg2[%c0_79, %c0_80, %c0_81] : memref<1x8x128xf32, #tpu.memory_space<vmem>>, vector<1x8x128xf32>
      %173 = vector.shape_cast %172 : vector<1x8x128xf32> to vector<8x128xf32>
      %c0_82 = arith.constant 0 : index
      %c0_83 = arith.constant 0 : index
      %174 = vector.load %arg6[%c0_82, %c0_83] : memref<128x128xf32, #tpu.memory_space<vmem>>, vector<128x128xf32>
      %cst_84 = arith.constant dense<0.000000e+00> : vector<8x128xf32>
      %175 = tpu.matmul %173, %174, %cst_84 {dimension_numbers = #tpu.dot_dimension_numbers<[1], [0], [0], [1], [0, 0, 1, 1], [], []>} : vector<8x128xf32>, vector<128x128xf32>, vector<8x128xf32> -> vector<8x128xf32>
      %c0_85 = arith.constant 0 : index
      %c0_86 = arith.constant 0 : index
      %176 = vector.load %arg7[%c0_85, %c0_86] : memref<1x128xf32, #tpu.memory_space<vmem>>, vector<1x128xf32>
      %177 = vector.broadcast %176 : vector<1x128xf32> to vector<8x128xf32>
      %178 = arith.addf %175, %177 : vector<8x128xf32>
      %179 = vector.shape_cast %178 : vector<8x128xf32> to vector<1x8x128xf32>
      %c0_87 = arith.constant 0 : index
      %c0_88 = arith.constant 0 : index
      %180 = vector.load %arg5[%c0_87, %c0_88] : memref<8x128xf32, #tpu.memory_space<vmem>>, vector<8x128xf32>
      %181 = vector.shape_cast %180 : vector<8x128xf32> to vector<1x8x128xf32>
      %182 = arith.addf %179, %181 : vector<1x8x128xf32>
      %c0_89 = arith.constant 0 : index
      %c0_90 = arith.constant 0 : index
      %c0_91 = arith.constant 0 : index
      %183 = vector.load %arg27[%c0_89, %c0_90, %c0_91] : memref<1x8x128xf32, #tpu.memory_space<vmem>>, vector<1x8x128xf32>
      tpu.vector_store %arg27[%c0_89, %c0_90, %c0_91], %182 {strides = array<i32>} : memref<1x8x128xf32, #tpu.memory_space<vmem>>, vector<1x8x128xf32>,
    } else {
    }
    %c0 = arith.constant 0 : index
    %c0_1 = arith.constant 0 : index
    %c0_2 = arith.constant 0 : index
    %3 = vector.load %arg27[%c0, %c0_1, %c0_2] : memref<1x8x128xf32, #tpu.memory_space<vmem>>, vector<1x8x128xf32>
    %4 = vector.shape_cast %3 : vector<1x8x128xf32> to vector<8x128xf32>
    %c0_3 = arith.constant 0 : index
    %c0_4 = arith.constant 0 : index
    %c0_5 = arith.constant 0 : index
    %5 = vector.load %arg8[%c0_3, %c0_4, %c0_5] : memref<1x1x128xf32, #tpu.memory_space<vmem>>, vector<1x1x128xf32>
    %6 = vector.shape_cast %5 : vector<1x1x128xf32> to vector<1x128xf32>
    %c0_6 = arith.constant 0 : index
    %c0_7 = arith.constant 0 : index
    %c0_8 = arith.constant 0 : index
    %7 = vector.load %arg9[%c0_6, %c0_7, %c0_8] : memref<1x1x128xf32, #tpu.memory_space<vmem>>, vector<1x1x128xf32>
    %8 = vector.shape_cast %7 : vector<1x1x128xf32> to vector<1x128xf32>
    %cst = arith.constant dense<0.000000e+00> : vector<8xf32>
    %9 = vector.multi_reduction <add>, %4, %cst [1] : vector<8x128xf32> to vector<8xf32>
    %10 = vector.shape_cast %9 : vector<8xf32> to vector<8x1xf32>
    %cst_9 = arith.constant 3.125000e-02 : f32
    %11 = vector.broadcast %cst_9 : f32 to vector<8x1xf32>
    %12 = arith.mulf %10, %11 : vector<8x1xf32>
    %13 = arith.mulf %4, %4 : vector<8x128xf32>
    %cst_10 = arith.constant dense<0.000000e+00> : vector<8xf32>
    %14 = vector.multi_reduction <add>, %13, %cst_10 [1] : vector<8x128xf32> to vector<8xf32>
    %15 = vector.shape_cast %14 : vector<8xf32> to vector<8x1xf32>
    %cst_11 = arith.constant 3.125000e-02 : f32
    %16 = vector.broadcast %cst_11 : f32 to vector<8x1xf32>
    %17 = arith.mulf %15, %16 : vector<8x1xf32>
    %18 = arith.mulf %12, %12 : vector<8x1xf32>
    %19 = arith.subf %17, %18 : vector<8x1xf32>
    %cst_12 = arith.constant 0.000000e+00 : f32
    %20 = vector.broadcast %cst_12 : f32 to vector<8x1xf32>
    %21 = arith.maximumf %19, %20 : vector<8x1xf32>
    %22 = vector.broadcast %12 : vector<8x1xf32> to vector<8x128xf32>
    %23 = arith.subf %4, %22 : vector<8x128xf32>
    %cst_13 = arith.constant 9.99999997E-7 : f32
    %24 = vector.broadcast %cst_13 : f32 to vector<8x1xf32>
    %25 = arith.addf %21, %24 : vector<8x1xf32>
    %26 = math.rsqrt %25 : vector<8x1xf32>
    %27 = vector.broadcast %26 : vector<8x1xf32> to vector<8x128xf32>
    %28 = arith.mulf %23, %27 : vector<8x128xf32>
    %29 = vector.broadcast %6 : vector<1x128xf32> to vector<8x128xf32>
    %30 = arith.mulf %28, %29 : vector<8x128xf32>
    %31 = vector.broadcast %8 : vector<1x128xf32> to vector<8x128xf32>
    %32 = arith.addf %30, %31 : vector<8x128xf32>
    %c0_14 = arith.constant 0 : index
    %c0_15 = arith.constant 0 : index
    %c0_16 = arith.constant 0 : index
    %33 = vector.load %arg10[%c0_14, %c0_15, %c0_16] : memref<1x128x384xf32, #tpu.memory_space<vmem>>, vector<1x128x384xf32>
    %34 = vector.shape_cast %33 : vector<1x128x384xf32> to vector<128x384xf32>
    %cst_17 = arith.constant dense<0.000000e+00> : vector<8x384xf32>
    %35 = tpu.matmul %32, %34, %cst_17 {dimension_numbers = #tpu.dot_dimension_numbers<[1], [0], [0], [1], [0, 0, 1, 1], [], []>} : vector<8x128xf32>, vector<128x384xf32>, vector<8x384xf32> -> vector<8x384xf32>
    %c0_18 = arith.constant 0 : index
    %c0_19 = arith.constant 0 : index
    %c0_20 = arith.constant 0 : index
    %36 = vector.load %arg11[%c0_18, %c0_19, %c0_20] : memref<1x1x384xf32, #tpu.memory_space<vmem>>, vector<1x1x384xf32>
    %37 = vector.shape_cast %36 : vector<1x1x384xf32> to vector<1x384xf32>
    %38 = vector.broadcast %37 : vector<1x384xf32> to vector<8x384xf32>
    %39 = arith.addf %35, %38 : vector<8x384xf32>
    %40 = vector.extract_strided_slice %39 {offsets = [0, 0], sizes = [8, 128], strides = [1, 1]} : vector<8x384xf32> to vector<8x128xf32>
    %41 = vector.shape_cast %40 : vector<8x128xf32> to vector<1x8x128xf32>
    %42 = vector.extract_strided_slice %39 {offsets = [0, 128], sizes = [8, 128], strides = [1, 1]} : vector<8x384xf32> to vector<8x128xf32>
    %43 = vector.shape_cast %42 : vector<8x128xf32> to vector<1x8x128xf32>
    %44 = vector.extract_strided_slice %39 {offsets = [0, 256], sizes = [8, 128], strides = [1, 1]} : vector<8x384xf32> to vector<8x128xf32>
    %45 = vector.shape_cast %44 : vector<8x128xf32> to vector<1x8x128xf32>
    %c0_21 = arith.constant 0 : index
    %c0_22 = arith.constant 0 : index
    %c0_23 = arith.constant 0 : index
    %46 = vector.load %arg3[%c0_21, %c0_22, %c0_23] : memref<1x1x8xf32, #tpu.memory_space<vmem>>, vector<1x1x8xf32>
    %47 = vector.extract_strided_slice %41 {offsets = [0, 0, 0], sizes = [1, 8, 8], strides = [1, 1, 1]} : vector<1x8x128xf32> to vector<1x8x8xf32>
    %48 = vector.extract_strided_slice %43 {offsets = [0, 0, 0], sizes = [1, 8, 8], strides = [1, 1, 1]} : vector<1x8x128xf32> to vector<1x8x8xf32>
    %49 = vector.extract_strided_slice %45 {offsets = [0, 0, 0], sizes = [1, 8, 8], strides = [1, 1, 1]} : vector<1x8x128xf32> to vector<1x8x8xf32>
    "tpu.trace_start"() <{level = 10 : i32, message = "bqd,bkd->bqk"}> : () -> ()
    %cst_24 = arith.constant dense<0.000000e+00> : vector<1x8x8xf32>
    %50 = tpu.matmul %47, %48, %cst_24 {dimension_numbers = #tpu.dot_dimension_numbers<[2], [2], [1], [1], [0, 0, 0, 1, 1, 1], [0], [0]>} : vector<1x8x8xf32>, vector<1x8x8xf32>, vector<1x8x8xf32> -> vector<1x8x8xf32>
    "tpu.trace_stop"() : () -> ()
    %51 = vector.broadcast %46 : vector<1x1x8xf32> to vector<1x8x8xf32>
    %52 = arith.addf %50, %51 : vector<1x8x8xf32>
    %cst_25 = arith.constant dense<0xFF800000> : vector<1x8xf32>
    %53 = vector.multi_reduction <maximumf>, %52, %cst_25 [2] : vector<1x8x8xf32> to vector<1x8xf32>
    %54 = vector.shape_cast %53 : vector<1x8xf32> to vector<1x8x1xf32>
    %55 = vector.broadcast %54 : vector<1x8x1xf32> to vector<1x8x8xf32>
    %56 = arith.subf %52, %55 : vector<1x8x8xf32>
    %57 = math.exp %56 : vector<1x8x8xf32>
    %cst_26 = arith.constant dense<0.000000e+00> : vector<1x8xf32>
    %58 = vector.multi_reduction <add>, %57, %cst_26 [2] : vector<1x8x8xf32> to vector<1x8xf32>
    %59 = vector.shape_cast %58 : vector<1x8xf32> to vector<1x8x1xf32>
    %60 = vector.broadcast %59 : vector<1x8x1xf32> to vector<1x8x8xf32>
    %61 = arith.divf %57, %60 : vector<1x8x8xf32>
    "tpu.trace_start"() <{level = 10 : i32, message = "bqk,bkd->bqd"}> : () -> ()
    %cst_27 = arith.constant dense<0.000000e+00> : vector<1x8x8xf32>
    %62 = tpu.matmul %61, %49, %cst_27 {dimension_numbers = #tpu.dot_dimension_numbers<[2], [1], [1], [2], [0, 0, 0, 1, 1, 2], [0], [0]>} : vector<1x8x8xf32>, vector<1x8x8xf32>, vector<1x8x8xf32> -> vector<1x8x8xf32>
    "tpu.trace_stop"() : () -> ()
    %63 = vector.extract_strided_slice %41 {offsets = [0, 0, 8], sizes = [1, 8, 8], strides = [1, 1, 1]} : vector<1x8x128xf32> to vector<1x8x8xf32>
    %64 = vector.extract_strided_slice %43 {offsets = [0, 0, 8], sizes = [1, 8, 8], strides = [1, 1, 1]} : vector<1x8x128xf32> to vector<1x8x8xf32>
    %65 = vector.extract_strided_slice %45 {offsets = [0, 0, 8], sizes = [1, 8, 8], strides = [1, 1, 1]} : vector<1x8x128xf32> to vector<1x8x8xf32>
    "tpu.trace_start"() <{level = 10 : i32, message = "bqd,bkd->bqk"}> : () -> ()
    %cst_28 = arith.constant dense<0.000000e+00> : vector<1x8x8xf32>
    %66 = tpu.matmul %63, %64, %cst_28 {dimension_numbers = #tpu.dot_dimension_numbers<[2], [2], [1], [1], [0, 0, 0, 1, 1, 1], [0], [0]>} : vector<1x8x8xf32>, vector<1x8x8xf32>, vector<1x8x8xf32> -> vector<1x8x8xf32>
    "tpu.trace_stop"() : () -> ()
    %67 = vector.broadcast %46 : vector<1x1x8xf32> to vector<1x8x8xf32>
    %68 = arith.addf %66, %67 : vector<1x8x8xf32>
    %cst_29 = arith.constant dense<0xFF800000> : vector<1x8xf32>
    %69 = vector.multi_reduction <maximumf>, %68, %cst_29 [2] : vector<1x8x8xf32> to vector<1x8xf32>
    %70 = vector.shape_cast %69 : vector<1x8xf32> to vector<1x8x1xf32>
    %71 = vector.broadcast %70 : vector<1x8x1xf32> to vector<1x8x8xf32>
    %72 = arith.subf %68, %71 : vector<1x8x8xf32>
    %73 = math.exp %72 : vector<1x8x8xf32>
    %cst_30 = arith.constant dense<0.000000e+00> : vector<1x8xf32>
    %74 = vector.multi_reduction <add>, %73, %cst_30 [2] : vector<1x8x8xf32> to vector<1x8xf32>
    %75 = vector.shape_cast %74 : vector<1x8xf32> to vector<1x8x1xf32>
    %76 = vector.broadcast %75 : vector<1x8x1xf32> to vector<1x8x8xf32>
    %77 = arith.divf %73, %76 : vector<1x8x8xf32>
    "tpu.trace_start"() <{level = 10 : i32, message = "bqk,bkd->bqd"}> : () -> ()
    %cst_31 = arith.constant dense<0.000000e+00> : vector<1x8x8xf32>
    %78 = tpu.matmul %77, %65, %cst_31 {dimension_numbers = #tpu.dot_dimension_numbers<[2], [1], [1], [2], [0, 0, 0, 1, 1, 2], [0], [0]>} : vector<1x8x8xf32>, vector<1x8x8xf32>, vector<1x8x8xf32> -> vector<1x8x8xf32>
    "tpu.trace_stop"() : () -> ()
    %79 = vector.extract_strided_slice %41 {offsets = [0, 0, 16], sizes = [1, 8, 8], strides = [1, 1, 1]} : vector<1x8x128xf32> to vector<1x8x8xf32>
    %80 = vector.extract_strided_slice %43 {offsets = [0, 0, 16], sizes = [1, 8, 8], strides = [1, 1, 1]} : vector<1x8x128xf32> to vector<1x8x8xf32>
    %81 = vector.extract_strided_slice %45 {offsets = [0, 0, 16], sizes = [1, 8, 8], strides = [1, 1, 1]} : vector<1x8x128xf32> to vector<1x8x8xf32>
    "tpu.trace_start"() <{level = 10 : i32, message = "bqd,bkd->bqk"}> : () -> ()
    %cst_32 = arith.constant dense<0.000000e+00> : vector<1x8x8xf32>
    %82 = tpu.matmul %79, %80, %cst_32 {dimension_numbers = #tpu.dot_dimension_numbers<[2], [2], [1], [1], [0, 0, 0, 1, 1, 1], [0], [0]>} : vector<1x8x8xf32>, vector<1x8x8xf32>, vector<1x8x8xf32> -> vector<1x8x8xf32>
    "tpu.trace_stop"() : () -> ()
    %83 = vector.broadcast %46 : vector<1x1x8xf32> to vector<1x8x8xf32>
    %84 = arith.addf %82, %83 : vector<1x8x8xf32>
    %cst_33 = arith.constant dense<0xFF800000> : vector<1x8xf32>
    %85 = vector.multi_reduction <maximumf>, %84, %cst_33 [2] : vector<1x8x8xf32> to vector<1x8xf32>
    %86 = vector.shape_cast %85 : vector<1x8xf32> to vector<1x8x1xf32>
    %87 = vector.broadcast %86 : vector<1x8x1xf32> to vector<1x8x8xf32>
    %88 = arith.subf %84, %87 : vector<1x8x8xf32>
    %89 = math.exp %88 : vector<1x8x8xf32>
    %cst_34 = arith.constant dense<0.000000e+00> : vector<1x8xf32>
    %90 = vector.multi_reduction <add>, %89, %cst_34 [2] : vector<1x8x8xf32> to vector<1x8xf32>
    %91 = vector.shape_cast %90 : vector<1x8xf32> to vector<1x8x1xf32>
    %92 = vector.broadcast %91 : vector<1x8x1xf32> to vector<1x8x8xf32>
    %93 = arith.divf %89, %92 : vector<1x8x8xf32>
    "tpu.trace_start"() <{level = 10 : i32, message = "bqk,bkd->bqd"}> : () -> ()
    %cst_35 = arith.constant dense<0.000000e+00> : vector<1x8x8xf32>
    %94 = tpu.matmul %93, %81, %cst_35 {dimension_numbers = #tpu.dot_dimension_numbers<[2], [1], [1], [2], [0, 0, 0, 1, 1, 2], [0], [0]>} : vector<1x8x8xf32>, vector<1x8x8xf32>, vector<1x8x8xf32> -> vector<1x8x8xf32>
    "tpu.trace_stop"() : () -> ()
    %95 = vector.extract_strided_slice %41 {offsets = [0, 0, 24], sizes = [1, 8, 8], strides = [1, 1, 1]} : vector<1x8x128xf32> to vector<1x8x8xf32>
    %96 = vector.extract_strided_slice %43 {offsets = [0, 0, 24], sizes = [1, 8, 8], strides = [1, 1, 1]} : vector<1x8x128xf32> to vector<1x8x8xf32>
    %97 = vector.extract_strided_slice %45 {offsets = [0, 0, 24], sizes = [1, 8, 8], strides = [1, 1, 1]} : vector<1x8x128xf32> to vector<1x8x8xf32>
    "tpu.trace_start"() <{level = 10 : i32, message = "bqd,bkd->bqk"}> : () -> ()
    %cst_36 = arith.constant dense<0.000000e+00> : vector<1x8x8xf32>
    %98 = tpu.matmul %95, %96, %cst_36 {dimension_numbers = #tpu.dot_dimension_numbers<[2], [2], [1], [1], [0, 0, 0, 1, 1, 1], [0], [0]>} : vector<1x8x8xf32>, vector<1x8x8xf32>, vector<1x8x8xf32> -> vector<1x8x8xf32>
    "tpu.trace_stop"() : () -> ()
    %99 = vector.broadcast %46 : vector<1x1x8xf32> to vector<1x8x8xf32>
    %100 = arith.addf %98, %99 : vector<1x8x8xf32>
    %cst_37 = arith.constant dense<0xFF800000> : vector<1x8xf32>
    %101 = vector.multi_reduction <maximumf>, %100, %cst_37 [2] : vector<1x8x8xf32> to vector<1x8xf32>
    %102 = vector.shape_cast %101 : vector<1x8xf32> to vector<1x8x1xf32>
    %103 = vector.broadcast %102 : vector<1x8x1xf32> to vector<1x8x8xf32>
    %104 = arith.subf %100, %103 : vector<1x8x8xf32>
    %105 = math.exp %104 : vector<1x8x8xf32>
    %cst_38 = arith.constant dense<0.000000e+00> : vector<1x8xf32>
    %106 = vector.multi_reduction <add>, %105, %cst_38 [2] : vector<1x8x8xf32> to vector<1x8xf32>
    %107 = vector.shape_cast %106 : vector<1x8xf32> to vector<1x8x1xf32>
    %108 = vector.broadcast %107 : vector<1x8x1xf32> to vector<1x8x8xf32>
    %109 = arith.divf %105, %108 : vector<1x8x8xf32>
    "tpu.trace_start"() <{level = 10 : i32, message = "bqk,bkd->bqd"}> : () -> ()
    %cst_39 = arith.constant dense<0.000000e+00> : vector<1x8x8xf32>
    %110 = tpu.matmul %109, %97, %cst_39 {dimension_numbers = #tpu.dot_dimension_numbers<[2], [1], [1], [2], [0, 0, 0, 1, 1, 2], [0], [0]>} : vector<1x8x8xf32>, vector<1x8x8xf32>, vector<1x8x8xf32> -> vector<1x8x8xf32>
    %cst_40 = arith.constant 0.000000e+00 : f32
    "tpu.trace_stop"() : () -> ()
    %111 = vector.broadcast %cst_40 : f32 to vector<1x8x96xf32>
    %112 = tpu.concatenate %62, %78, %94, %110, %111 in 2 : vector<1x8x8xf32>, vector<1x8x8xf32>, vector<1x8x8xf32>, vector<1x8x8xf32>, vector<1x8x96xf32> -> vector<1x8x128xf32>
    %113 = vector.shape_cast %112 : vector<1x8x128xf32> to vector<8x128xf32>
    %c0_41 = arith.constant 0 : index
    %c0_42 = arith.constant 0 : index
    %c0_43 = arith.constant 0 : index
    %114 = vector.load %arg12[%c0_41, %c0_42, %c0_43] : memref<1x128x128xf32, #tpu.memory_space<vmem>>, vector<1x128x128xf32>
    %115 = vector.shape_cast %114 : vector<1x128x128xf32> to vector<128x128xf32>
    %cst_44 = arith.constant dense<0.000000e+00> : vector<8x128xf32>
    %116 = tpu.matmul %113, %115, %cst_44 {dimension_numbers = #tpu.dot_dimension_numbers<[1], [0], [0], [1], [0, 0, 1, 1], [], []>} : vector<8x128xf32>, vector<128x128xf32>, vector<8x128xf32> -> vector<8x128xf32>
    %c0_45 = arith.constant 0 : index
    %c0_46 = arith.constant 0 : index
    %c0_47 = arith.constant 0 : index
    %117 = vector.load %arg13[%c0_45, %c0_46, %c0_47] : memref<1x1x128xf32, #tpu.memory_space<vmem>>, vector<1x1x128xf32>
    %118 = vector.shape_cast %117 : vector<1x1x128xf32> to vector<1x128xf32>
    %119 = vector.broadcast %118 : vector<1x128xf32> to vector<8x128xf32>
    %120 = arith.addf %116, %119 : vector<8x128xf32>
    %121 = arith.addf %4, %120 : vector<8x128xf32>
    %c0_48 = arith.constant 0 : index
    %c0_49 = arith.constant 0 : index
    %c0_50 = arith.constant 0 : index
    %122 = vector.load %arg14[%c0_48, %c0_49, %c0_50] : memref<1x1x128xf32, #tpu.memory_space<vmem>>, vector<1x1x128xf32>
    %123 = vector.shape_cast %122 : vector<1x1x128xf32> to vector<1x128xf32>
    %c0_51 = arith.constant 0 : index
    %c0_52 = arith.constant 0 : index
    %c0_53 = arith.constant 0 : index
    %124 = vector.load %arg15[%c0_51, %c0_52, %c0_53] : memref<1x1x128xf32, #tpu.memory_space<vmem>>, vector<1x1x128xf32>
    %125 = vector.shape_cast %124 : vector<1x1x128xf32> to vector<1x128xf32>
    %cst_54 = arith.constant dense<0.000000e+00> : vector<8xf32>
    %126 = vector.multi_reduction <add>, %121, %cst_54 [1] : vector<8x128xf32> to vector<8xf32>
    %127 = vector.shape_cast %126 : vector<8xf32> to vector<8x1xf32>
    %cst_55 = arith.constant 3.125000e-02 : f32
    %128 = vector.broadcast %cst_55 : f32 to vector<8x1xf32>
    %129 = arith.mulf %127, %128 : vector<8x1xf32>
    %130 = arith.mulf %121, %121 : vector<8x128xf32>
    %cst_56 = arith.constant dense<0.000000e+00> : vector<8xf32>
    %131 = vector.multi_reduction <add>, %130, %cst_56 [1] : vector<8x128xf32> to vector<8xf32>
    %132 = vector.shape_cast %131 : vector<8xf32> to vector<8x1xf32>
    %cst_57 = arith.constant 3.125000e-02 : f32
    %133 = vector.broadcast %cst_57 : f32 to vector<8x1xf32>
    %134 = arith.mulf %132, %133 : vector<8x1xf32>
    %135 = arith.mulf %129, %129 : vector<8x1xf32>
    %136 = arith.subf %134, %135 : vector<8x1xf32>
    %cst_58 = arith.constant 0.000000e+00 : f32
    %137 = vector.broadcast %cst_58 : f32 to vector<8x1xf32>
    %138 = arith.maximumf %136, %137 : vector<8x1xf32>
    %139 = vector.broadcast %129 : vector<8x1xf32> to vector<8x128xf32>
    %140 = arith.subf %121, %139 : vector<8x128xf32>
    %cst_59 = arith.constant 9.99999997E-7 : f32
    %141 = vector.broadcast %cst_59 : f32 to vector<8x1xf32>
    %142 = arith.addf %138, %141 : vector<8x1xf32>
    %143 = math.rsqrt %142 : vector<8x1xf32>
    %144 = vector.broadcast %143 : vector<8x1xf32> to vector<8x128xf32>
    %145 = arith.mulf %140, %144 : vector<8x128xf32>
    %146 = vector.broadcast %123 : vector<1x128xf32> to vector<8x128xf32>
    %147 = arith.mulf %145, %146 : vector<8x128xf32>
    %148 = vector.broadcast %125 : vector<1x128xf32> to vector<8x128xf32>
    %149 = arith.addf %147, %148 : vector<8x128xf32>
    %c0_60 = arith.constant 0 : index
    %c0_61 = arith.constant 0 : index
    %c0_62 = arith.constant 0 : index
    %150 = vector.load %arg16[%c0_60, %c0_61, %c0_62] : memref<1x128x128xf32, #tpu.memory_space<vmem>>, vector<1x128x128xf32>
    %151 = vector.shape_cast %150 : vector<1x128x128xf32> to vector<128x128xf32>
    %cst_63 = arith.constant dense<0.000000e+00> : vector<8x128xf32>
    %152 = tpu.matmul %149, %151, %cst_63 {dimension_numbers = #tpu.dot_dimension_numbers<[1], [0], [0], [1], [0, 0, 1, 1], [], []>} : vector<8x128xf32>, vector<128x128xf32>, vector<8x128xf32> -> vector<8x128xf32>
    %c0_64 = arith.constant 0 : index
    %c0_65 = arith.constant 0 : index
    %c0_66 = arith.constant 0 : index
    %153 = vector.load %arg17[%c0_64, %c0_65, %c0_66] : memref<1x1x128xf32, #tpu.memory_space<vmem>>, vector<1x1x128xf32>
    %154 = vector.shape_cast %153 : vector<1x1x128xf32> to vector<1x128xf32>
    %155 = vector.broadcast %154 : vector<1x128xf32> to vector<8x128xf32>
    %156 = arith.addf %152, %155 : vector<8x128xf32>
    %cst_67 = arith.constant 0.000000e+00 : f32
    %157 = vector.broadcast %cst_67 : f32 to vector<8x128xf32>
    %158 = arith.maximumf %156, %157 : vector<8x128xf32>
    %c0_68 = arith.constant 0 : index
    %c0_69 = arith.constant 0 : index
    %c0_70 = arith.constant 0 : index
    %159 = vector.load %arg18[%c0_68, %c0_69, %c0_70] : memref<1x128x128xf32, #tpu.memory_space<vmem>>, vector<1x128x128xf32>
    %160 = vector.shape_cast %159 : vector<1x128x128xf32> to vector<128x128xf32>
    %cst_71 = arith.constant dense<0.000000e+00> : vector<8x128xf32>
    %161 = tpu.matmul %158, %160, %cst_71 {dimension_numbers = #tpu.dot_dimension_numbers<[1], [0], [0], [1], [0, 0, 1, 1], [], []>} : vector<8x128xf32>, vector<128x128xf32>, vector<8x128xf32> -> vector<8x128xf32>
    %c0_72 = arith.constant 0 : index
    %c0_73 = arith.constant 0 : index
    %c0_74 = arith.constant 0 : index
    %162 = vector.load %arg19[%c0_72, %c0_73, %c0_74] : memref<1x1x128xf32, #tpu.memory_space<vmem>>, vector<1x1x128xf32>
    %163 = vector.shape_cast %162 : vector<1x1x128xf32> to vector<1x128xf32>
    %164 = vector.broadcast %163 : vector<1x128xf32> to vector<8x128xf32>
    %165 = arith.addf %161, %164 : vector<8x128xf32>
    %166 = arith.addf %121, %165 : vector<8x128xf32>
    %167 = vector.shape_cast %166 : vector<8x128xf32> to vector<1x8x128xf32>
    %c0_75 = arith.constant 0 : index
    %c0_76 = arith.constant 0 : index
    %c0_77 = arith.constant 0 : index
    %168 = vector.load %arg27[%c0_75, %c0_76, %c0_77] : memref<1x8x128xf32, #tpu.memory_space<vmem>>, vector<1x8x128xf32>
    tpu.vector_store %arg27[%c0_75, %c0_76, %c0_77], %167 {strides = array<i32>} : memref<1x8x128xf32, #tpu.memory_space<vmem>>, vector<1x8x128xf32>,
    %c1_i32 = arith.constant 1 : i32
    %169 = arith.cmpi eq, %arg1, %c1_i32 : i32
    %170 = arith.extui %169 : i1 to i32
    %c0_i32_78 = arith.constant 0 : i32
    %171 = arith.cmpi ne, %170, %c0_i32_78 : i32
    scf.if %171 {
      %c0_79 = arith.constant 0 : index
      %c0_80 = arith.constant 0 : index
      %172 = vector.load %arg20[%c0_79, %c0_80] : memref<1x128xf32, #tpu.memory_space<vmem>>, vector<1x128xf32>
      %c0_81 = arith.constant 0 : index
      %c0_82 = arith.constant 0 : index
      %173 = vector.load %arg21[%c0_81, %c0_82] : memref<1x128xf32, #tpu.memory_space<vmem>>, vector<1x128xf32>
      %cst_83 = arith.constant dense<0.000000e+00> : vector<8xf32>
      %174 = vector.multi_reduction <add>, %166, %cst_83 [1] : vector<8x128xf32> to vector<8xf32>
      %175 = vector.shape_cast %174 : vector<8xf32> to vector<8x1xf32>
      %cst_84 = arith.constant 3.125000e-02 : f32
      %176 = vector.broadcast %cst_84 : f32 to vector<8x1xf32>
      %177 = arith.mulf %175, %176 : vector<8x1xf32>
      %178 = arith.mulf %166, %166 : vector<8x128xf32>
      %cst_85 = arith.constant dense<0.000000e+00> : vector<8xf32>
      %179 = vector.multi_reduction <add>, %178, %cst_85 [1] : vector<8x128xf32> to vector<8xf32>
      %180 = vector.shape_cast %179 : vector<8xf32> to vector<8x1xf32>
      %cst_86 = arith.constant 3.125000e-02 : f32
      %181 = vector.broadcast %cst_86 : f32 to vector<8x1xf32>
      %182 = arith.mulf %180, %181 : vector<8x1xf32>
      %183 = arith.mulf %177, %177 : vector<8x1xf32>
      %184 = arith.subf %182, %183 : vector<8x1xf32>
      %cst_87 = arith.constant 0.000000e+00 : f32
      %185 = vector.broadcast %cst_87 : f32 to vector<8x1xf32>
      %186 = arith.maximumf %184, %185 : vector<8x1xf32>
      %187 = vector.broadcast %177 : vector<8x1xf32> to vector<8x128xf32>
      %188 = arith.subf %166, %187 : vector<8x128xf32>
      %cst_88 = arith.constant 9.99999997E-7 : f32
      %189 = vector.broadcast %cst_88 : f32 to vector<8x1xf32>
      %190 = arith.addf %186, %189 : vector<8x1xf32>
      %191 = math.rsqrt %190 : vector<8x1xf32>
      %192 = vector.broadcast %191 : vector<8x1xf32> to vector<8x128xf32>
      %193 = arith.mulf %188, %192 : vector<8x128xf32>
      %194 = vector.broadcast %172 : vector<1x128xf32> to vector<8x128xf32>
      %195 = arith.mulf %193, %194 : vector<8x128xf32>
      %196 = vector.broadcast %173 : vector<1x128xf32> to vector<8x128xf32>
      %197 = arith.addf %195, %196 : vector<8x128xf32>
      %198 = vector.shape_cast %197 : vector<8x128xf32> to vector<1x8x128xf32>
      %c0_89 = arith.constant 0 : index
      %c0_90 = arith.constant 0 : index
      %c0_91 = arith.constant 0 : index
      %199 = vector.load %arg4[%c0_89, %c0_90, %c0_91] : memref<1x8x1xf32, #tpu.memory_space<vmem>>, vector<1x8x1xf32>
      %cst_92 = arith.constant dense<0.000000e+00> : vector<1x1xf32>
      %200 = vector.multi_reduction <add>, %199, %cst_92 [1] : vector<1x8x1xf32> to vector<1x1xf32>
      %cst_93 = arith.constant 1.000000e+00 : f32
      %201 = vector.broadcast %cst_93 : f32 to vector<1x1xf32>
      %202 = arith.maximumf %200, %201 : vector<1x1xf32>
      %203 = vector.broadcast %199 : vector<1x8x1xf32> to vector<1x8x128xf32>
      %204 = arith.mulf %198, %203 : vector<1x8x128xf32>
      %cst_94 = arith.constant dense<0.000000e+00> : vector<1x128xf32>
      %205 = vector.multi_reduction <add>, %204, %cst_94 [1] : vector<1x8x128xf32> to vector<1x128xf32>
      %206 = vector.broadcast %202 : vector<1x1xf32> to vector<1x128xf32>
      %207 = arith.divf %205, %206 : vector<1x128xf32>
      %c0_95 = arith.constant 0 : index
      %c0_96 = arith.constant 0 : index
      %208 = vector.load %arg22[%c0_95, %c0_96] : memref<128x128xf32, #tpu.memory_space<vmem>>, vector<128x128xf32>
      %cst_97 = arith.constant dense<0.000000e+00> : vector<1x128xf32>
      %209 = tpu.matmul %207, %208, %cst_97 {dimension_numbers = #tpu.dot_dimension_numbers<[1], [0], [0], [1], [0, 0, 1, 1], [], []>} : vector<1x128xf32>, vector<128x128xf32>, vector<1x128xf32> -> vector<1x128xf32>
      %c0_98 = arith.constant 0 : index
      %c0_99 = arith.constant 0 : index
      %210 = vector.load %arg23[%c0_98, %c0_99] : memref<1x128xf32, #tpu.memory_space<vmem>>, vector<1x128xf32>
      %211 = arith.addf %209, %210 : vector<1x128xf32>
      %cst_100 = arith.constant 0.000000e+00 : f32
      %212 = vector.broadcast %cst_100 : f32 to vector<1x128xf32>
      %213 = arith.maximumf %211, %212 : vector<1x128xf32>
      %c0_101 = arith.constant 0 : index
      %c0_102 = arith.constant 0 : index
      %214 = vector.load %arg24[%c0_101, %c0_102] : memref<128x128xf32, #tpu.memory_space<vmem>>, vector<128x128xf32>
      %cst_103 = arith.constant dense<0.000000e+00> : vector<1x128xf32>
      %215 = tpu.matmul %213, %214, %cst_103 {dimension_numbers = #tpu.dot_dimension_numbers<[1], [0], [0], [1], [0, 0, 1, 1], [], []>} : vector<1x128xf32>, vector<128x128xf32>, vector<1x128xf32> -> vector<1x128xf32>
      %c0_104 = arith.constant 0 : index
      %c0_105 = arith.constant 0 : index
      %216 = vector.load %arg25[%c0_104, %c0_105] : memref<1x128xf32, #tpu.memory_space<vmem>>, vector<1x128xf32>
      %217 = arith.addf %215, %216 : vector<1x128xf32>
      %c0_106 = arith.constant 0 : index
      %c0_107 = arith.constant 0 : index
      %c0_108 = arith.constant 0 : index
      %218 = vector.load %arg26[%c0_106, %c0_107, %c0_108] : memref<1x1x128xf32, #tpu.memory_space<vmem>>, vector<1x1x128xf32>
      %219 = vector.shape_cast %218 : vector<1x1x128xf32> to vector<1x128xf32>
      %220 = vector.shape_cast %217 : vector<1x128xf32> to vector<1x1x128xf32>
      tpu.vector_store %arg26[%c0_106, %c0_107, %c0_108], %220 {strides = array<i32>} : memref<1x1x128xf32, #tpu.memory_space<vmem>>, vector<1x1x128xf32>,
    } else {
    }
    return
  }
  func.func @transform_0(%arg0: i32, %arg1: i32) -> (i32, i32, i32) {
    %c0_i32 = arith.constant 0 : i32
    %c0_i32_0 = arith.constant 0 : i32
    %c0_i32_1 = arith.constant 0 : i32
    return %arg0, %c0_i32, %c0_i32_0 : i32, i32, i32
  }
  func.func @transform_1(%arg0: i32, %arg1: i32) -> (i32, i32, i32) {
    %c0_i32 = arith.constant 0 : i32
    %c0_i32_0 = arith.constant 0 : i32
    %c0_i32_1 = arith.constant 0 : i32
    return %arg0, %c0_i32, %c0_i32_0 : i32, i32, i32
  }
  func.func @transform_2(%arg0: i32, %arg1: i32) -> (i32, i32, i32) {
    %c0_i32 = arith.constant 0 : i32
    %c0_i32_0 = arith.constant 0 : i32
    %c0_i32_1 = arith.constant 0 : i32
    return %arg0, %c0_i32, %c0_i32_0 : i32, i32, i32
  }
  func.func @transform_3(%arg0: i32, %arg1: i32) -> (i32, i32) {
    %c0_i32 = arith.constant 0 : i32
    %c0_i32_0 = arith.constant 0 : i32
    %c0_i32_1 = arith.constant 0 : i32
    return %c0_i32, %c0_i32_0 : i32, i32
  }
  func.func @transform_4(%arg0: i32, %arg1: i32) -> (i32, i32) {
    %c0_i32 = arith.constant 0 : i32
    %c0_i32_0 = arith.constant 0 : i32
    %c0_i32_1 = arith.constant 0 : i32
    return %c0_i32, %c0_i32_0 : i32, i32
  }
  func.func @transform_5(%arg0: i32, %arg1: i32) -> (i32, i32) {
    %c0_i32 = arith.constant 0 : i32
    %c0_i32_0 = arith.constant 0 : i32
    %c0_i32_1 = arith.constant 0 : i32
    return %c0_i32, %c0_i32_0 : i32, i32
  }
  func.func @transform_6(%arg0: i32, %arg1: i32) -> (i32, i32, i32) {
    %c0_i32 = arith.constant 0 : i32
    %c0_i32_0 = arith.constant 0 : i32
    %c0_i32_1 = arith.constant 0 : i32
    return %arg1, %c0_i32, %c0_i32_0 : i32, i32, i32
  }
  func.func @transform_7(%arg0: i32, %arg1: i32) -> (i32, i32, i32) {
    %c0_i32 = arith.constant 0 : i32
    %c0_i32_0 = arith.constant 0 : i32
    %c0_i32_1 = arith.constant 0 : i32
    return %arg1, %c0_i32, %c0_i32_0 : i32, i32, i32
  }
  func.func @transform_8(%arg0: i32, %arg1: i32) -> (i32, i32, i32) {
    %c0_i32 = arith.constant 0 : i32
    %c0_i32_0 = arith.constant 0 : i32
    %c0_i32_1 = arith.constant 0 : i32
    return %arg1, %c0_i32, %c0_i32_0 : i32, i32, i32
  }
  func.func @transform_9(%arg0: i32, %arg1: i32) -> (i32, i32, i32) {
    %c0_i32 = arith.constant 0 : i32
    %c0_i32_0 = arith.constant 0 : i32
    %c0_i32_1 = arith.constant 0 : i32
    return %arg1, %c0_i32, %c0_i32_0 : i32, i32, i32
  }
  func.func @transform_10(%arg0: i32, %arg1: i32) -> (i32, i32, i32) {
    %c0_i32 = arith.constant 0 : i32
    %c0_i32_0 = arith.constant 0 : i32
    %c0_i32_1 = arith.constant 0 : i32
    return %arg1, %c0_i32, %c0_i32_0 : i32, i32, i32
  }
  func.func @transform_11(%arg0: i32, %arg1: i32) -> (i32, i32, i32) {
    %c0_i32 = arith.constant 0 : i32
    %c0_i32_0 = arith.constant 0 : i32
    %c0_i32_1 = arith.constant 0 : i32
    return %arg1, %c0_i32, %c0_i32_0 : i32, i32, i32
  }
  func.func @transform_12(%arg0: i32, %arg1: i32) -> (i32, i32, i32) {
    %c0_i32 = arith.constant 0 : i32
    %c0_i32_0 = arith.constant 0 : i32
    %c0_i32_1 = arith.constant 0 : i32
    return %arg1, %c0_i32, %c0_i32_0 : i32, i32, i32
  }
  func.func @transform_13(%arg0: i32, %arg1: i32) -> (i32, i32, i32) {
    %c0_i32 = arith.constant 0 : i32
    %c0_i32_0 = arith.constant 0 : i32
    %c0_i32_1 = arith.constant 0 : i32
    return %arg1, %c0_i32, %c0_i32_0 : i32, i32, i32
  }
  func.func @transform_14(%arg0: i32, %arg1: i32) -> (i32, i32, i32) {
    %c0_i32 = arith.constant 0 : i32
    %c0_i32_0 = arith.constant 0 : i32
    %c0_i32_1 = arith.constant 0 : i32
    return %arg1, %c0_i32, %c0_i32_0 : i32, i32, i32
  }
  func.func @transform_15(%arg0: i32, %arg1: i32) -> (i32, i32, i32) {
    %c0_i32 = arith.constant 0 : i32
    %c0_i32_0 = arith.constant 0 : i32
    %c0_i32_1 = arith.constant 0 : i32
    return %arg1, %c0_i32, %c0_i32_0 : i32, i32, i32
  }
  func.func @transform_16(%arg0: i32, %arg1: i32) -> (i32, i32, i32) {
    %c0_i32 = arith.constant 0 : i32
    %c0_i32_0 = arith.constant 0 : i32
    %c0_i32_1 = arith.constant 0 : i32
    return %arg1, %c0_i32, %c0_i32_0 : i32, i32, i32
  }
  func.func @transform_17(%arg0: i32, %arg1: i32) -> (i32, i32, i32) {
    %c0_i32 = arith.constant 0 : i32
    %c0_i32_0 = arith.constant 0 : i32
    %c0_i32_1 = arith.constant 0 : i32
    return %arg1, %c0_i32, %c0_i32_0 : i32, i32, i32
  }
  func.func @transform_18(%arg0: i32, %arg1: i32) -> (i32, i32) {
    %c0_i32 = arith.constant 0 : i32
    %c0_i32_0 = arith.constant 0 : i32
    %c0_i32_1 = arith.constant 0 : i32
    return %c0_i32, %c0_i32_0 : i32, i32
  }
  func.func @transform_19(%arg0: i32, %arg1: i32) -> (i32, i32) {
    %c0_i32 = arith.constant 0 : i32
    %c0_i32_0 = arith.constant 0 : i32
    %c0_i32_1 = arith.constant 0 : i32
    return %c0_i32, %c0_i32_0 : i32, i32
  }
  func.func @transform_20(%arg0: i32, %arg1: i32) -> (i32, i32) {
    %c0_i32 = arith.constant 0 : i32
    %c0_i32_0 = arith.constant 0 : i32
    %c0_i32_1 = arith.constant 0 : i32
    return %c0_i32, %c0_i32_0 : i32, i32
  }
  func.func @transform_21(%arg0: i32, %arg1: i32) -> (i32, i32) {
    %c0_i32 = arith.constant 0 : i32
    %c0_i32_0 = arith.constant 0 : i32
    %c0_i32_1 = arith.constant 0 : i32
    return %c0_i32, %c0_i32_0 : i32, i32
  }
  func.func @transform_22(%arg0: i32, %arg1: i32) -> (i32, i32) {
    %c0_i32 = arith.constant 0 : i32
    %c0_i32_0 = arith.constant 0 : i32
    %c0_i32_1 = arith.constant 0 : i32
    return %c0_i32, %c0_i32_0 : i32, i32
  }
  func.func @transform_23(%arg0: i32, %arg1: i32) -> (i32, i32) {
    %c0_i32 = arith.constant 0 : i32
    %c0_i32_0 = arith.constant 0 : i32
    %c0_i32_1 = arith.constant 0 : i32
    return %c0_i32, %c0_i32_0 : i32, i32
  }
  func.func @transform_24(%arg0: i32, %arg1: i32) -> (i32, i32, i32) {
    %c0_i32 = arith.constant 0 : i32
    %c0_i32_0 = arith.constant 0 : i32
    %c0_i32_1 = arith.constant 0 : i32
    return %arg0, %c0_i32, %c0_i32_0 : i32, i32, i32
  }
}

</mosaic_0001>

<llo_original>
// kernel: pallas_classification_forward.1
$region0: #{pallas_classification_forward.1}
  #allocation0 [shape = 'u32[]', space=smem, size = 0x4, offset = 0x4, fixed_abs, tag = 'smem constant byte address 0x4 - core index']
  #allocation1 [shape = 'u32[144,128]{1,0:T(1,128)}', space=vmem, size = 0x12000, scoped, tag = 'internal scratch']
  #allocation2 [shape = 'f32[1,8,128]{2,1,0:T(8,128)}', space=vmem, size = 0x1000, scoped, tag = 'scratch operand']
  %s0 = inlined_call_operand.vmem [shape: f32[2,8,128], index: 0, kind: input, shape index: {}]
  %s1 = inlined_call_operand.vmem [shape: f32[2,1,8], index: 1, kind: input, shape index: {}]
  %s2 = inlined_call_operand.vmem [shape: f32[2,8,1], index: 2, kind: input, shape index: {}]
  %s3 = inlined_call_operand.vmem [shape: f32[8,128], index: 3, kind: input, shape index: {}]
  %s4 = inlined_call_operand.vmem [shape: f32[128,128], index: 4, kind: input, shape index: {}]
  %s5 = inlined_call_operand.vmem [shape: f32[1,128], index: 5, kind: input, shape index: {}]
  %s6 = inlined_call_operand.vmem [shape: f32[2,1,128], index: 6, kind: input, shape index: {}]
  %s7 = inlined_call_operand.vmem [shape: f32[2,1,128], index: 7, kind: input, shape index: {}]
  %s8 = inlined_call_operand.hbm [shape: f32[2,128,384], index: 8, kind: input, shape index: {}]
  %s9 = inlined_call_operand.vmem [shape: f32[2,1,384], index: 9, kind: input, shape index: {}]
  %s10 = inlined_call_operand.hbm [shape: f32[2,128,128], index: 10, kind: input, shape index: {}]
  %s11 = inlined_call_operand.vmem [shape: f32[2,1,128], index: 11, kind: input, shape index: {}]
  %s12 = inlined_call_operand.vmem [shape: f32[2,1,128], index: 12, kind: input, shape index: {}]
  %s13 = inlined_call_operand.vmem [shape: f32[2,1,128], index: 13, kind: input, shape index: {}]
  %s14 = inlined_call_operand.hbm [shape: f32[2,128,128], index: 14, kind: input, shape index: {}]
  %s15 = inlined_call_operand.vmem [shape: f32[2,1,128], index: 15, kind: input, shape index: {}]
  %s16 = inlined_call_operand.hbm [shape: f32[2,128,128], index: 16, kind: input, shape index: {}]
  %s17 = inlined_call_operand.vmem [shape: f32[2,1,128], index: 17, kind: input, shape index: {}]
  %s18 = inlined_call_operand.vmem [shape: f32[1,128], index: 18, kind: input, shape index: {}]
  %s19 = inlined_call_operand.vmem [shape: f32[1,128], index: 19, kind: input, shape index: {}]
  %s20 = inlined_call_operand.hbm [shape: f32[128,128], index: 20, kind: input, shape index: {}]
  %s21 = inlined_call_operand.vmem [shape: f32[1,128], index: 21, kind: input, shape index: {}]
  %s22 = inlined_call_operand.hbm [shape: f32[128,128], index: 22, kind: input, shape index: {}]
  %s23 = inlined_call_operand.vmem [shape: f32[1,128], index: 23, kind: input, shape index: {}]
  %s24 = inlined_call_operand.hbm [shape: f32[2,1,128], index: 24, kind: output, shape index: {}]
  %s25 = sld [smem:[#allocation0]]
  $region161: #{pallas_classification_forward.1} parent=0
    _
  %s27 = ssub.s32 1, %s25
  %s28 = scalar_select 0, %s27, %s25
  $region1: #{pallas_classification_forward.1} parent=0
    #allocation3 [shape = 'u8[393216]{0}', space=vmem, size = 0x60000, scoped, tag = 'input window, operand 8']
    #allocation4 [shape = 's32[2]{0}', space=sflag, size = 0x8, scoped, tag = 'scoped memory for pallas_classification_forward.1']
    #allocation5 [shape = 's32[2]{0}', space=sflag, size = 0x8, scoped, tag = 'scoped memory for pallas_classification_forward.1']
    #allocation6 [shape = 'u8[131072]{0}', space=vmem, size = 0x20000, scoped, tag = 'input window, operand 10']
    #allocation7 [shape = 's32[2]{0}', space=sflag, size = 0x8, scoped, tag = 'scoped memory for pallas_classification_forward.1']
    #allocation8 [shape = 'u8[131072]{0}', space=vmem, size = 0x20000, scoped, tag = 'input window, operand 14']
    #allocation9 [shape = 'u8[131072]{0}', space=vmem, size = 0x20000, scoped, tag = 'input window, operand 16']
    #allocation10 [shape = 's32[2]{0}', space=sflag, size = 0x8, scoped, tag = 'scoped memory for pallas_classification_forward.1']
    #allocation11 [shape = 'u8[65536]{0}', space=vmem, size = 0x10000, scoped, tag = 'input window, operand 20, single buffered']
    #allocation12 [shape = 'u8[65536]{0}', space=vmem, size = 0x10000, scoped, tag = 'input window, operand 22, single buffered']
    #allocation13 [shape = 's32[1]{0}', space=sflag, size = 0x4, scoped, tag = 'scoped memory for pallas_classification_forward.1']
    #allocation14 [shape = 'u8[1024]{0}', space=vmem, size = 0x400, scoped, tag = 'output window, operand 0']
    %29 = vsyncpa [#allocation4], 0
    %s30 = scalar_lea.sflag [#allocation4], 1
    %31 = vsyncpa %s30, 0
    %32 = vsyncpa [#allocation7], 0
    %s33 = scalar_lea.sflag [#allocation7], 1
    %34 = vsyncpa %s33, 0
    %35 = vsyncpa [#allocation10], 0
    %s36 = scalar_lea.sflag [#allocation10], 1
    %37 = vsyncpa %s36, 0
    %38 = vsyncpa [#allocation13], 0
    %39 = vsyncpa [#allocation5], 0
    %s40 = scalar_lea.sflag [#allocation5], 1
    %41 = vsyncpa %s40, 0
    loop: start=0, step=1, limit=6
    $region2: #{pallas_classification_forward.1} parent=1 // loop_pre_header
      _
    $region3: #{pallas_classification_forward.1} parent=1 // loop_header
      %s43 = sphi 0, %s47
      %p44 = scmp.ge.s32.totalorder %s43, 6
      %s50 = sphi 0, %s62
      %s51 = sphi 0, %s58
      %s52 = sphi 0, %s50
      %s53 = sphi 0, %s51
      %s54 = sphi 0, %s52
      %s55 = sphi 0, %s53
      %s65 = sphi 0, %s67
      %s68 = sphi 0, %s65
      %s69 = sphi 0, %s68
      %s85 = sphi 0, %s69
      %s91 = sphi 0, %s93
      %s94 = sphi 0, %s91
      %s95 = sphi 0, %s94
      %s111 = sphi 0, %s95
      %s117 = sphi 0, %s119
      %s120 = sphi 0, %s117
      %s121 = sphi 0, %s120
      %s137 = sphi 0, %s121
      %s141 = sphi 0, %s141
      %s143 = sphi 0, %s141
      %s144 = sphi 0, %s143
      %s158 = sphi 0, %s144
      %s162 = sphi 0, %s162
      %s164 = sphi 0, %s162
      %s165 = sphi 0, %s164
      %s179 = sphi 0, %s165
      %s183 = sphi 0, %s183
      %s185 = sphi 0, %s183
      %s186 = sphi 0, %s185
      %s200 = sphi 0, %s186
      %s206 = sphi 0, %s208
      %s209 = sphi 0, %s206
      %s210 = sphi 0, %s209
      %s226 = sphi 0, %s210
      %s232 = sphi 0, %s234
      %s235 = sphi 0, %s232
      %s236 = sphi 0, %s235
      %s252 = sphi 0, %s236
      %s258 = sphi 0, %s260
      %s261 = sphi 0, %s258
      %s262 = sphi 0, %s261
      %s278 = sphi 0, %s262
      %s284 = sphi 0, %s286
      %s287 = sphi 0, %s284
      %s288 = sphi 0, %s287
      %s304 = sphi 0, %s288
      %s310 = sphi 0, %s312
      %s313 = sphi 0, %s310
      %s314 = sphi 0, %s313
      %s330 = sphi 0, %s314
      %s336 = sphi 0, %s338
      %s339 = sphi 0, %s336
      %s340 = sphi 0, %s339
      %s356 = sphi 0, %s340
      %s362 = sphi 0, %s364
      %s365 = sphi 0, %s362
      %s366 = sphi 0, %s365
      %s382 = sphi 0, %s366
      %s388 = sphi 0, %s390
      %s391 = sphi 0, %s388
      %s392 = sphi 0, %s391
      %s408 = sphi 0, %s392
      %s414 = sphi 0, %s416
      %s417 = sphi 0, %s414
      %s418 = sphi 0, %s417
      %s434 = sphi 0, %s418
      %s440 = sphi 0, %s442
      %s443 = sphi 0, %s440
      %s444 = sphi 0, %s443
      %s460 = sphi 0, %s444
      %s466 = sphi 0, %s468
      %s469 = sphi 0, %s466
      %s470 = sphi 0, %s469
      %s486 = sphi 0, %s470
      %s492 = sphi 0, %s494
      %s495 = sphi 0, %s492
      %s496 = sphi 0, %s495
      %s512 = sphi 0, %s496
      %s516 = sphi 0, %s516
      %s518 = sphi 0, %s516
      %s519 = sphi 0, %s518
      %s533 = sphi 0, %s519
      %s537 = sphi 0, %s537
      %s539 = sphi 0, %s537
      %s540 = sphi 0, %s539
      %s554 = sphi 0, %s540
      %s558 = sphi 0, %s558
      %s560 = sphi 0, %s558
      %s561 = sphi 0, %s560
      %s575 = sphi 0, %s561
      %s579 = sphi 0, %s579
      %s581 = sphi 0, %s579
      %s582 = sphi 0, %s581
      %s596 = sphi 0, %s582
      %s600 = sphi 0, %s600
      %s602 = sphi 0, %s600
      %s603 = sphi 0, %s602
      %s617 = sphi 0, %s603
      %s621 = sphi 0, %s621
      %s623 = sphi 0, %s621
      %s624 = sphi 0, %s623
      %s638 = sphi 0, %s624
      %s644 = sphi 0, %s646
      %s647 = sphi 0, %s644
      %s648 = sphi 0, %s647
      %s664 = sphi 0, %s648
    $region4: #{pallas_classification_forward.1} parent=1 // loop_header_branch
      %46 = sbr.rel (%p44) target = $region8
    $region5: #{pallas_classification_forward.1} parent=1 // loop_body
      %s48 = ssub.s32 %s43, 1
      %s49 = ssub.s32 %s43, 2
      %s56 = sadd.s32 1, %s51
      %p57 = scmp.ge.s32.totalorder %s56, 2
      %s58 = scalar_select %p57, 0, %s56
      %s59 = sadd.s32 1, %s50
      %s60 = scalar_select %p57, %s59, %s50
      %p61 = scmp.ge.s32.totalorder %s60, 2
      %s62 = scalar_select %p61, 0, %s60
      %s63 = ssub.s32 %s50, %s62
      %p64 = scmp.eq.s32.totalorder %s63, 0
      %s66 = sadd.s32 %s65, 1
      %s67 = scalar_select %p64, %s65, %s66
      %p70 = pneg %p64
      %p71 = scmp.eq.s32.totalorder %s43, 3
      %p72 = por %p70, %p71
      %p73 = scmp.ne.s32.totalorder %s65, %s68
      %p74 = scmp.eq.s32.totalorder %s43, 0
      %p75 = por %p73, %p74
      %p76 = scmp.ne.s32.totalorder %s65, %s68
      %p77 = scmp.eq.s32.totalorder %s48, 3
      %p78 = por %p76, %p77
      %p79 = scmp.ne.s32.totalorder %s68, %s69
      %p80 = scmp.eq.s32.totalorder %s48, 0
      %p81 = por %p79, %p80
      %p82 = scmp.ne.s32.totalorder %s68, %s69
      %p83 = scmp.eq.s32.totalorder %s49, 3
      %p84 = por %p82, %p83
      %p86 = scmp.ne.s32.totalorder %s69, %s85
      %p87 = scmp.eq.s32.totalorder %s49, 0
      %p88 = por %p86, %p87
      %s89 = ssub.s32 %s50, %s62
      %p90 = scmp.eq.s32.totalorder %s89, 0
      %s92 = sadd.s32 %s91, 1
      %s93 = scalar_select %p90, %s91, %s92
      %p96 = pneg %p90
      %p97 = scmp.eq.s32.totalorder %s43, 3
      %p98 = por %p96, %p97
      %p99 = scmp.ne.s32.totalorder %s91, %s94
      %p100 = scmp.eq.s32.totalorder %s43, 0
      %p101 = por %p99, %p100
      %p102 = scmp.ne.s32.totalorder %s91, %s94
      %p103 = scmp.eq.s32.totalorder %s48, 3
      %p104 = por %p102, %p103
      %p105 = scmp.ne.s32.totalorder %s94, %s95
      %p106 = scmp.eq.s32.totalorder %s48, 0
      %p107 = por %p105, %p106
      %p108 = scmp.ne.s32.totalorder %s94, %s95
      %p109 = scmp.eq.s32.totalorder %s49, 3
      %p110 = por %p108, %p109
      %p112 = scmp.ne.s32.totalorder %s95, %s111
      %p113 = scmp.eq.s32.totalorder %s49, 0
      %p114 = por %p112, %p113
      %s115 = ssub.s32 %s50, %s62
      %p116 = scmp.eq.s32.totalorder %s115, 0
      %s118 = sadd.s32 %s117, 1
      %s119 = scalar_select %p116, %s117, %s118
      %p122 = pneg %p116
      %p123 = scmp.eq.s32.totalorder %s43, 3
      %p124 = por %p122, %p123
      %p125 = scmp.ne.s32.totalorder %s117, %s120
      %p126 = scmp.eq.s32.totalorder %s43, 0
      %p127 = por %p125, %p126
      %p128 = scmp.ne.s32.totalorder %s117, %s120
      %p129 = scmp.eq.s32.totalorder %s48, 3
      %p130 = por %p128, %p129
      %p131 = scmp.ne.s32.totalorder %s120, %s121
      %p132 = scmp.eq.s32.totalorder %s48, 0
      %p133 = por %p131, %p132
      %p134 = scmp.ne.s32.totalorder %s120, %s121
      %p135 = scmp.eq.s32.totalorder %s49, 3
      %p136 = por %p134, %p135
      %p138 = scmp.ne.s32.totalorder %s121, %s137
      %p139 = scmp.eq.s32.totalorder %s49, 0
      %p140 = por %p138, %p139
      %s142 = sadd.s32 %s141, 1
      %p145 = scmp.eq.s32.totalorder %s43, 3
      %p146 = scmp.ne.s32.totalorder %s141, %s143
      %p147 = scmp.eq.s32.totalorder %s43, 0
      %p148 = por %p146, %p147
      %p149 = scmp.ne.s32.totalorder %s141, %s143
      %p150 = scmp.eq.s32.totalorder %s48, 3
      %p151 = por %p149, %p150
      %p152 = scmp.ne.s32.totalorder %s143, %s144
      %p153 = scmp.eq.s32.totalorder %s48, 0
      %p154 = por %p152, %p153
      %p155 = scmp.ne.s32.totalorder %s143, %s144
      %p156 = scmp.eq.s32.totalorder %s49, 3
      %p157 = por %p155, %p156
      %p159 = scmp.ne.s32.totalorder %s144, %s158
      %p160 = scmp.eq.s32.totalorder %s49, 0
      %p161 = por %p159, %p160
      %s163 = sadd.s32 %s162, 1
      %p166 = scmp.eq.s32.totalorder %s43, 3
      %p167 = scmp.ne.s32.totalorder %s162, %s164
      %p168 = scmp.eq.s32.totalorder %s43, 0
      %p169 = por %p167, %p168
      %p170 = scmp.ne.s32.totalorder %s162, %s164
      %p171 = scmp.eq.s32.totalorder %s48, 3
      %p172 = por %p170, %p171
      %p173 = scmp.ne.s32.totalorder %s164, %s165
      %p174 = scmp.eq.s32.totalorder %s48, 0
      %p175 = por %p173, %p174
      %p176 = scmp.ne.s32.totalorder %s164, %s165
      %p177 = scmp.eq.s32.totalorder %s49, 3
      %p178 = por %p176, %p177
      %p180 = scmp.ne.s32.totalorder %s165, %s179
      %p181 = scmp.eq.s32.totalorder %s49, 0
      %p182 = por %p180, %p181
      %s184 = sadd.s32 %s183, 1
      %p187 = scmp.eq.s32.totalorder %s43, 3
      %p188 = scmp.ne.s32.totalorder %s183, %s185
      %p189 = scmp.eq.s32.totalorder %s43, 0
      %p190 = por %p188, %p189
      %p191 = scmp.ne.s32.totalorder %s183, %s185
      %p192 = scmp.eq.s32.totalorder %s48, 3
      %p193 = por %p191, %p192
      %p194 = scmp.ne.s32.totalorder %s185, %s186
      %p195 = scmp.eq.s32.totalorder %s48, 0
      %p196 = por %p194, %p195
      %p197 = scmp.ne.s32.totalorder %s185, %s186
      %p198 = scmp.eq.s32.totalorder %s49, 3
      %p199 = por %p197, %p198
      %p201 = scmp.ne.s32.totalorder %s186, %s200
      %p202 = scmp.eq.s32.totalorder %s49, 0
      %p203 = por %p201, %p202
      %s204 = ssub.s32 %s51, %s58
      %p205 = scmp.eq.s32.totalorder %s204, 0
      %s207 = sadd.s32 %s206, 1
      %s208 = scalar_select %p205, %s206, %s207
      %p211 = pneg %p205
      %p212 = scmp.eq.s32.totalorder %s43, 3
      %p213 = por %p211, %p212
      %p214 = scmp.ne.s32.totalorder %s206, %s209
      %p215 = scmp.eq.s32.totalorder %s43, 0
      %p216 = por %p214, %p215
      %p217 = scmp.ne.s32.totalorder %s206, %s209
      %p218 = scmp.eq.s32.totalorder %s48, 3
      %p219 = por %p217, %p218
      %p220 = scmp.ne.s32.totalorder %s209, %s210
      %p221 = scmp.eq.s32.totalorder %s48, 0
      %p222 = por %p220, %p221
      %p223 = scmp.ne.s32.totalorder %s209, %s210
      %p224 = scmp.eq.s32.totalorder %s49, 3
      %p225 = por %p223, %p224
      %p227 = scmp.ne.s32.totalorder %s210, %s226
      %p228 = scmp.eq.s32.totalorder %s49, 0
      %p229 = por %p227, %p228
      %s230 = ssub.s32 %s51, %s58
      %p231 = scmp.eq.s32.totalorder %s230, 0
      %s233 = sadd.s32 %s232, 1
      %s234 = scalar_select %p231, %s232, %s233
      %p237 = pneg %p231
      %p238 = scmp.eq.s32.totalorder %s43, 3
      %p239 = por %p237, %p238
      %p240 = scmp.ne.s32.totalorder %s232, %s235
      %p241 = scmp.eq.s32.totalorder %s43, 0
      %p242 = por %p240, %p241
      %p243 = scmp.ne.s32.totalorder %s232, %s235
      %p244 = scmp.eq.s32.totalorder %s48, 3
      %p245 = por %p243, %p244
      %p246 = scmp.ne.s32.totalorder %s235, %s236
      %p247 = scmp.eq.s32.totalorder %s48, 0
      %p248 = por %p246, %p247
      %p249 = scmp.ne.s32.totalorder %s235, %s236
      %p250 = scmp.eq.s32.totalorder %s49, 3
      %p251 = por %p249, %p250
      %p253 = scmp.ne.s32.totalorder %s236, %s252
      %p254 = scmp.eq.s32.totalorder %s49, 0
      %p255 = por %p253, %p254
      %s256 = ssub.s32 %s51, %s58
      %p257 = scmp.eq.s32.totalorder %s256, 0
      %s259 = sadd.s32 %s258, 1
      %s260 = scalar_select %p257, %s258, %s259
      %p263 = pneg %p257
      %p264 = scmp.eq.s32.totalorder %s43, 3
      %p265 = por %p263, %p264
      %p266 = scmp.ne.s32.totalorder %s258, %s261
      %p267 = scmp.eq.s32.totalorder %s43, 0
      %p268 = por %p266, %p267
      %p269 = scmp.ne.s32.totalorder %s258, %s261
      %p270 = scmp.eq.s32.totalorder %s48, 3
      %p271 = por %p269, %p270
      %p272 = scmp.ne.s32.totalorder %s261, %s262
      %p273 = scmp.eq.s32.totalorder %s48, 0
      %p274 = por %p272, %p273
      %p275 = scmp.ne.s32.totalorder %s261, %s262
      %p276 = scmp.eq.s32.totalorder %s49, 3
      %p277 = por %p275, %p276
      %p279 = scmp.ne.s32.totalorder %s262, %s278
      %p280 = scmp.eq.s32.totalorder %s49, 0
      %p281 = por %p279, %p280
      %s282 = ssub.s32 %s51, %s58
      %p283 = scmp.eq.s32.totalorder %s282, 0
      %s285 = sadd.s32 %s284, 1
      %s286 = scalar_select %p283, %s284, %s285
      %p289 = pneg %p283
      %p290 = scmp.eq.s32.totalorder %s43, 3
      %p291 = por %p289, %p290
      %p292 = scmp.ne.s32.totalorder %s284, %s287
      %p293 = scmp.eq.s32.totalorder %s43, 0
      %p294 = por %p292, %p293
      %p295 = scmp.ne.s32.totalorder %s284, %s287
      %p296 = scmp.eq.s32.totalorder %s48, 3
      %p297 = por %p295, %p296
      %p298 = scmp.ne.s32.totalorder %s287, %s288
      %p299 = scmp.eq.s32.totalorder %s48, 0
      %p300 = por %p298, %p299
      %p301 = scmp.ne.s32.totalorder %s287, %s288
      %p302 = scmp.eq.s32.totalorder %s49, 3
      %p303 = por %p301, %p302
      %p305 = scmp.ne.s32.totalorder %s288, %s304
      %p306 = scmp.eq.s32.totalorder %s49, 0
      %p307 = por %p305, %p306
      %s308 = ssub.s32 %s51, %s58
      %p309 = scmp.eq.s32.totalorder %s308, 0
      %s311 = sadd.s32 %s310, 1
      %s312 = scalar_select %p309, %s310, %s311
      %p315 = pneg %p309
      %p316 = scmp.eq.s32.totalorder %s43, 3
      %p317 = por %p315, %p316
      %p318 = scmp.ne.s32.totalorder %s310, %s313
      %p319 = scmp.eq.s32.totalorder %s43, 0
      %p320 = por %p318, %p319
      %p321 = scmp.ne.s32.totalorder %s310, %s313
      %p322 = scmp.eq.s32.totalorder %s48, 3
      %p323 = por %p321, %p322
      %p324 = scmp.ne.s32.totalorder %s313, %s314
      %p325 = scmp.eq.s32.totalorder %s48, 0
      %p326 = por %p324, %p325
      %p327 = scmp.ne.s32.totalorder %s313, %s314
      %p328 = scmp.eq.s32.totalorder %s49, 3
      %p329 = por %p327, %p328
      %p331 = scmp.ne.s32.totalorder %s314, %s330
      %p332 = scmp.eq.s32.totalorder %s49, 0
      %p333 = por %p331, %p332
      %s334 = ssub.s32 %s51, %s58
      %p335 = scmp.eq.s32.totalorder %s334, 0
      %s337 = sadd.s32 %s336, 1
      %s338 = scalar_select %p335, %s336, %s337
      %p341 = pneg %p335
      %p342 = scmp.eq.s32.totalorder %s43, 3
      %p343 = por %p341, %p342
      %p344 = scmp.ne.s32.totalorder %s336, %s339
      %p345 = scmp.eq.s32.totalorder %s43, 0
      %p346 = por %p344, %p345
      %p347 = scmp.ne.s32.totalorder %s336, %s339
      %p348 = scmp.eq.s32.totalorder %s48, 3
      %p349 = por %p347, %p348
      %p350 = scmp.ne.s32.totalorder %s339, %s340
      %p351 = scmp.eq.s32.totalorder %s48, 0
      %p352 = por %p350, %p351
      %p353 = scmp.ne.s32.totalorder %s339, %s340
      %p354 = scmp.eq.s32.totalorder %s49, 3
      %p355 = por %p353, %p354
      %p357 = scmp.ne.s32.totalorder %s340, %s356
      %p358 = scmp.eq.s32.totalorder %s49, 0
      %p359 = por %p357, %p358
      %s360 = ssub.s32 %s51, %s58
      %p361 = scmp.eq.s32.totalorder %s360, 0
      %s363 = sadd.s32 %s362, 1
      %s364 = scalar_select %p361, %s362, %s363
      %p367 = pneg %p361
      %p368 = scmp.eq.s32.totalorder %s43, 3
      %p369 = por %p367, %p368
      %p370 = scmp.ne.s32.totalorder %s362, %s365
      %p371 = scmp.eq.s32.totalorder %s43, 0
      %p372 = por %p370, %p371
      %p373 = scmp.ne.s32.totalorder %s362, %s365
      %p374 = scmp.eq.s32.totalorder %s48, 3
      %p375 = por %p373, %p374
      %p376 = scmp.ne.s32.totalorder %s365, %s366
      %p377 = scmp.eq.s32.totalorder %s48, 0
      %p378 = por %p376, %p377
      %p379 = scmp.ne.s32.totalorder %s365, %s366
      %p380 = scmp.eq.s32.totalorder %s49, 3
      %p381 = por %p379, %p380
      %p383 = scmp.ne.s32.totalorder %s366, %s382
      %p384 = scmp.eq.s32.totalorder %s49, 0
      %p385 = por %p383, %p384
      %s386 = ssub.s32 %s51, %s58
      %p387 = scmp.eq.s32.totalorder %s386, 0
      %s389 = sadd.s32 %s388, 1
      %s390 = scalar_select %p387, %s388, %s389
      %p393 = pneg %p387
      %p394 = scmp.eq.s32.totalorder %s43, 3
      %p395 = por %p393, %p394
      %p396 = scmp.ne.s32.totalorder %s388, %s391
      %p397 = scmp.eq.s32.totalorder %s43, 0
      %p398 = por %p396, %p397
      %p399 = scmp.ne.s32.totalorder %s388, %s391
      %p400 = scmp.eq.s32.totalorder %s48, 3
      %p401 = por %p399, %p400
      %p402 = scmp.ne.s32.totalorder %s391, %s392
      %p403 = scmp.eq.s32.totalorder %s48, 0
      %p404 = por %p402, %p403
      %p405 = scmp.ne.s32.totalorder %s391, %s392
      %p406 = scmp.eq.s32.totalorder %s49, 3
      %p407 = por %p405, %p406
      %p409 = scmp.ne.s32.totalorder %s392, %s408
      %p410 = scmp.eq.s32.totalorder %s49, 0
      %p411 = por %p409, %p410
      %s412 = ssub.s32 %s51, %s58
      %p413 = scmp.eq.s32.totalorder %s412, 0
      %s415 = sadd.s32 %s414, 1
      %s416 = scalar_select %p413, %s414, %s415
      %p419 = pneg %p413
      %p420 = scmp.eq.s32.totalorder %s43, 3
      %p421 = por %p419, %p420
      %p422 = scmp.ne.s32.totalorder %s414, %s417
      %p423 = scmp.eq.s32.totalorder %s43, 0
      %p424 = por %p422, %p423
      %p425 = scmp.ne.s32.totalorder %s414, %s417
      %p426 = scmp.eq.s32.totalorder %s48, 3
      %p427 = por %p425, %p426
      %p428 = scmp.ne.s32.totalorder %s417, %s418
      %p429 = scmp.eq.s32.totalorder %s48, 0
      %p430 = por %p428, %p429
      %p431 = scmp.ne.s32.totalorder %s417, %s418
      %p432 = scmp.eq.s32.totalorder %s49, 3
      %p433 = por %p431, %p432
      %p435 = scmp.ne.s32.totalorder %s418, %s434
      %p436 = scmp.eq.s32.totalorder %s49, 0
      %p437 = por %p435, %p436
      %s438 = ssub.s32 %s51, %s58
      %p439 = scmp.eq.s32.totalorder %s438, 0
      %s441 = sadd.s32 %s440, 1
      %s442 = scalar_select %p439, %s440, %s441
      %p445 = pneg %p439
      %p446 = scmp.eq.s32.totalorder %s43, 3
      %p447 = por %p445, %p446
      %p448 = scmp.ne.s32.totalorder %s440, %s443
      %p449 = scmp.eq.s32.totalorder %s43, 0
      %p450 = por %p448, %p449
      %p451 = scmp.ne.s32.totalorder %s440, %s443
      %p452 = scmp.eq.s32.totalorder %s48, 3
      %p453 = por %p451, %p452
      %p454 = scmp.ne.s32.totalorder %s443, %s444
      %p455 = scmp.eq.s32.totalorder %s48, 0
      %p456 = por %p454, %p455
      %p457 = scmp.ne.s32.totalorder %s443, %s444
      %p458 = scmp.eq.s32.totalorder %s49, 3
      %p459 = por %p457, %p458
      %p461 = scmp.ne.s32.totalorder %s444, %s460
      %p462 = scmp.eq.s32.totalorder %s49, 0
      %p463 = por %p461, %p462
      %s464 = ssub.s32 %s51, %s58
      %p465 = scmp.eq.s32.totalorder %s464, 0
      %s467 = sadd.s32 %s466, 1
      %s468 = scalar_select %p465, %s466, %s467
      %p471 = pneg %p465
      %p472 = scmp.eq.s32.totalorder %s43, 3
      %p473 = por %p471, %p472
      %p474 = scmp.ne.s32.totalorder %s466, %s469
      %p475 = scmp.eq.s32.totalorder %s43, 0
      %p476 = por %p474, %p475
      %p477 = scmp.ne.s32.totalorder %s466, %s469
      %p478 = scmp.eq.s32.totalorder %s48, 3
      %p479 = por %p477, %p478
      %p480 = scmp.ne.s32.totalorder %s469, %s470
      %p481 = scmp.eq.s32.totalorder %s48, 0
      %p482 = por %p480, %p481
      %p483 = scmp.ne.s32.totalorder %s469, %s470
      %p484 = scmp.eq.s32.totalorder %s49, 3
      %p485 = por %p483, %p484
      %p487 = scmp.ne.s32.totalorder %s470, %s486
      %p488 = scmp.eq.s32.totalorder %s49, 0
      %p489 = por %p487, %p488
      %s490 = ssub.s32 %s51, %s58
      %p491 = scmp.eq.s32.totalorder %s490, 0
      %s493 = sadd.s32 %s492, 1
      %s494 = scalar_select %p491, %s492, %s493
      %p497 = pneg %p491
      %p498 = scmp.eq.s32.totalorder %s43, 3
      %p499 = por %p497, %p498
      %p500 = scmp.ne.s32.totalorder %s492, %s495
      %p501 = scmp.eq.s32.totalorder %s43, 0
      %p502 = por %p500, %p501
      %p503 = scmp.ne.s32.totalorder %s492, %s495
      %p504 = scmp.eq.s32.totalorder %s48, 3
      %p505 = por %p503, %p504
      %p506 = scmp.ne.s32.totalorder %s495, %s496
      %p507 = scmp.eq.s32.totalorder %s48, 0
      %p508 = por %p506, %p507
      %p509 = scmp.ne.s32.totalorder %s495, %s496
      %p510 = scmp.eq.s32.totalorder %s49, 3
      %p511 = por %p509, %p510
      %p513 = scmp.ne.s32.totalorder %s496, %s512
      %p514 = scmp.eq.s32.totalorder %s49, 0
      %p515 = por %p513, %p514
      %s517 = sadd.s32 %s516, 1
      %p520 = scmp.eq.s32.totalorder %s43, 3
      %p521 = scmp.ne.s32.totalorder %s516, %s518
      %p522 = scmp.eq.s32.totalorder %s43, 0
      %p523 = por %p521, %p522
      %p524 = scmp.ne.s32.totalorder %s516, %s518
      %p525 = scmp.eq.s32.totalorder %s48, 3
      %p526 = por %p524, %p525
      %p527 = scmp.ne.s32.totalorder %s518, %s519
      %p528 = scmp.eq.s32.totalorder %s48, 0
      %p529 = por %p527, %p528
      %p530 = scmp.ne.s32.totalorder %s518, %s519
      %p531 = scmp.eq.s32.totalorder %s49, 3
      %p532 = por %p530, %p531
      %p534 = scmp.ne.s32.totalorder %s519, %s533
      %p535 = scmp.eq.s32.totalorder %s49, 0
      %p536 = por %p534, %p535
      %s538 = sadd.s32 %s537, 1
      %p541 = scmp.eq.s32.totalorder %s43, 3
      %p542 = scmp.ne.s32.totalorder %s537, %s539
      %p543 = scmp.eq.s32.totalorder %s43, 0
      %p544 = por %p542, %p543
      %p545 = scmp.ne.s32.totalorder %s537, %s539
      %p546 = scmp.eq.s32.totalorder %s48, 3
      %p547 = por %p545, %p546
      %p548 = scmp.ne.s32.totalorder %s539, %s540
      %p549 = scmp.eq.s32.totalorder %s48, 0
      %p550 = por %p548, %p549
      %p551 = scmp.ne.s32.totalorder %s539, %s540
      %p552 = scmp.eq.s32.totalorder %s49, 3
      %p553 = por %p551, %p552
      %p555 = scmp.ne.s32.totalorder %s540, %s554
      %p556 = scmp.eq.s32.totalorder %s49, 0
      %p557 = por %p555, %p556
      %s559 = sadd.s32 %s558, 1
      %p562 = scmp.eq.s32.totalorder %s43, 3
      %p563 = scmp.ne.s32.totalorder %s558, %s560
      %p564 = scmp.eq.s32.totalorder %s43, 0
      %p565 = por %p563, %p564
      %p566 = scmp.ne.s32.totalorder %s558, %s560
      %p567 = scmp.eq.s32.totalorder %s48, 3
      %p568 = por %p566, %p567
      %p569 = scmp.ne.s32.totalorder %s560, %s561
      %p570 = scmp.eq.s32.totalorder %s48, 0
      %p571 = por %p569, %p570
      %p572 = scmp.ne.s32.totalorder %s560, %s561
      %p573 = scmp.eq.s32.totalorder %s49, 3
      %p574 = por %p572, %p573
      %p576 = scmp.ne.s32.totalorder %s561, %s575
      %p577 = scmp.eq.s32.totalorder %s49, 0
      %p578 = por %p576, %p577
      %s580 = sadd.s32 %s579, 1
      %p583 = scmp.eq.s32.totalorder %s43, 3
      %p584 = scmp.ne.s32.totalorder %s579, %s581
      %p585 = scmp.eq.s32.totalorder %s43, 0
      %p586 = por %p584, %p585
      %p587 = scmp.ne.s32.totalorder %s579, %s581
      %p588 = scmp.eq.s32.totalorder %s48, 3
      %p589 = por %p587, %p588
      %p590 = scmp.ne.s32.totalorder %s581, %s582
      %p591 = scmp.eq.s32.totalorder %s48, 0
      %p592 = por %p590, %p591
      %p593 = scmp.ne.s32.totalorder %s581, %s582
      %p594 = scmp.eq.s32.totalorder %s49, 3
      %p595 = por %p593, %p594
      %p597 = scmp.ne.s32.totalorder %s582, %s596
      %p598 = scmp.eq.s32.totalorder %s49, 0
      %p599 = por %p597, %p598
      %s601 = sadd.s32 %s600, 1
      %p604 = scmp.eq.s32.totalorder %s43, 3
      %p605 = scmp.ne.s32.totalorder %s600, %s602
      %p606 = scmp.eq.s32.totalorder %s43, 0
      %p607 = por %p605, %p606
      %p608 = scmp.ne.s32.totalorder %s600, %s602
      %p609 = scmp.eq.s32.totalorder %s48, 3
      %p610 = por %p608, %p609
      %p611 = scmp.ne.s32.totalorder %s602, %s603
      %p612 = scmp.eq.s32.totalorder %s48, 0
      %p613 = por %p611, %p612
      %p614 = scmp.ne.s32.totalorder %s602, %s603
      %p615 = scmp.eq.s32.totalorder %s49, 3
      %p616 = por %p614, %p615
      %p618 = scmp.ne.s32.totalorder %s603, %s617
      %p619 = scmp.eq.s32.totalorder %s49, 0
      %p620 = por %p618, %p619
      %s622 = sadd.s32 %s621, 1
      %p625 = scmp.eq.s32.totalorder %s43, 3
      %p626 = scmp.ne.s32.totalorder %s621, %s623
      %p627 = scmp.eq.s32.totalorder %s43, 0
      %p628 = por %p626, %p627
      %p629 = scmp.ne.s32.totalorder %s621, %s623
      %p630 = scmp.eq.s32.totalorder %s48, 3
      %p631 = por %p629, %p630
      %p632 = scmp.ne.s32.totalorder %s623, %s624
      %p633 = scmp.eq.s32.totalorder %s48, 0
      %p634 = por %p632, %p633
      %p635 = scmp.ne.s32.totalorder %s623, %s624
      %p636 = scmp.eq.s32.totalorder %s49, 3
      %p637 = por %p635, %p636
      %p639 = scmp.ne.s32.totalorder %s624, %s638
      %p640 = scmp.eq.s32.totalorder %s49, 0
      %p641 = por %p639, %p640
      %s642 = ssub.s32 %s50, %s62
      %p643 = scmp.eq.s32.totalorder %s642, 0
      %s645 = sadd.s32 %s644, 1
      %s646 = scalar_select %p643, %s644, %s645
      %p649 = pneg %p643
      %p650 = scmp.eq.s32.totalorder %s43, 3
      %p651 = por %p649, %p650
      %p652 = scmp.ne.s32.totalorder %s644, %s647
      %p653 = scmp.eq.s32.totalorder %s43, 0
      %p654 = por %p652, %p653
      %p655 = scmp.ne.s32.totalorder %s644, %s647
      %p656 = scmp.eq.s32.totalorder %s48, 3
      %p657 = por %p655, %p656
      %p658 = scmp.ne.s32.totalorder %s647, %s648
      %p659 = scmp.eq.s32.totalorder %s48, 0
      %p660 = por %p658, %p659
      %p661 = scmp.ne.s32.totalorder %s647, %s648
      %p662 = scmp.eq.s32.totalorder %s49, 3
      %p663 = por %p661, %p662
      %p665 = scmp.ne.s32.totalorder %s648, %s664
      %p666 = scmp.eq.s32.totalorder %s49, 0
      %p667 = por %p665, %p666
      %p668 = scmp.le.s32.totalorder 1, %s43
      %p669 = scmp.lt.s32.totalorder %s43, 5
      %p670 = pnand %p668, %p669
      %p671 = pneg %p670
      // Predicated region
      $region9: #{pallas_classification_forward.1} parent=5 // pred_check
        _
      $region10: #{pallas_classification_forward.1} parent=5 // pred_check_branch
        %673 = sbr.rel (%p670) target = $region12
      $region11: #{pallas_classification_forward.1} parent=5 // pred_region
        %s674 = ssub.s32 %s43, 1
        // Predicated region
        $region13: #{pallas_classification_forward.1} parent=11 // pred_check
          %p675 = pneg %p154
        $region14: #{pallas_classification_forward.1} parent=11 // pred_check_branch
          %677 = sbr.rel (%p675) target = $region16
        $region15: #{pallas_classification_forward.1} parent=11 // pred_region
          _
        $region16: #{pallas_classification_forward.1} parent=11 // pred_fallthru
          _
        // Predicated region
        $region17: #{pallas_classification_forward.1} parent=11 // pred_check
          %p678 = pneg %p175
        $region18: #{pallas_classification_forward.1} parent=11 // pred_check_branch
          %680 = sbr.rel (%p678) target = $region20
        $region19: #{pallas_classification_forward.1} parent=11 // pred_region
          _
        $region20: #{pallas_classification_forward.1} parent=11 // pred_fallthru
          _
        // Predicated region
        $region21: #{pallas_classification_forward.1} parent=11 // pred_check
          %p681 = pneg %p196
        $region22: #{pallas_classification_forward.1} parent=11 // pred_check_branch
          %683 = sbr.rel (%p681) target = $region24
        $region23: #{pallas_classification_forward.1} parent=11 // pred_region
          _
        $region24: #{pallas_classification_forward.1} parent=11 // pred_fallthru
          _
        // Predicated region
        $region25: #{pallas_classification_forward.1} parent=11 // pred_check
          %p684 = pneg %p529
        $region26: #{pallas_classification_forward.1} parent=11 // pred_check_branch
          %686 = sbr.rel (%p684) target = $region28
        $region27: #{pallas_classification_forward.1} parent=11 // pred_region
          _
        $region28: #{pallas_classification_forward.1} parent=11 // pred_fallthru
          _
        // Predicated region
        $region29: #{pallas_classification_forward.1} parent=11 // pred_check
          %p687 = pneg %p550
        $region30: #{pallas_classification_forward.1} parent=11 // pred_check_branch
          %689 = sbr.rel (%p687) target = $region32
        $region31: #{pallas_classification_forward.1} parent=11 // pred_region
          _
        $region32: #{pallas_classification_forward.1} parent=11 // pred_fallthru
          _
        // Predicated region
        $region33: #{pallas_classification_forward.1} parent=11 // pred_check
          %p690 = pneg %p571
        $region34: #{pallas_classification_forward.1} parent=11 // pred_check_branch
          %692 = sbr.rel (%p690) target = $region36
        $region35: #{pallas_classification_forward.1} parent=11 // pred_region
          %s694 = ssub.s32 2048, 2048
          %695 = vsyncadd [#allocation10], %s694
          %s696 = sshll.u32 [#allocation11], 4
          %s697 = int_to_ptr.vmem [resolvable:$true] %s696
          %702 = dma.hbm_to_vmem [thread:$0]  %s20, 2048, %s697, [#allocation10], 128, 128, 8
        $region36: #{pallas_classification_forward.1} parent=11 // pred_fallthru
          _
        // Predicated region
        $region37: #{pallas_classification_forward.1} parent=11 // pred_check
          %p703 = pneg %p592
        $region38: #{pallas_classification_forward.1} parent=11 // pred_check_branch
          %705 = sbr.rel (%p703) target = $region40
        $region39: #{pallas_classification_forward.1} parent=11 // pred_region
          _
        $region40: #{pallas_classification_forward.1} parent=11 // pred_fallthru
          _
        // Predicated region
        $region41: #{pallas_classification_forward.1} parent=11 // pred_check
          %p706 = pneg %p613
        $region42: #{pallas_classification_forward.1} parent=11 // pred_check_branch
          %708 = sbr.rel (%p706) target = $region44
        $region43: #{pallas_classification_forward.1} parent=11 // pred_region
          %s710 = ssub.s32 2048, 2048
          %711 = vsyncadd [#allocation13], %s710
          %s712 = sshll.u32 [#allocation12], 4
          %s713 = int_to_ptr.vmem [resolvable:$true] %s712
          %718 = dma.hbm_to_vmem [thread:$0]  %s22, 2048, %s713, [#allocation13], 128, 128, 8
        $region44: #{pallas_classification_forward.1} parent=11 // pred_fallthru
          _
        // Predicated region
        $region45: #{pallas_classification_forward.1} parent=11 // pred_check
          %p719 = pneg %p634
        $region46: #{pallas_classification_forward.1} parent=11 // pred_check_branch
          %721 = sbr.rel (%p719) target = $region48
        $region47: #{pallas_classification_forward.1} parent=11 // pred_region
          _
        $region48: #{pallas_classification_forward.1} parent=11 // pred_fallthru
          _
      $region12: #{pallas_classification_forward.1} parent=5 // pred_fallthru
        _
      %p722 = scmp.lt.s32.totalorder %s43, 4
      // Predicated region
      $region49: #{pallas_classification_forward.1} parent=5 // pred_check
        %p723 = pneg %p722
      $region50: #{pallas_classification_forward.1} parent=5 // pred_check_branch
        %725 = sbr.rel (%p723) target = $region52
      $region51: #{pallas_classification_forward.1} parent=5 // pred_region
        // Predicated region
        $region53: #{pallas_classification_forward.1} parent=51 // pred_check
          %p726 = pneg %p75
        $region54: #{pallas_classification_forward.1} parent=51 // pred_check_branch
          %728 = sbr.rel (%p726) target = $region56
        $region55: #{pallas_classification_forward.1} parent=51 // pred_region
          %p729 = scmp.lt.s32.totalorder %s50, 1
          %s730 = scalar_select %p729, %s50, 1
          %s731 = smul.addr %s730, 8
          %s732 = scalar_lea.vmem %s0, %s731
        $region56: #{pallas_classification_forward.1} parent=51 // pred_fallthru
          _
        // Predicated region
        $region57: #{pallas_classification_forward.1} parent=51 // pred_check
          %p733 = pneg %p101
        $region58: #{pallas_classification_forward.1} parent=51 // pred_check_branch
          %735 = sbr.rel (%p733) target = $region60
        $region59: #{pallas_classification_forward.1} parent=51 // pred_region
          %p736 = scmp.lt.s32.totalorder %s50, 1
          %s737 = scalar_select %p736, %s50, 1
          %s738 = scalar_lea.vmem %s1, %s737
        $region60: #{pallas_classification_forward.1} parent=51 // pred_fallthru
          _
        // Predicated region
        $region61: #{pallas_classification_forward.1} parent=51 // pred_check
          %p739 = pneg %p127
        $region62: #{pallas_classification_forward.1} parent=51 // pred_check_branch
          %741 = sbr.rel (%p739) target = $region64
        $region63: #{pallas_classification_forward.1} parent=51 // pred_region
          %p742 = scmp.lt.s32.totalorder %s50, 1
          %s743 = scalar_select %p742, %s50, 1
          %s744 = smul.addr %s743, 8
          %s745 = scalar_lea.vmem %s2, %s744
        $region64: #{pallas_classification_forward.1} parent=51 // pred_fallthru
          _
        // Predicated region
        $region65: #{pallas_classification_forward.1} parent=51 // pred_check
          %p746 = pneg %p216
        $region66: #{pallas_classification_forward.1} parent=51 // pred_check_branch
          %748 = sbr.rel (%p746) target = $region68
        $region67: #{pallas_classification_forward.1} parent=51 // pred_region
          %p749 = scmp.lt.s32.totalorder %s51, 1
          %s750 = scalar_select %p749, %s51, 1
          %s751 = scalar_lea.vmem %s6, %s750
        $region68: #{pallas_classification_forward.1} parent=51 // pred_fallthru
          _
        // Predicated region
        $region69: #{pallas_classification_forward.1} parent=51 // pred_check
          %p752 = pneg %p242
        $region70: #{pallas_classification_forward.1} parent=51 // pred_check_branch
          %754 = sbr.rel (%p752) target = $region72
        $region71: #{pallas_classification_forward.1} parent=51 // pred_region
          %p755 = scmp.lt.s32.totalorder %s51, 1
          %s756 = scalar_select %p755, %s51, 1
          %s757 = scalar_lea.vmem %s7, %s756
        $region72: #{pallas_classification_forward.1} parent=51 // pred_fallthru
          _
        // Predicated region
        $region73: #{pallas_classification_forward.1} parent=51 // pred_check
          %p758 = pneg %p268
        $region74: #{pallas_classification_forward.1} parent=51 // pred_check_branch
          %760 = sbr.rel (%p758) target = $region76
        $region75: #{pallas_classification_forward.1} parent=51 // pred_region
          %s761 = sand.u32 %s258, 1
          %s762 = scalar_lea.sflag [#allocation4], %s761
          %s763 = sand.u32 %s258, 1
          %s764 = smul.addr %s763, 384
          %s765 = scalar_lea.vmem [#allocation3], %s764
          %s767 = ssub.s32 6144, 6144
          %768 = vsyncadd %s762, %s767
          %s769 = smul.addr %s51, 48
          %s770 = smul.addr %s769, 128
          %s771 = scalar_lea.hbm %s8, %s770
          %s772 = sshll.u32 %s765, 4
          %s773 = int_to_ptr.vmem [resolvable:$true] %s772
          %778 = dma.hbm_to_vmem [thread:$0]  %s771, 6144, %s773, %s762, 384, 384, 24
        $region76: #{pallas_classification_forward.1} parent=51 // pred_fallthru
          _
        // Predicated region
        $region77: #{pallas_classification_forward.1} parent=51 // pred_check
          %p779 = pneg %p294
        $region78: #{pallas_classification_forward.1} parent=51 // pred_check_branch
          %781 = sbr.rel (%p779) target = $region80
        $region79: #{pallas_classification_forward.1} parent=51 // pred_region
          %p782 = scmp.lt.s32.totalorder %s51, 1
          %s783 = scalar_select %p782, %s51, 1
          %s784 = smul.addr %s783, 3
          %s785 = scalar_lea.vmem %s9, %s784
        $region80: #{pallas_classification_forward.1} parent=51 // pred_fallthru
          _
        // Predicated region
        $region81: #{pallas_classification_forward.1} parent=51 // pred_check
          %p786 = pneg %p320
        $region82: #{pallas_classification_forward.1} parent=51 // pred_check_branch
          %788 = sbr.rel (%p786) target = $region84
        $region83: #{pallas_classification_forward.1} parent=51 // pred_region
          %s789 = sand.u32 %s43, 1
          %s790 = scalar_lea.sflag [#allocation7], %s789
          %s791 = sand.u32 %s310, 1
          %s792 = smul.addr %s791, 128
          %s793 = scalar_lea.vmem [#allocation6], %s792
          %s795 = ssub.s32 2048, 2048
          %796 = vsyncadd %s790, %s795
          %s797 = smul.addr %s51, 16
          %s798 = smul.addr %s797, 128
          %s799 = scalar_lea.hbm %s10, %s798
          %s800 = sshll.u32 %s793, 4
          %s801 = int_to_ptr.vmem [resolvable:$true] %s800
          %806 = dma.hbm_to_vmem [thread:$0]  %s799, 2048, %s801, %s790, 128, 128, 8
        $region84: #{pallas_classification_forward.1} parent=51 // pred_fallthru
          _
        // Predicated region
        $region85: #{pallas_classification_forward.1} parent=51 // pred_check
          %p807 = pneg %p346
        $region86: #{pallas_classification_forward.1} parent=51 // pred_check_branch
          %809 = sbr.rel (%p807) target = $region88
        $region87: #{pallas_classification_forward.1} parent=51 // pred_region
          %p810 = scmp.lt.s32.totalorder %s51, 1
          %s811 = scalar_select %p810, %s51, 1
          %s812 = scalar_lea.vmem %s11, %s811
        $region88: #{pallas_classification_forward.1} parent=51 // pred_fallthru
          _
        // Predicated region
        $region89: #{pallas_classification_forward.1} parent=51 // pred_check
          %p813 = pneg %p372
        $region90: #{pallas_classification_forward.1} parent=51 // pred_check_branch
          %815 = sbr.rel (%p813) target = $region92
        $region91: #{pallas_classification_forward.1} parent=51 // pred_region
          %p816 = scmp.lt.s32.totalorder %s51, 1
          %s817 = scalar_select %p816, %s51, 1
          %s818 = scalar_lea.vmem %s12, %s817
        $region92: #{pallas_classification_forward.1} parent=51 // pred_fallthru
          _
        // Predicated region
        $region93: #{pallas_classification_forward.1} parent=51 // pred_check
          %p819 = pneg %p398
        $region94: #{pallas_classification_forward.1} parent=51 // pred_check_branch
          %821 = sbr.rel (%p819) target = $region96
        $region95: #{pallas_classification_forward.1} parent=51 // pred_region
          %p822 = scmp.lt.s32.totalorder %s51, 1
          %s823 = scalar_select %p822, %s51, 1
          %s824 = scalar_lea.vmem %s13, %s823
        $region96: #{pallas_classification_forward.1} parent=51 // pred_fallthru
          _
        // Predicated region
        $region97: #{pallas_classification_forward.1} parent=51 // pred_check
          %p825 = pneg %p424
        $region98: #{pallas_classification_forward.1} parent=51 // pred_check_branch
          %827 = sbr.rel (%p825) target = $region100
        $region99: #{pallas_classification_forward.1} parent=51 // pred_region
          %s828 = sand.u32 %s43, 1
          %s829 = scalar_lea.sflag [#allocation7], %s828
          %s830 = sand.u32 %s414, 1
          %s831 = smul.addr %s830, 128
          %s832 = scalar_lea.vmem [#allocation8], %s831
          %s834 = ssub.s32 2048, 2048
          %835 = vsyncadd %s829, %s834
          %s836 = smul.addr %s51, 16
          %s837 = smul.addr %s836, 128
          %s838 = scalar_lea.hbm %s14, %s837
          %s839 = sshll.u32 %s832, 4
          %s840 = int_to_ptr.vmem [resolvable:$true] %s839
          %845 = dma.hbm_to_vmem [thread:$0]  %s838, 2048, %s840, %s829, 128, 128, 8
        $region100: #{pallas_classification_forward.1} parent=51 // pred_fallthru
          _
        // Predicated region
        $region101: #{pallas_classification_forward.1} parent=51 // pred_check
          %p846 = pneg %p450
        $region102: #{pallas_classification_forward.1} parent=51 // pred_check_branch
          %848 = sbr.rel (%p846) target = $region104
        $region103: #{pallas_classification_forward.1} parent=51 // pred_region
          %p849 = scmp.lt.s32.totalorder %s51, 1
          %s850 = scalar_select %p849, %s51, 1
          %s851 = scalar_lea.vmem %s15, %s850
        $region104: #{pallas_classification_forward.1} parent=51 // pred_fallthru
          _
        // Predicated region
        $region105: #{pallas_classification_forward.1} parent=51 // pred_check
          %p852 = pneg %p476
        $region106: #{pallas_classification_forward.1} parent=51 // pred_check_branch
          %854 = sbr.rel (%p852) target = $region108
        $region107: #{pallas_classification_forward.1} parent=51 // pred_region
          %s855 = sand.u32 %s43, 1
          %s856 = scalar_lea.sflag [#allocation10], %s855
          %s857 = sand.u32 %s466, 1
          %s858 = smul.addr %s857, 128
          %s859 = scalar_lea.vmem [#allocation9], %s858
          %s861 = ssub.s32 2048, 2048
          %862 = vsyncadd %s856, %s861
          %s863 = smul.addr %s51, 16
          %s864 = smul.addr %s863, 128
          %s865 = scalar_lea.hbm %s16, %s864
          %s866 = sshll.u32 %s859, 4
          %s867 = int_to_ptr.vmem [resolvable:$true] %s866
          %872 = dma.hbm_to_vmem [thread:$0]  %s865, 2048, %s867, %s856, 128, 128, 8
        $region108: #{pallas_classification_forward.1} parent=51 // pred_fallthru
          _
        // Predicated region
        $region109: #{pallas_classification_forward.1} parent=51 // pred_check
          %p873 = pneg %p502
        $region110: #{pallas_classification_forward.1} parent=51 // pred_check_branch
          %875 = sbr.rel (%p873) target = $region112
        $region111: #{pallas_classification_forward.1} parent=51 // pred_region
          %p876 = scmp.lt.s32.totalorder %s51, 1
          %s877 = scalar_select %p876, %s51, 1
          %s878 = scalar_lea.vmem %s17, %s877
        $region112: #{pallas_classification_forward.1} parent=51 // pred_fallthru
          _
      $region52: #{pallas_classification_forward.1} parent=5 // pred_fallthru
        _
      %p879 = scmp.le.s32.totalorder 1, %s43
      %p880 = scmp.lt.s32.totalorder %s43, 5
      %p881 = pnand %p879, %p880
      %p882 = pneg %p881
      // Predicated region
      $region113: #{pallas_classification_forward.1} parent=5 // pred_check
        _
      $region114: #{pallas_classification_forward.1} parent=5 // pred_check_branch
        %884 = sbr.rel (%p881) target = $region116
      $region115: #{pallas_classification_forward.1} parent=5 // pred_region
        %s885 = ssub.s32 %s43, 1
        %s886 = sand.u32 %s261, 1
        %s887 = scalar_lea.sflag [#allocation4], %s886
        %s888 = sand.u32 %s261, 1
        %s889 = smul.addr %s888, 384
        %s890 = scalar_lea.vmem [#allocation3], %s889
        // Predicated region
        $region117: #{pallas_classification_forward.1} parent=115 // pred_check
          %p891 = pneg %p274
        $region118: #{pallas_classification_forward.1} parent=115 // pred_check_branch
          %893 = sbr.rel (%p891) target = $region120
        $region119: #{pallas_classification_forward.1} parent=115 // pred_region
          %894 = dma.done %s887, 6144
        $region120: #{pallas_classification_forward.1} parent=115 // pred_fallthru
          _
        %s895 = sand.u32 %s48, 1
        %s896 = scalar_lea.sflag [#allocation7], %s895
        %s897 = sand.u32 %s313, 1
        %s898 = smul.addr %s897, 128
        %s899 = scalar_lea.vmem [#allocation6], %s898
        // Predicated region
        $region121: #{pallas_classification_forward.1} parent=115 // pred_check
          %p900 = pneg %p326
        $region122: #{pallas_classification_forward.1} parent=115 // pred_check_branch
          %902 = sbr.rel (%p900) target = $region124
        $region123: #{pallas_classification_forward.1} parent=115 // pred_region
          %903 = dma.done %s896, 2048
        $region124: #{pallas_classification_forward.1} parent=115 // pred_fallthru
          _
        %s904 = sand.u32 %s48, 1
        %s905 = scalar_lea.sflag [#allocation7], %s904
        %s906 = sand.u32 %s417, 1
        %s907 = smul.addr %s906, 128
        %s908 = scalar_lea.vmem [#allocation8], %s907
        // Predicated region
        $region125: #{pallas_classification_forward.1} parent=115 // pred_check
          %p909 = pneg %p430
        $region126: #{pallas_classification_forward.1} parent=115 // pred_check_branch
          %911 = sbr.rel (%p909) target = $region128
        $region127: #{pallas_classification_forward.1} parent=115 // pred_region
          %912 = dma.done %s905, 2048
        $region128: #{pallas_classification_forward.1} parent=115 // pred_fallthru
          _
        %s913 = sand.u32 %s48, 1
        %s914 = scalar_lea.sflag [#allocation10], %s913
        %s915 = sand.u32 %s469, 1
        %s916 = smul.addr %s915, 128
        %s917 = scalar_lea.vmem [#allocation9], %s916
        // Predicated region
        $region129: #{pallas_classification_forward.1} parent=115 // pred_check
          %p918 = pneg %p482
        $region130: #{pallas_classification_forward.1} parent=115 // pred_check_branch
          %920 = sbr.rel (%p918) target = $region132
        $region131: #{pallas_classification_forward.1} parent=115 // pred_region
          %921 = dma.done %s914, 2048
        $region132: #{pallas_classification_forward.1} parent=115 // pred_fallthru
          _
        // Predicated region
        $region133: #{pallas_classification_forward.1} parent=115 // pred_check
          %p922 = pneg %p571
        $region134: #{pallas_classification_forward.1} parent=115 // pred_check_branch
          %924 = sbr.rel (%p922) target = $region136
        $region135: #{pallas_classification_forward.1} parent=115 // pred_region
          %925 = dma.done [#allocation10], 2048
        $region136: #{pallas_classification_forward.1} parent=115 // pred_fallthru
          _
        // Predicated region
        $region137: #{pallas_classification_forward.1} parent=115 // pred_check
          %p926 = pneg %p613
        $region138: #{pallas_classification_forward.1} parent=115 // pred_check_branch
          %928 = sbr.rel (%p926) target = $region140
        $region139: #{pallas_classification_forward.1} parent=115 // pred_region
          %929 = dma.done [#allocation13], 2048
        $region140: #{pallas_classification_forward.1} parent=115 // pred_fallthru
          _
        %p930 = scmp.lt.s32.totalorder %s52, 1
        %s931 = scalar_select %p930, %s52, 1
        %s932 = smul.addr %s931, 8
        %s933 = scalar_lea.vmem %s0, %s932
        %p934 = pneg %p81
        %p935 = pneg %p78
        %p936 = scmp.lt.s32.totalorder %s52, 1
        %s937 = scalar_select %p936, %s52, 1
        %s938 = scalar_lea.vmem %s1, %s937
        %p939 = pneg %p107
        %p940 = pneg %p104
        %p941 = scmp.lt.s32.totalorder %s52, 1
        %s942 = scalar_select %p941, %s52, 1
        %s943 = smul.addr %s942, 8
        %s944 = scalar_lea.vmem %s2, %s943
        %p945 = pneg %p133
        %p946 = pneg %p130
        %p947 = pneg %p154
        %p948 = pneg %p151
        %p949 = pneg %p175
        %p950 = pneg %p172
        %p951 = pneg %p196
        %p952 = pneg %p193
        %p953 = scmp.lt.s32.totalorder %s53, 1
        %s954 = scalar_select %p953, %s53, 1
        %s955 = scalar_lea.vmem %s6, %s954
        %p956 = pneg %p222
        %p957 = pneg %p219
        %p958 = scmp.lt.s32.totalorder %s53, 1
        %s959 = scalar_select %p958, %s53, 1
        %s960 = scalar_lea.vmem %s7, %s959
        %p961 = pneg %p248
        %p962 = pneg %p245
        %s963 = sand.u32 %s261, 1
        %s964 = scalar_lea.sflag [#allocation4], %s963
        %s965 = sand.u32 %s261, 1
        %s966 = smul.addr %s965, 384
        %s967 = scalar_lea.vmem [#allocation3], %s966
        %p968 = pneg %p274
        %p969 = pneg %p271
        %p970 = scmp.lt.s32.totalorder %s53, 1
        %s971 = scalar_select %p970, %s53, 1
        %s972 = smul.addr %s971, 3
        %s973 = scalar_lea.vmem %s9, %s972
        %p974 = pneg %p300
        %p975 = pneg %p297
        %s976 = sand.u32 %s48, 1
        %s977 = scalar_lea.sflag [#allocation7], %s976
        %s978 = sand.u32 %s313, 1
        %s979 = smul.addr %s978, 128
        %s980 = scalar_lea.vmem [#allocation6], %s979
        %p981 = pneg %p326
        %p982 = pneg %p323
        %p983 = scmp.lt.s32.totalorder %s53, 1
        %s984 = scalar_select %p983, %s53, 1
        %s985 = scalar_lea.vmem %s11, %s984
        %p986 = pneg %p352
        %p987 = pneg %p349
        %p988 = scmp.lt.s32.totalorder %s53, 1
        %s989 = scalar_select %p988, %s53, 1
        %s990 = scalar_lea.vmem %s12, %s989
        %p991 = pneg %p378
        %p992 = pneg %p375
        %p993 = scmp.lt.s32.totalorder %s53, 1
        %s994 = scalar_select %p993, %s53, 1
        %s995 = scalar_lea.vmem %s13, %s994
        %p996 = pneg %p404
        %p997 = pneg %p401
        %s998 = sand.u32 %s48, 1
        %s999 = scalar_lea.sflag [#allocation7], %s998
        %s1000 = sand.u32 %s417, 1
        %s1001 = smul.addr %s1000, 128
        %s1002 = scalar_lea.vmem [#allocation8], %s1001
        %p1003 = pneg %p430
        %p1004 = pneg %p427
        %p1005 = scmp.lt.s32.totalorder %s53, 1
        %s1006 = scalar_select %p1005, %s53, 1
        %s1007 = scalar_lea.vmem %s15, %s1006
        %p1008 = pneg %p456
        %p1009 = pneg %p453
        %s1010 = sand.u32 %s48, 1
        %s1011 = scalar_lea.sflag [#allocation10], %s1010
        %s1012 = sand.u32 %s469, 1
        %s1013 = smul.addr %s1012, 128
        %s1014 = scalar_lea.vmem [#allocation9], %s1013
        %p1015 = pneg %p482
        %p1016 = pneg %p479
        %p1017 = scmp.lt.s32.totalorder %s53, 1
        %s1018 = scalar_select %p1017, %s53, 1
        %s1019 = scalar_lea.vmem %s17, %s1018
        %p1020 = pneg %p508
        %p1021 = pneg %p505
        %p1022 = pneg %p529
        %p1023 = pneg %p526
        %p1024 = pneg %p550
        %p1025 = pneg %p547
        %p1026 = pneg %p571
        %p1027 = pneg %p568
        %p1028 = pneg %p592
        %p1029 = pneg %p589
        %p1030 = pneg %p613
        %p1031 = pneg %p610
        %p1032 = pneg %p634
        %p1033 = pneg %p631
        %p1034 = pneg %p660
        %p1035 = pneg %p657
        %s1036 = sand.u32 %s647, 1
        %s1037 = scalar_lea.sflag [#allocation5], %s1036
        %s1038 = sand.u32 %s647, 1
        %s1039 = scalar_lea.vmem [#allocation14], %s1038
        %p1040 = scmp.lt.s32.totalorder %s52, 1
        %s1041 = scalar_select %p1040, %s52, 1
        %s1042 = smul.addr %s1041, 8
        %s1043 = scalar_lea.vmem %s0, %s1042
        %p1044 = scmp.lt.s32.totalorder %s52, 1
        %s1045 = scalar_select %p1044, %s52, 1
        %s1046 = scalar_lea.vmem %s1, %s1045
        %p1047 = scmp.lt.s32.totalorder %s52, 1
        %s1048 = scalar_select %p1047, %s52, 1
        %s1049 = smul.addr %s1048, 8
        %s1050 = scalar_lea.vmem %s2, %s1049
        %p1051 = scmp.lt.s32.totalorder %s53, 1
        %s1052 = scalar_select %p1051, %s53, 1
        %s1053 = scalar_lea.vmem %s6, %s1052
        %p1054 = scmp.lt.s32.totalorder %s53, 1
        %s1055 = scalar_select %p1054, %s53, 1
        %s1056 = scalar_lea.vmem %s7, %s1055
        %p1057 = scmp.lt.s32.totalorder %s53, 1
        %s1058 = scalar_select %p1057, %s53, 1
        %s1059 = smul.addr %s1058, 3
        %s1060 = scalar_lea.vmem %s9, %s1059
        %p1061 = scmp.lt.s32.totalorder %s53, 1
        %s1062 = scalar_select %p1061, %s53, 1
        %s1063 = scalar_lea.vmem %s11, %s1062
        %p1064 = scmp.lt.s32.totalorder %s53, 1
        %s1065 = scalar_select %p1064, %s53, 1
        %s1066 = scalar_lea.vmem %s12, %s1065
        %p1067 = scmp.lt.s32.totalorder %s53, 1
        %s1068 = scalar_select %p1067, %s53, 1
        %s1069 = scalar_lea.vmem %s13, %s1068
        %p1070 = scmp.lt.s32.totalorder %s53, 1
        %s1071 = scalar_select %p1070, %s53, 1
        %s1072 = scalar_lea.vmem %s15, %s1071
        %p1073 = scmp.lt.s32.totalorder %s53, 1
        %s1074 = scalar_select %p1073, %s53, 1
        %s1075 = scalar_lea.vmem %s17, %s1074
        %p1076 = scmp.eq.s32.totalorder %s53, 0
        // Predicated region
        $region141: #{pallas_classification_forward.1} parent=115 // pred_check
          %p1077 = pneg %p1076
        $region142: #{pallas_classification_forward.1} parent=115 // pred_check_branch
          %1079 = sbr.rel (%p1077) target = $region144
        $region143: #{pallas_classification_forward.1} parent=115 // pred_region
          %v1080 = vld [vmem:[%s1043] sm:$0xff]
          %v1081 = vld [vmem:[%s4] sm:$0xff]
          %v1082 = vld [vmem:[%s4 + $0x8] sm:$0xff]
          %v1083 = vld [vmem:[%s4 + $0x10] sm:$0xff]
          %v1084 = vld [vmem:[%s4 + $0x18] sm:$0xff]
          %v1085 = vld [vmem:[%s4 + $0x20] sm:$0xff]
          %v1086 = vld [vmem:[%s4 + $0x28] sm:$0xff]
          %v1087 = vld [vmem:[%s4 + $0x30] sm:$0xff]
          %v1088 = vld [vmem:[%s4 + $0x38] sm:$0xff]
          %v1089 = vld [vmem:[%s4 + $0x40] sm:$0xff]
          %v1090 = vld [vmem:[%s4 + $0x48] sm:$0xff]
          %v1091 = vld [vmem:[%s4 + $0x50] sm:$0xff]
          %v1092 = vld [vmem:[%s4 + $0x58] sm:$0xff]
          %v1093 = vld [vmem:[%s4 + $0x60] sm:$0xff]
          %v1094 = vld [vmem:[%s4 + $0x68] sm:$0xff]
          %v1095 = vld [vmem:[%s4 + $0x70] sm:$0xff]
          %v1096 = vld [vmem:[%s4 + $0x78] sm:$0xff]
          %v1097 = vld [vmem:[%s5] sm:$0x1]
          %v1099 = vlaneseq
          %v1100 = vshrl.u32 %v1099, 7
          %v1101 = vsub.s32 0, %v1100
          %v1102 = vrot.slane %v1097, %v1101
          %1104 = vmatprep.subr.mxu0 0.0
          %1105 = vmatpush1.msra.mxu0 %v1081
          %1106 = vmatprep.subr.mxu0 0.0
          %1107 = vmatpush1.msra.mxu0 %v1082
          %1108 = vmatprep.subr.mxu0 0.0
          %1109 = vmatpush1.msra.mxu0 %v1083
          %1110 = vmatprep.subr.mxu0 0.0
          %1111 = vmatpush1.msra.mxu0 %v1084
          %1112 = vmatprep.subr.mxu0 0.0
          %1113 = vmatpush1.msra.mxu0 %v1085
          %1114 = vmatprep.subr.mxu0 0.0
          %1115 = vmatpush1.msra.mxu0 %v1086
          %1116 = vmatprep.subr.mxu0 0.0
          %1117 = vmatpush1.msra.mxu0 %v1087
          %1118 = vmatprep.subr.mxu0 0.0
          %1119 = vmatpush1.msra.mxu0 %v1088
          %1120 = vmatprep.subr.mxu0 0.0
          %1121 = vmatpush1.msra.mxu0 %v1089
          %1122 = vmatprep.subr.mxu0 0.0
          %1123 = vmatpush1.msra.mxu0 %v1090
          %1124 = vmatprep.subr.mxu0 0.0
          %1125 = vmatpush1.msra.mxu0 %v1091
          %1126 = vmatprep.subr.mxu0 0.0
          %1127 = vmatpush1.msra.mxu0 %v1092
          %1128 = vmatprep.subr.mxu0 0.0
          %1129 = vmatpush1.msra.mxu0 %v1093
          %1130 = vmatprep.subr.mxu0 0.0
          %1131 = vmatpush1.msra.mxu0 %v1094
          %1132 = vmatprep.subr.mxu0 0.0
          %1133 = vmatpush1.msra.mxu0 %v1095
          %1134 = vmatprep.subr.mxu0 0.0
          %1135 = vmatpush1.msra.mxu0 %v1096
          %1136 = vmatprep.subr.mxu0 0.0
          %1137 = vmatpush1.msra.mxu0 0.0
          %1138 = vmatprep.subr.mxu0 0.0
          %1139 = vmatpush1.msra.mxu0 0.0
          %1140 = vmatprep.subr.mxu0 0.0
          %1141 = vmatpush1.msra.mxu0 0.0
          %1142 = vmatprep.subr.mxu0 0.0
          %1143 = vmatpush1.msra.mxu0 0.0
          %1144 = vmatprep.subr.mxu0 0.0
          %1145 = vmatpush1.msra.mxu0 0.0
          %1146 = vmatprep.subr.mxu0 0.0
          %1147 = vmatpush1.msra.mxu0 0.0
          %1148 = vmatprep.subr.mxu0 0.0
          %1149 = vmatpush1.msra.mxu0 0.0
          %1150 = vmatprep.subr.mxu0 0.0
          %1151 = vmatpush1.msra.mxu0 0.0
          %1152 = vmatprep.subr.mxu0 0.0
          %1153 = vmatpush1.msra.mxu0 0.0
          %1154 = vmatprep.subr.mxu0 0.0
          %1155 = vmatpush1.msra.mxu0 0.0
          %1156 = vmatprep.subr.mxu0 0.0
          %1157 = vmatpush1.msra.mxu0 0.0
          %1158 = vmatprep.subr.mxu0 0.0
          %1159 = vmatpush1.msra.mxu0 0.0
          %1160 = vmatprep.subr.mxu0 0.0
          %1161 = vmatpush1.msra.mxu0 0.0
          %1162 = vmatprep.subr.mxu0 0.0
          %1163 = vmatpush1.msra.mxu0 0.0
          %1164 = vmatprep.subr.mxu0 0.0
          %1165 = vmatpush1.msra.mxu0 0.0
          %1166 = vmatprep.subr.mxu0 0.0
          %1167 = vmatpush1.msra.mxu0 0.0
          %1168 = vmatprep.mubr.f32.mxu0 0.0
          %1169 = vmatmul.mubr.f32.gmra.mrb[0].mxu0 %v1080
          %v1170 = vpop.f32.mrb[0].mxu0
          %v1171 = vadd.f32 %v1102, %v1170
          %v1172 = vpop.f32.mrb[0].mxu0
          %1173 = vdwg.mxu0
          %v1174 = vld [vmem:[%s3] sm:$0xff]
          %v1175 = vadd.f32 %v1171, %v1174
          %1176 = vst [vmem:[#allocation2] sm:$0xff] %v1175
        $region144: #{pallas_classification_forward.1} parent=115 // pred_fallthru
          _
        %v1177 = vld [vmem:[#allocation2] sm:$0xff]
        %v1178 = vld [vmem:[%s1053] sm:$0x1]
        %v1179 = vld [vmem:[%s1056] sm:$0x1]
        %1180 = vadd.xlane.f32.xlu0 %v1177
        %v1181 = vpop.xlane.xlu0 %1180
        %v1182 = vmul.f32 %v1181, 0.03125
        %v1183 = vmul.f32 %v1177, %v1177
        %1184 = vadd.xlane.f32.xlu0 %v1183
        %v1185 = vpop.xlane.xlu0 %1184
        %v1186 = vmul.f32 %v1185, 0.03125
        %v1187 = vmul.f32 %v1182, %v1182
        %v1188 = vsub.f32 %v1186, %v1187
        %v1189 = vmax.f32 %v1188, 0.0
        %v1190 = vsub.f32 %v1177, %v1182
        %v1191 = vadd.f32 %v1189, 1e-06
        %v1192 = vrsqrt.pop %v1191
        %v1193 = vmul.f32 %v1190, %v1192
        %v1195 = vlaneseq
        %v1196 = vshrl.u32 %v1195, 7
        %v1197 = vsub.s32 0, %v1196
        %v1198 = vrot.slane %v1178, %v1197
        %v1200 = vmul.f32 %v1193, %v1198
        %v1202 = vlaneseq
        %v1203 = vshrl.u32 %v1202, 7
        %v1204 = vsub.s32 0, %v1203
        %v1205 = vrot.slane %v1179, %v1204
        %v1207 = vadd.f32 %v1200, %v1205
        %v1208 = vld [vmem:[%s890] sm:$0xff]
        %v1209 = vld [vmem:[%s890 + $0x8] sm:$0xff]
        %v1210 = vld [vmem:[%s890 + $0x10] sm:$0xff]
        %v1211 = vld [vmem:[%s890 + $0x18] sm:$0xff]
        %v1212 = vld [vmem:[%s890 + $0x20] sm:$0xff]
        %v1213 = vld [vmem:[%s890 + $0x28] sm:$0xff]
        %v1214 = vld [vmem:[%s890 + $0x30] sm:$0xff]
        %v1215 = vld [vmem:[%s890 + $0x38] sm:$0xff]
        %v1216 = vld [vmem:[%s890 + $0x40] sm:$0xff]
        %v1217 = vld [vmem:[%s890 + $0x48] sm:$0xff]
        %v1218 = vld [vmem:[%s890 + $0x50] sm:$0xff]
        %v1219 = vld [vmem:[%s890 + $0x58] sm:$0xff]
        %v1220 = vld [vmem:[%s890 + $0x60] sm:$0xff]
        %v1221 = vld [vmem:[%s890 + $0x68] sm:$0xff]
        %v1222 = vld [vmem:[%s890 + $0x70] sm:$0xff]
        %v1223 = vld [vmem:[%s890 + $0x78] sm:$0xff]
        %v1224 = vld [vmem:[%s890 + $0x80] sm:$0xff]
        %v1225 = vld [vmem:[%s890 + $0x88] sm:$0xff]
        %v1226 = vld [vmem:[%s890 + $0x90] sm:$0xff]
        %v1227 = vld [vmem:[%s890 + $0x98] sm:$0xff]
        %v1228 = vld [vmem:[%s890 + $0xa0] sm:$0xff]
        %v1229 = vld [vmem:[%s890 + $0xa8] sm:$0xff]
        %v1230 = vld [vmem:[%s890 + $0xb0] sm:$0xff]
        %v1231 = vld [vmem:[%s890 + $0xb8] sm:$0xff]
        %v1232 = vld [vmem:[%s890 + $0xc0] sm:$0xff]
        %v1233 = vld [vmem:[%s890 + $0xc8] sm:$0xff]
        %v1234 = vld [vmem:[%s890 + $0xd0] sm:$0xff]
        %v1235 = vld [vmem:[%s890 + $0xd8] sm:$0xff]
        %v1236 = vld [vmem:[%s890 + $0xe0] sm:$0xff]
        %v1237 = vld [vmem:[%s890 + $0xe8] sm:$0xff]
        %v1238 = vld [vmem:[%s890 + $0xf0] sm:$0xff]
        %v1239 = vld [vmem:[%s890 + $0xf8] sm:$0xff]
        %v1240 = vld [vmem:[%s890 + $0x100] sm:$0xff]
        %v1241 = vld [vmem:[%s890 + $0x108] sm:$0xff]
        %v1242 = vld [vmem:[%s890 + $0x110] sm:$0xff]
        %v1243 = vld [vmem:[%s890 + $0x118] sm:$0xff]
        %v1244 = vld [vmem:[%s890 + $0x120] sm:$0xff]
        %v1245 = vld [vmem:[%s890 + $0x128] sm:$0xff]
        %v1246 = vld [vmem:[%s890 + $0x130] sm:$0xff]
        %v1247 = vld [vmem:[%s890 + $0x138] sm:$0xff]
        %v1248 = vld [vmem:[%s890 + $0x140] sm:$0xff]
        %v1249 = vld [vmem:[%s890 + $0x148] sm:$0xff]
        %v1250 = vld [vmem:[%s890 + $0x150] sm:$0xff]
        %v1251 = vld [vmem:[%s890 + $0x158] sm:$0xff]
        %v1252 = vld [vmem:[%s890 + $0x160] sm:$0xff]
        %v1253 = vld [vmem:[%s890 + $0x168] sm:$0xff]
        %v1254 = vld [vmem:[%s890 + $0x170] sm:$0xff]
        %v1255 = vld [vmem:[%s890 + $0x178] sm:$0xff]
        %v1256 = vld [vmem:[%s1060] sm:$0x7]
        %v1258 = vlaneseq
        %v1259 = vshrl.u32 %v1258, 7
        %v1260 = vsub.s32 0, %v1259
        %v1261 = vrot.slane %v1256, %v1260
        %v1262 = vlaneseq
        %v1263 = vshrl.u32 %v1262, 7
        %v1264 = vsub.s32 1, %v1263
        %v1265 = vrot.slane %v1256, %v1264
        %v1266 = vlaneseq
        %v1267 = vshrl.u32 %v1266, 7
        %v1268 = vsub.s32 2, %v1267
        %v1269 = vrot.slane %v1256, %v1268
        %1273 = vmatprep.subr.mxu0 %v1209
        %1274 = vmatpush1.msra.mxu0 %v1208
        %1275 = vmatprep.subr.mxu0 %v1212
        %1276 = vmatpush1.msra.mxu0 %v1211
        %1277 = vmatprep.subr.mxu0 %v1215
        %1278 = vmatpush1.msra.mxu0 %v1214
        %1279 = vmatprep.subr.mxu0 %v1218
        %1280 = vmatpush1.msra.mxu0 %v1217
        %1281 = vmatprep.subr.mxu0 %v1221
        %1282 = vmatpush1.msra.mxu0 %v1220
        %1283 = vmatprep.subr.mxu0 %v1224
        %1284 = vmatpush1.msra.mxu0 %v1223
        %1285 = vmatprep.subr.mxu0 %v1227
        %1286 = vmatpush1.msra.mxu0 %v1226
        %1287 = vmatprep.subr.mxu0 %v1230
        %1288 = vmatpush1.msra.mxu0 %v1229
        %1289 = vmatprep.subr.mxu0 %v1233
        %1290 = vmatpush1.msra.mxu0 %v1232
        %1291 = vmatprep.subr.mxu0 %v1236
        %1292 = vmatpush1.msra.mxu0 %v1235
        %1293 = vmatprep.subr.mxu0 %v1239
        %1294 = vmatpush1.msra.mxu0 %v1238
        %1295 = vmatprep.subr.mxu0 %v1242
        %1296 = vmatpush1.msra.mxu0 %v1241
        %1297 = vmatprep.subr.mxu0 %v1245
        %1298 = vmatpush1.msra.mxu0 %v1244
        %1299 = vmatprep.subr.mxu0 %v1248
        %1300 = vmatpush1.msra.mxu0 %v1247
        %1301 = vmatprep.subr.mxu0 %v1251
        %1302 = vmatpush1.msra.mxu0 %v1250
        %1303 = vmatprep.subr.mxu0 %v1254
        %1304 = vmatpush1.msra.mxu0 %v1253
        %1305 = vmatprep.subr.mxu0 0.0
        %1306 = vmatpush1.msra.mxu0 0.0
        %1307 = vmatprep.subr.mxu0 0.0
        %1308 = vmatpush1.msra.mxu0 0.0
        %1309 = vmatprep.subr.mxu0 0.0
        %1310 = vmatpush1.msra.mxu0 0.0
        %1311 = vmatprep.subr.mxu0 0.0
        %1312 = vmatpush1.msra.mxu0 0.0
        %1313 = vmatprep.subr.mxu0 0.0
        %1314 = vmatpush1.msra.mxu0 0.0
        %1315 = vmatprep.subr.mxu0 0.0
        %1316 = vmatpush1.msra.mxu0 0.0
        %1317 = vmatprep.subr.mxu0 0.0
        %1318 = vmatpush1.msra.mxu0 0.0
        %1319 = vmatprep.subr.mxu0 0.0
        %1320 = vmatpush1.msra.mxu0 0.0
        %1321 = vmatprep.subr.mxu0 0.0
        %1322 = vmatpush1.msra.mxu0 0.0
        %1323 = vmatprep.subr.mxu0 0.0
        %1324 = vmatpush1.msra.mxu0 0.0
        %1325 = vmatprep.subr.mxu0 0.0
        %1326 = vmatpush1.msra.mxu0 0.0
        %1327 = vmatprep.subr.mxu0 0.0
        %1328 = vmatpush1.msra.mxu0 0.0
        %1329 = vmatprep.subr.mxu0 0.0
        %1330 = vmatpush1.msra.mxu0 0.0
        %1331 = vmatprep.subr.mxu0 0.0
        %1332 = vmatpush1.msra.mxu0 0.0
        %1333 = vmatprep.subr.mxu0 0.0
        %1334 = vmatpush1.msra.mxu0 0.0
        %1335 = vmatprep.subr.mxu0 0.0
        %1336 = vmatpush1.msra.mxu0 0.0
        %1337 = vmatprep.mubr.f32.mxu0 0.0
        %1338 = vmatmul.mubr.f32.gmra.mrb[0].mxu0 %v1207
        %v1339 = vpop.f32.mrb[0].mxu0
        %v1340 = vadd.f32 %v1261, %v1339
        %v1341 = vpop.f32.mrb[0].mxu0
        %v1342 = vadd.f32 %v1265, %v1341
        %1343 = vdwg.mxu0
        %1344 = vmatprep.subr.mxu0 0.0
        %1345 = vmatpush1.msra.mxu0 %v1210
        %1346 = vmatprep.subr.mxu0 0.0
        %1347 = vmatpush1.msra.mxu0 %v1213
        %1348 = vmatprep.subr.mxu0 0.0
        %1349 = vmatpush1.msra.mxu0 %v1216
        %1350 = vmatprep.subr.mxu0 0.0
        %1351 = vmatpush1.msra.mxu0 %v1219
        %1352 = vmatprep.subr.mxu0 0.0
        %1353 = vmatpush1.msra.mxu0 %v1222
        %1354 = vmatprep.subr.mxu0 0.0
        %1355 = vmatpush1.msra.mxu0 %v1225
        %1356 = vmatprep.subr.mxu0 0.0
        %1357 = vmatpush1.msra.mxu0 %v1228
        %1358 = vmatprep.subr.mxu0 0.0
        %1359 = vmatpush1.msra.mxu0 %v1231
        %1360 = vmatprep.subr.mxu0 0.0
        %1361 = vmatpush1.msra.mxu0 %v1234
        %1362 = vmatprep.subr.mxu0 0.0
        %1363 = vmatpush1.msra.mxu0 %v1237
        %1364 = vmatprep.subr.mxu0 0.0
        %1365 = vmatpush1.msra.mxu0 %v1240
        %1366 = vmatprep.subr.mxu0 0.0
        %1367 = vmatpush1.msra.mxu0 %v1243
        %1368 = vmatprep.subr.mxu0 0.0
        %1369 = vmatpush1.msra.mxu0 %v1246
        %1370 = vmatprep.subr.mxu0 0.0
        %1371 = vmatpush1.msra.mxu0 %v1249
        %1372 = vmatprep.subr.mxu0 0.0
        %1373 = vmatpush1.msra.mxu0 %v1252
        %1374 = vmatprep.subr.mxu0 0.0
        %1375 = vmatpush1.msra.mxu0 %v1255
        %1376 = vmatprep.subr.mxu0 0.0
        %1377 = vmatpush1.msra.mxu0 0.0
        %1378 = vmatprep.subr.mxu0 0.0
        %1379 = vmatpush1.msra.mxu0 0.0
        %1380 = vmatprep.subr.mxu0 0.0
        %1381 = vmatpush1.msra.mxu0 0.0
        %1382 = vmatprep.subr.mxu0 0.0
        %1383 = vmatpush1.msra.mxu0 0.0
        %1384 = vmatprep.subr.mxu0 0.0
        %1385 = vmatpush1.msra.mxu0 0.0
        %1386 = vmatprep.subr.mxu0 0.0
        %1387 = vmatpush1.msra.mxu0 0.0
        %1388 = vmatprep.subr.mxu0 0.0
        %1389 = vmatpush1.msra.mxu0 0.0
        %1390 = vmatprep.subr.mxu0 0.0
        %1391 = vmatpush1.msra.mxu0 0.0
        %1392 = vmatprep.subr.mxu0 0.0
        %1393 = vmatpush1.msra.mxu0 0.0
        %1394 = vmatprep.subr.mxu0 0.0
        %1395 = vmatpush1.msra.mxu0 0.0
        %1396 = vmatprep.subr.mxu0 0.0
        %1397 = vmatpush1.msra.mxu0 0.0
        %1398 = vmatprep.subr.mxu0 0.0
        %1399 = vmatpush1.msra.mxu0 0.0
        %1400 = vmatprep.subr.mxu0 0.0
        %1401 = vmatpush1.msra.mxu0 0.0
        %1402 = vmatprep.subr.mxu0 0.0
        %1403 = vmatpush1.msra.mxu0 0.0
        %1404 = vmatprep.subr.mxu0 0.0
        %1405 = vmatpush1.msra.mxu0 0.0
        %1406 = vmatprep.subr.mxu0 0.0
        %1407 = vmatpush1.msra.mxu0 0.0
        %1408 = vmatprep.mubr.f32.mxu0 0.0
        %1409 = vmatmul.mubr.f32.gmra.mrb[0].mxu0 %v1207
        %v1410 = vpop.f32.mrb[0].mxu0
        %v1411 = vadd.f32 %v1269, %v1410
        %v1412 = vpop.f32.mrb[0].mxu0
        %1413 = vdwg.mxu0
        %v1414 = vld [vmem:[%s1046] sm:$0x1]
        %v1416 = vlaneseq
        %v1417 = vshrl.u32 %v1416, 7
        %v1418 = vsub.s32 0, %v1417
        %v1419 = vrot.slane %v1414, %v1418
        %vm1421 = vcmask 64512
        %v1423 = vsel %vm1421, %v1340, 0
        %v1426 = vsel %vm1421, %v1342, 0
        %1428 = vmatprep.subr.mxu0 0.0
        %1429 = vmatpush1.xpose.msra.mxu0 %v1426
        %1430 = vmatprep.subr.mxu0 0.0
        %1431 = vmatpush1.xpose.msra.mxu0 0.0
        %1432 = vmatprep.subr.mxu0 0.0
        %1433 = vmatpush1.xpose.msra.mxu0 0.0
        %1434 = vmatprep.subr.mxu0 0.0
        %1435 = vmatpush1.xpose.msra.mxu0 0.0
        %1436 = vmatprep.subr.mxu0 0.0
        %1437 = vmatpush1.xpose.msra.mxu0 0.0
        %1438 = vmatprep.subr.mxu0 0.0
        %1439 = vmatpush1.xpose.msra.mxu0 0.0
        %1440 = vmatprep.subr.mxu0 0.0
        %1441 = vmatpush1.xpose.msra.mxu0 0.0
        %1442 = vmatprep.subr.mxu0 0.0
        %1443 = vmatpush1.xpose.msra.mxu0 0.0
        %1444 = vmatprep.subr.mxu0 0.0
        %1445 = vmatpush1.xpose.msra.mxu0 0.0
        %1446 = vmatprep.subr.mxu0 0.0
        %1447 = vmatpush1.xpose.msra.mxu0 0.0
        %1448 = vmatprep.subr.mxu0 0.0
        %1449 = vmatpush1.xpose.msra.mxu0 0.0
        %1450 = vmatprep.subr.mxu0 0.0
        %1451 = vmatpush1.xpose.msra.mxu0 0.0
        %1452 = vmatprep.subr.mxu0 0.0
        %1453 = vmatpush1.xpose.msra.mxu0 0.0
        %1454 = vmatprep.subr.mxu0 0.0
        %1455 = vmatpush1.xpose.msra.mxu0 0.0
        %1456 = vmatprep.subr.mxu0 0.0
        %1457 = vmatpush1.xpose.msra.mxu0 0.0
        %1458 = vmatprep.subr.mxu0 0.0
        %1459 = vmatpush1.xpose.msra.mxu0 0.0
        %1460 = vmatprep.subr.mxu0 0.0
        %1461 = vmatpush1.xpose.msra.mxu0 0.0
        %1462 = vmatprep.subr.mxu0 0.0
        %1463 = vmatpush1.xpose.msra.mxu0 0.0
        %1464 = vmatprep.subr.mxu0 0.0
        %1465 = vmatpush1.xpose.msra.mxu0 0.0
        %1466 = vmatprep.subr.mxu0 0.0
        %1467 = vmatpush1.xpose.msra.mxu0 0.0
        %1468 = vmatprep.subr.mxu0 0.0
        %1469 = vmatpush1.xpose.msra.mxu0 0.0
        %1470 = vmatprep.subr.mxu0 0.0
        %1471 = vmatpush1.xpose.msra.mxu0 0.0
        %1472 = vmatprep.subr.mxu0 0.0
        %1473 = vmatpush1.xpose.msra.mxu0 0.0
        %1474 = vmatprep.subr.mxu0 0.0
        %1475 = vmatpush1.xpose.msra.mxu0 0.0
        %1476 = vmatprep.subr.mxu0 0.0
        %1477 = vmatpush1.xpose.msra.mxu0 0.0
        %1478 = vmatprep.subr.mxu0 0.0
        %1479 = vmatpush1.xpose.msra.mxu0 0.0
        %1480 = vmatprep.subr.mxu0 0.0
        %1481 = vmatpush1.xpose.msra.mxu0 0.0
        %1482 = vmatprep.subr.mxu0 0.0
        %1483 = vmatpush1.xpose.msra.mxu0 0.0
        %1484 = vmatprep.subr.mxu0 0.0
        %1485 = vmatpush1.xpose.msra.mxu0 0.0
        %1486 = vmatprep.subr.mxu0 0.0
        %1487 = vmatpush1.xpose.msra.mxu0 0.0
        %1488 = vmatprep.subr.mxu0 0.0
        %1489 = vmatpush1.xpose.msra.mxu0 0.0
        %1490 = vmatprep.subr.mxu0 0.0
        %1491 = vmatpush1.xpose.msra.mxu0 0.0
        %1492 = vmatprep.mubr.f32.mxu0 0.0
        %1493 = vmatmul.mubr.f32.gmra.mrb[0].mxu0 %v1423
        %v1494 = vpop.f32.mrb[0].mxu0
        %v1495 = vadd.f32 %v1419, %v1494
        %v1496 = vpop.f32.mrb[0].mxu0
        %1497 = vdwg.mxu0
        %v1498 = vsel %vm1421, %v1495, -inf
        %1499 = vmax.xlane.f32.xlu0 %v1498
        %v1500 = vpop.xlane.xlu0 %1499
        %v1501 = vsub.f32 %v1495, %v1500
        %v1502 = vmul.f32 %v1501, 1.442695
        %v1503 = vpow.pop %v1502
        %v1504 = vsel %vm1421, %v1503, 0.0
        %1505 = vadd.xlane.f32.xlu0 %v1504
        %v1506 = vpop.xlane.xlu0 %1505
        %v1507 = vrcp.pop %v1506
        %v1508 = vmul.f32 %v1503, %v1507
        %v1510 = vsel %vm1421, %v1508, 0
        %1512 = vmatprep.subr.mxu0 0.0
        %1513 = vmatpush1.msra.mxu0 %v1411
        %1514 = vmatprep.subr.mxu0 0.0
        %1515 = vmatpush1.msra.mxu0 0.0
        %1516 = vmatprep.subr.mxu0 0.0
        %1517 = vmatpush1.msra.mxu0 0.0
        %1518 = vmatprep.subr.mxu0 0.0
        %1519 = vmatpush1.msra.mxu0 0.0
        %1520 = vmatprep.subr.mxu0 0.0
        %1521 = vmatpush1.msra.mxu0 0.0
        %1522 = vmatprep.subr.mxu0 0.0
        %1523 = vmatpush1.msra.mxu0 0.0
        %1524 = vmatprep.subr.mxu0 0.0
        %1525 = vmatpush1.msra.mxu0 0.0
        %1526 = vmatprep.subr.mxu0 0.0
        %1527 = vmatpush1.msra.mxu0 0.0
        %1528 = vmatprep.subr.mxu0 0.0
        %1529 = vmatpush1.msra.mxu0 0.0
        %1530 = vmatprep.subr.mxu0 0.0
        %1531 = vmatpush1.msra.mxu0 0.0
        %1532 = vmatprep.subr.mxu0 0.0
        %1533 = vmatpush1.msra.mxu0 0.0
        %1534 = vmatprep.subr.mxu0 0.0
        %1535 = vmatpush1.msra.mxu0 0.0
        %1536 = vmatprep.subr.mxu0 0.0
        %1537 = vmatpush1.msra.mxu0 0.0
        %1538 = vmatprep.subr.mxu0 0.0
        %1539 = vmatpush1.msra.mxu0 0.0
        %1540 = vmatprep.subr.mxu0 0.0
        %1541 = vmatpush1.msra.mxu0 0.0
        %1542 = vmatprep.subr.mxu0 0.0
        %1543 = vmatpush1.msra.mxu0 0.0
        %1544 = vmatprep.subr.mxu0 0.0
        %1545 = vmatpush1.msra.mxu0 0.0
        %1546 = vmatprep.subr.mxu0 0.0
        %1547 = vmatpush1.msra.mxu0 0.0
        %1548 = vmatprep.subr.mxu0 0.0
        %1549 = vmatpush1.msra.mxu0 0.0
        %1550 = vmatprep.subr.mxu0 0.0
        %1551 = vmatpush1.msra.mxu0 0.0
        %1552 = vmatprep.subr.mxu0 0.0
        %1553 = vmatpush1.msra.mxu0 0.0
        %1554 = vmatprep.subr.mxu0 0.0
        %1555 = vmatpush1.msra.mxu0 0.0
        %1556 = vmatprep.subr.mxu0 0.0
        %1557 = vmatpush1.msra.mxu0 0.0
        %1558 = vmatprep.subr.mxu0 0.0
        %1559 = vmatpush1.msra.mxu0 0.0
        %1560 = vmatprep.subr.mxu0 0.0
        %1561 = vmatpush1.msra.mxu0 0.0
        %1562 = vmatprep.subr.mxu0 0.0
        %1563 = vmatpush1.msra.mxu0 0.0
        %1564 = vmatprep.subr.mxu0 0.0
        %1565 = vmatpush1.msra.mxu0 0.0
        %1566 = vmatprep.subr.mxu0 0.0
        %1567 = vmatpush1.msra.mxu0 0.0
        %1568 = vmatprep.subr.mxu0 0.0
        %1569 = vmatpush1.msra.mxu0 0.0
        %1570 = vmatprep.subr.mxu0 0.0
        %1571 = vmatpush1.msra.mxu0 0.0
        %1572 = vmatprep.subr.mxu0 0.0
        %1573 = vmatpush1.msra.mxu0 0.0
        %1574 = vmatprep.subr.mxu0 0.0
        %1575 = vmatpush1.msra.mxu0 0.0
        %1576 = vmatprep.mubr.f32.mxu0 0.0
        %1577 = vmatmul.mubr.f32.gmra.mrb[0].mxu0 %v1510
        %v1578 = vpop.f32.mrb[0].mxu0
        %v1579 = vadd.f32 0.0, %v1578
        %v1580 = vpop.f32.mrb[0].mxu0
        %1581 = vdwg.mxu0
        %1582 = vrot.lane.b32.xlu0 %v1340, 120
        %v1583 = vpop.permute.xlu0 %1582
        %1584 = vrot.lane.b32.xlu0 %v1342, 120
        %v1585 = vpop.permute.xlu0 %1584
        %v1586 = vsel %vm1421, %v1583, 0
        %v1588 = vsel %vm1421, %v1585, 0
        %1590 = vmatprep.subr.mxu0 0.0
        %1591 = vmatpush1.xpose.msra.mxu0 %v1588
        %1592 = vmatprep.subr.mxu0 0.0
        %1593 = vmatpush1.xpose.msra.mxu0 0.0
        %1594 = vmatprep.subr.mxu0 0.0
        %1595 = vmatpush1.xpose.msra.mxu0 0.0
        %1596 = vmatprep.subr.mxu0 0.0
        %1597 = vmatpush1.xpose.msra.mxu0 0.0
        %1598 = vmatprep.subr.mxu0 0.0
        %1599 = vmatpush1.xpose.msra.mxu0 0.0
        %1600 = vmatprep.subr.mxu0 0.0
        %1601 = vmatpush1.xpose.msra.mxu0 0.0
        %1602 = vmatprep.subr.mxu0 0.0
        %1603 = vmatpush1.xpose.msra.mxu0 0.0
        %1604 = vmatprep.subr.mxu0 0.0
        %1605 = vmatpush1.xpose.msra.mxu0 0.0
        %1606 = vmatprep.subr.mxu0 0.0
        %1607 = vmatpush1.xpose.msra.mxu0 0.0
        %1608 = vmatprep.subr.mxu0 0.0
        %1609 = vmatpush1.xpose.msra.mxu0 0.0
        %1610 = vmatprep.subr.mxu0 0.0
        %1611 = vmatpush1.xpose.msra.mxu0 0.0
        %1612 = vmatprep.subr.mxu0 0.0
        %1613 = vmatpush1.xpose.msra.mxu0 0.0
        %1614 = vmatprep.subr.mxu0 0.0
        %1615 = vmatpush1.xpose.msra.mxu0 0.0
        %1616 = vmatprep.subr.mxu0 0.0
        %1617 = vmatpush1.xpose.msra.mxu0 0.0
        %1618 = vmatprep.subr.mxu0 0.0
        %1619 = vmatpush1.xpose.msra.mxu0 0.0
        %1620 = vmatprep.subr.mxu0 0.0
        %1621 = vmatpush1.xpose.msra.mxu0 0.0
        %1622 = vmatprep.subr.mxu0 0.0
        %1623 = vmatpush1.xpose.msra.mxu0 0.0
        %1624 = vmatprep.subr.mxu0 0.0
        %1625 = vmatpush1.xpose.msra.mxu0 0.0
        %1626 = vmatprep.subr.mxu0 0.0
        %1627 = vmatpush1.xpose.msra.mxu0 0.0
        %1628 = vmatprep.subr.mxu0 0.0
        %1629 = vmatpush1.xpose.msra.mxu0 0.0
        %1630 = vmatprep.subr.mxu0 0.0
        %1631 = vmatpush1.xpose.msra.mxu0 0.0
        %1632 = vmatprep.subr.mxu0 0.0
        %1633 = vmatpush1.xpose.msra.mxu0 0.0
        %1634 = vmatprep.subr.mxu0 0.0
        %1635 = vmatpush1.xpose.msra.mxu0 0.0
        %1636 = vmatprep.subr.mxu0 0.0
        %1637 = vmatpush1.xpose.msra.mxu0 0.0
        %1638 = vmatprep.subr.mxu0 0.0
        %1639 = vmatpush1.xpose.msra.mxu0 0.0
        %1640 = vmatprep.subr.mxu0 0.0
        %1641 = vmatpush1.xpose.msra.mxu0 0.0
        %1642 = vmatprep.subr.mxu0 0.0
        %1643 = vmatpush1.xpose.msra.mxu0 0.0
        %1644 = vmatprep.subr.mxu0 0.0
        %1645 = vmatpush1.xpose.msra.mxu0 0.0
        %1646 = vmatprep.subr.mxu0 0.0
        %1647 = vmatpush1.xpose.msra.mxu0 0.0
        %1648 = vmatprep.subr.mxu0 0.0
        %1649 = vmatpush1.xpose.msra.mxu0 0.0
        %1650 = vmatprep.subr.mxu0 0.0
        %1651 = vmatpush1.xpose.msra.mxu0 0.0
        %1652 = vmatprep.subr.mxu0 0.0
        %1653 = vmatpush1.xpose.msra.mxu0 0.0
        %1654 = vmatprep.mubr.f32.mxu0 0.0
        %1655 = vmatmul.mubr.f32.gmra.mrb[0].mxu0 %v1586
        %v1656 = vpop.f32.mrb[0].mxu0
        %v1657 = vadd.f32 %v1419, %v1656
        %v1658 = vpop.f32.mrb[0].mxu0
        %1659 = vdwg.mxu0
        %v1660 = vsel %vm1421, %v1657, -inf
        %1661 = vmax.xlane.f32.xlu0 %v1660
        %v1662 = vpop.xlane.xlu0 %1661
        %v1663 = vsub.f32 %v1657, %v1662
        %v1664 = vmul.f32 %v1663, 1.442695
        %v1665 = vpow.pop %v1664
        %v1666 = vsel %vm1421, %v1665, 0.0
        %1667 = vadd.xlane.f32.xlu0 %v1666
        %v1668 = vpop.xlane.xlu0 %1667
        %v1669 = vrcp.pop %v1668
        %v1670 = vmul.f32 %v1665, %v1669
        %1672 = vrot.lane.b32.xlu0 %v1411, 120
        %v1673 = vpop.permute.xlu0 %1672
        %v1676 = vsel %vm1421, %v1670, 0
        %1678 = vmatprep.subr.mxu0 0.0
        %1679 = vmatpush1.msra.mxu0 %v1673
        %1680 = vmatprep.subr.mxu0 0.0
        %1681 = vmatpush1.msra.mxu0 0.0
        %1682 = vmatprep.subr.mxu0 0.0
        %1683 = vmatpush1.msra.mxu0 0.0
        %1684 = vmatprep.subr.mxu0 0.0
        %1685 = vmatpush1.msra.mxu0 0.0
        %1686 = vmatprep.subr.mxu0 0.0
        %1687 = vmatpush1.msra.mxu0 0.0
        %1688 = vmatprep.subr.mxu0 0.0
        %1689 = vmatpush1.msra.mxu0 0.0
        %1690 = vmatprep.subr.mxu0 0.0
        %1691 = vmatpush1.msra.mxu0 0.0
        %1692 = vmatprep.subr.mxu0 0.0
        %1693 = vmatpush1.msra.mxu0 0.0
        %1694 = vmatprep.subr.mxu0 0.0
        %1695 = vmatpush1.msra.mxu0 0.0
        %1696 = vmatprep.subr.mxu0 0.0
        %1697 = vmatpush1.msra.mxu0 0.0
        %1698 = vmatprep.subr.mxu0 0.0
        %1699 = vmatpush1.msra.mxu0 0.0
        %1700 = vmatprep.subr.mxu0 0.0
        %1701 = vmatpush1.msra.mxu0 0.0
        %1702 = vmatprep.subr.mxu0 0.0
        %1703 = vmatpush1.msra.mxu0 0.0
        %1704 = vmatprep.subr.mxu0 0.0
        %1705 = vmatpush1.msra.mxu0 0.0
        %1706 = vmatprep.subr.mxu0 0.0
        %1707 = vmatpush1.msra.mxu0 0.0
        %1708 = vmatprep.subr.mxu0 0.0
        %1709 = vmatpush1.msra.mxu0 0.0
        %1710 = vmatprep.subr.mxu0 0.0
        %1711 = vmatpush1.msra.mxu0 0.0
        %1712 = vmatprep.subr.mxu0 0.0
        %1713 = vmatpush1.msra.mxu0 0.0
        %1714 = vmatprep.subr.mxu0 0.0
        %1715 = vmatpush1.msra.mxu0 0.0
        %1716 = vmatprep.subr.mxu0 0.0
        %1717 = vmatpush1.msra.mxu0 0.0
        %1718 = vmatprep.subr.mxu0 0.0
        %1719 = vmatpush1.msra.mxu0 0.0
        %1720 = vmatprep.subr.mxu0 0.0
        %1721 = vmatpush1.msra.mxu0 0.0
        %1722 = vmatprep.subr.mxu0 0.0
        %1723 = vmatpush1.msra.mxu0 0.0
        %1724 = vmatprep.subr.mxu0 0.0
        %1725 = vmatpush1.msra.mxu0 0.0
        %1726 = vmatprep.subr.mxu0 0.0
        %1727 = vmatpush1.msra.mxu0 0.0
        %1728 = vmatprep.subr.mxu0 0.0
        %1729 = vmatpush1.msra.mxu0 0.0
        %1730 = vmatprep.subr.mxu0 0.0
        %1731 = vmatpush1.msra.mxu0 0.0
        %1732 = vmatprep.subr.mxu0 0.0
        %1733 = vmatpush1.msra.mxu0 0.0
        %1734 = vmatprep.subr.mxu0 0.0
        %1735 = vmatpush1.msra.mxu0 0.0
        %1736 = vmatprep.subr.mxu0 0.0
        %1737 = vmatpush1.msra.mxu0 0.0
        %1738 = vmatprep.subr.mxu0 0.0
        %1739 = vmatpush1.msra.mxu0 0.0
        %1740 = vmatprep.subr.mxu0 0.0
        %1741 = vmatpush1.msra.mxu0 0.0
        %1742 = vmatprep.mubr.f32.mxu0 0.0
        %1743 = vmatmul.mubr.f32.gmra.mrb[0].mxu0 %v1676
        %v1744 = vpop.f32.mrb[0].mxu0
        %v1745 = vadd.f32 0.0, %v1744
        %v1746 = vpop.f32.mrb[0].mxu0
        %1747 = vdwg.mxu0
        %1748 = vrot.lane.b32.xlu0 %v1340, 112
        %v1749 = vpop.permute.xlu0 %1748
        %1750 = vrot.lane.b32.xlu0 %v1342, 112
        %v1751 = vpop.permute.xlu0 %1750
        %v1752 = vsel %vm1421, %v1749, 0
        %v1754 = vsel %vm1421, %v1751, 0
        %1756 = vmatprep.subr.mxu0 0.0
        %1757 = vmatpush1.xpose.msra.mxu0 %v1754
        %1758 = vmatprep.subr.mxu0 0.0
        %1759 = vmatpush1.xpose.msra.mxu0 0.0
        %1760 = vmatprep.subr.mxu0 0.0
        %1761 = vmatpush1.xpose.msra.mxu0 0.0
        %1762 = vmatprep.subr.mxu0 0.0
        %1763 = vmatpush1.xpose.msra.mxu0 0.0
        %1764 = vmatprep.subr.mxu0 0.0
        %1765 = vmatpush1.xpose.msra.mxu0 0.0
        %1766 = vmatprep.subr.mxu0 0.0
        %1767 = vmatpush1.xpose.msra.mxu0 0.0
        %1768 = vmatprep.subr.mxu0 0.0
        %1769 = vmatpush1.xpose.msra.mxu0 0.0
        %1770 = vmatprep.subr.mxu0 0.0
        %1771 = vmatpush1.xpose.msra.mxu0 0.0
        %1772 = vmatprep.subr.mxu0 0.0
        %1773 = vmatpush1.xpose.msra.mxu0 0.0
        %1774 = vmatprep.subr.mxu0 0.0
        %1775 = vmatpush1.xpose.msra.mxu0 0.0
        %1776 = vmatprep.subr.mxu0 0.0
        %1777 = vmatpush1.xpose.msra.mxu0 0.0
        %1778 = vmatprep.subr.mxu0 0.0
        %1779 = vmatpush1.xpose.msra.mxu0 0.0
        %1780 = vmatprep.subr.mxu0 0.0
        %1781 = vmatpush1.xpose.msra.mxu0 0.0
        %1782 = vmatprep.subr.mxu0 0.0
        %1783 = vmatpush1.xpose.msra.mxu0 0.0
        %1784 = vmatprep.subr.mxu0 0.0
        %1785 = vmatpush1.xpose.msra.mxu0 0.0
        %1786 = vmatprep.subr.mxu0 0.0
        %1787 = vmatpush1.xpose.msra.mxu0 0.0
        %1788 = vmatprep.subr.mxu0 0.0
        %1789 = vmatpush1.xpose.msra.mxu0 0.0
        %1790 = vmatprep.subr.mxu0 0.0
        %1791 = vmatpush1.xpose.msra.mxu0 0.0
        %1792 = vmatprep.subr.mxu0 0.0
        %1793 = vmatpush1.xpose.msra.mxu0 0.0
        %1794 = vmatprep.subr.mxu0 0.0
        %1795 = vmatpush1.xpose.msra.mxu0 0.0
        %1796 = vmatprep.subr.mxu0 0.0
        %1797 = vmatpush1.xpose.msra.mxu0 0.0
        %1798 = vmatprep.subr.mxu0 0.0
        %1799 = vmatpush1.xpose.msra.mxu0 0.0
        %1800 = vmatprep.subr.mxu0 0.0
        %1801 = vmatpush1.xpose.msra.mxu0 0.0
        %1802 = vmatprep.subr.mxu0 0.0
        %1803 = vmatpush1.xpose.msra.mxu0 0.0
        %1804 = vmatprep.subr.mxu0 0.0
        %1805 = vmatpush1.xpose.msra.mxu0 0.0
        %1806 = vmatprep.subr.mxu0 0.0
        %1807 = vmatpush1.xpose.msra.mxu0 0.0
        %1808 = vmatprep.subr.mxu0 0.0
        %1809 = vmatpush1.xpose.msra.mxu0 0.0
        %1810 = vmatprep.subr.mxu0 0.0
        %1811 = vmatpush1.xpose.msra.mxu0 0.0
        %1812 = vmatprep.subr.mxu0 0.0
        %1813 = vmatpush1.xpose.msra.mxu0 0.0
        %1814 = vmatprep.subr.mxu0 0.0
        %1815 = vmatpush1.xpose.msra.mxu0 0.0
        %1816 = vmatprep.subr.mxu0 0.0
        %1817 = vmatpush1.xpose.msra.mxu0 0.0
        %1818 = vmatprep.subr.mxu0 0.0
        %1819 = vmatpush1.xpose.msra.mxu0 0.0
        %1820 = vmatprep.mubr.f32.mxu0 0.0
        %1821 = vmatmul.mubr.f32.gmra.mrb[0].mxu0 %v1752
        %v1822 = vpop.f32.mrb[0].mxu0
        %v1823 = vadd.f32 %v1419, %v1822
        %v1824 = vpop.f32.mrb[0].mxu0
        %1825 = vdwg.mxu0
        %v1826 = vsel %vm1421, %v1823, -inf
        %1827 = vmax.xlane.f32.xlu0 %v1826
        %v1828 = vpop.xlane.xlu0 %1827
        %v1829 = vsub.f32 %v1823, %v1828
        %v1830 = vmul.f32 %v1829, 1.442695
        %v1831 = vpow.pop %v1830
        %v1832 = vsel %vm1421, %v1831, 0.0
        %1833 = vadd.xlane.f32.xlu0 %v1832
        %v1834 = vpop.xlane.xlu0 %1833
        %v1835 = vrcp.pop %v1834
        %v1836 = vmul.f32 %v1831, %v1835
        %1837 = vrot.lane.b32.xlu0 %v1411, 112
        %v1838 = vpop.permute.xlu0 %1837
        %v1841 = vsel %vm1421, %v1836, 0
        %1843 = vmatprep.subr.mxu0 0.0
        %1844 = vmatpush1.msra.mxu0 %v1838
        %1845 = vmatprep.subr.mxu0 0.0
        %1846 = vmatpush1.msra.mxu0 0.0
        %1847 = vmatprep.subr.mxu0 0.0
        %1848 = vmatpush1.msra.mxu0 0.0
        %1849 = vmatprep.subr.mxu0 0.0
        %1850 = vmatpush1.msra.mxu0 0.0
        %1851 = vmatprep.subr.mxu0 0.0
        %1852 = vmatpush1.msra.mxu0 0.0
        %1853 = vmatprep.subr.mxu0 0.0
        %1854 = vmatpush1.msra.mxu0 0.0
        %1855 = vmatprep.subr.mxu0 0.0
        %1856 = vmatpush1.msra.mxu0 0.0
        %1857 = vmatprep.subr.mxu0 0.0
        %1858 = vmatpush1.msra.mxu0 0.0
        %1859 = vmatprep.subr.mxu0 0.0
        %1860 = vmatpush1.msra.mxu0 0.0
        %1861 = vmatprep.subr.mxu0 0.0
        %1862 = vmatpush1.msra.mxu0 0.0
        %1863 = vmatprep.subr.mxu0 0.0
        %1864 = vmatpush1.msra.mxu0 0.0
        %1865 = vmatprep.subr.mxu0 0.0
        %1866 = vmatpush1.msra.mxu0 0.0
        %1867 = vmatprep.subr.mxu0 0.0
        %1868 = vmatpush1.msra.mxu0 0.0
        %1869 = vmatprep.subr.mxu0 0.0
        %1870 = vmatpush1.msra.mxu0 0.0
        %1871 = vmatprep.subr.mxu0 0.0
        %1872 = vmatpush1.msra.mxu0 0.0
        %1873 = vmatprep.subr.mxu0 0.0
        %1874 = vmatpush1.msra.mxu0 0.0
        %1875 = vmatprep.subr.mxu0 0.0
        %1876 = vmatpush1.msra.mxu0 0.0
        %1877 = vmatprep.subr.mxu0 0.0
        %1878 = vmatpush1.msra.mxu0 0.0
        %1879 = vmatprep.subr.mxu0 0.0
        %1880 = vmatpush1.msra.mxu0 0.0
        %1881 = vmatprep.subr.mxu0 0.0
        %1882 = vmatpush1.msra.mxu0 0.0
        %1883 = vmatprep.subr.mxu0 0.0
        %1884 = vmatpush1.msra.mxu0 0.0
        %1885 = vmatprep.subr.mxu0 0.0
        %1886 = vmatpush1.msra.mxu0 0.0
        %1887 = vmatprep.subr.mxu0 0.0
        %1888 = vmatpush1.msra.mxu0 0.0
        %1889 = vmatprep.subr.mxu0 0.0
        %1890 = vmatpush1.msra.mxu0 0.0
        %1891 = vmatprep.subr.mxu0 0.0
        %1892 = vmatpush1.msra.mxu0 0.0
        %1893 = vmatprep.subr.mxu0 0.0
        %1894 = vmatpush1.msra.mxu0 0.0
        %1895 = vmatprep.subr.mxu0 0.0
        %1896 = vmatpush1.msra.mxu0 0.0
        %1897 = vmatprep.subr.mxu0 0.0
        %1898 = vmatpush1.msra.mxu0 0.0
        %1899 = vmatprep.subr.mxu0 0.0
        %1900 = vmatpush1.msra.mxu0 0.0
        %1901 = vmatprep.subr.mxu0 0.0
        %1902 = vmatpush1.msra.mxu0 0.0
        %1903 = vmatprep.subr.mxu0 0.0
        %1904 = vmatpush1.msra.mxu0 0.0
        %1905 = vmatprep.subr.mxu0 0.0
        %1906 = vmatpush1.msra.mxu0 0.0
        %1907 = vmatprep.mubr.f32.mxu0 0.0
        %1908 = vmatmul.mubr.f32.gmra.mrb[0].mxu0 %v1841
        %v1909 = vpop.f32.mrb[0].mxu0
        %v1910 = vadd.f32 0.0, %v1909
        %v1911 = vpop.f32.mrb[0].mxu0
        %1912 = vdwg.mxu0
        %1913 = vrot.lane.b32.xlu0 %v1340, 104
        %v1914 = vpop.permute.xlu0 %1913
        %1915 = vrot.lane.b32.xlu0 %v1342, 104
        %v1916 = vpop.permute.xlu0 %1915
        %v1917 = vsel %vm1421, %v1914, 0
        %v1919 = vsel %vm1421, %v1916, 0
        %1921 = vmatprep.subr.mxu0 0.0
        %1922 = vmatpush1.xpose.msra.mxu0 %v1919
        %1923 = vmatprep.subr.mxu0 0.0
        %1924 = vmatpush1.xpose.msra.mxu0 0.0
        %1925 = vmatprep.subr.mxu0 0.0
        %1926 = vmatpush1.xpose.msra.mxu0 0.0
        %1927 = vmatprep.subr.mxu0 0.0
        %1928 = vmatpush1.xpose.msra.mxu0 0.0
        %1929 = vmatprep.subr.mxu0 0.0
        %1930 = vmatpush1.xpose.msra.mxu0 0.0
        %1931 = vmatprep.subr.mxu0 0.0
        %1932 = vmatpush1.xpose.msra.mxu0 0.0
        %1933 = vmatprep.subr.mxu0 0.0
        %1934 = vmatpush1.xpose.msra.mxu0 0.0
        %1935 = vmatprep.subr.mxu0 0.0
        %1936 = vmatpush1.xpose.msra.mxu0 0.0
        %1937 = vmatprep.subr.mxu0 0.0
        %1938 = vmatpush1.xpose.msra.mxu0 0.0
        %1939 = vmatprep.subr.mxu0 0.0
        %1940 = vmatpush1.xpose.msra.mxu0 0.0
        %1941 = vmatprep.subr.mxu0 0.0
        %1942 = vmatpush1.xpose.msra.mxu0 0.0
        %1943 = vmatprep.subr.mxu0 0.0
        %1944 = vmatpush1.xpose.msra.mxu0 0.0
        %1945 = vmatprep.subr.mxu0 0.0
        %1946 = vmatpush1.xpose.msra.mxu0 0.0
        %1947 = vmatprep.subr.mxu0 0.0
        %1948 = vmatpush1.xpose.msra.mxu0 0.0
        %1949 = vmatprep.subr.mxu0 0.0
        %1950 = vmatpush1.xpose.msra.mxu0 0.0
        %1951 = vmatprep.subr.mxu0 0.0
        %1952 = vmatpush1.xpose.msra.mxu0 0.0
        %1953 = vmatprep.subr.mxu0 0.0
        %1954 = vmatpush1.xpose.msra.mxu0 0.0
        %1955 = vmatprep.subr.mxu0 0.0
        %1956 = vmatpush1.xpose.msra.mxu0 0.0
        %1957 = vmatprep.subr.mxu0 0.0
        %1958 = vmatpush1.xpose.msra.mxu0 0.0
        %1959 = vmatprep.subr.mxu0 0.0
        %1960 = vmatpush1.xpose.msra.mxu0 0.0
        %1961 = vmatprep.subr.mxu0 0.0
        %1962 = vmatpush1.xpose.msra.mxu0 0.0
        %1963 = vmatprep.subr.mxu0 0.0
        %1964 = vmatpush1.xpose.msra.mxu0 0.0
        %1965 = vmatprep.subr.mxu0 0.0
        %1966 = vmatpush1.xpose.msra.mxu0 0.0
        %1967 = vmatprep.subr.mxu0 0.0
        %1968 = vmatpush1.xpose.msra.mxu0 0.0
        %1969 = vmatprep.subr.mxu0 0.0
        %1970 = vmatpush1.xpose.msra.mxu0 0.0
        %1971 = vmatprep.subr.mxu0 0.0
        %1972 = vmatpush1.xpose.msra.mxu0 0.0
        %1973 = vmatprep.subr.mxu0 0.0
        %1974 = vmatpush1.xpose.msra.mxu0 0.0
        %1975 = vmatprep.subr.mxu0 0.0
        %1976 = vmatpush1.xpose.msra.mxu0 0.0
        %1977 = vmatprep.subr.mxu0 0.0
        %1978 = vmatpush1.xpose.msra.mxu0 0.0
        %1979 = vmatprep.subr.mxu0 0.0
        %1980 = vmatpush1.xpose.msra.mxu0 0.0
        %1981 = vmatprep.subr.mxu0 0.0
        %1982 = vmatpush1.xpose.msra.mxu0 0.0
        %1983 = vmatprep.subr.mxu0 0.0
        %1984 = vmatpush1.xpose.msra.mxu0 0.0
        %1985 = vmatprep.mubr.f32.mxu0 0.0
        %1986 = vmatmul.mubr.f32.gmra.mrb[0].mxu0 %v1917
        %v1987 = vpop.f32.mrb[0].mxu0
        %v1988 = vadd.f32 %v1419, %v1987
        %v1989 = vpop.f32.mrb[0].mxu0
        %1990 = vdwg.mxu0
        %v1991 = vsel %vm1421, %v1988, -inf
        %1992 = vmax.xlane.f32.xlu0 %v1991
        %v1993 = vpop.xlane.xlu0 %1992
        %v1994 = vsub.f32 %v1988, %v1993
        %v1995 = vmul.f32 %v1994, 1.442695
        %v1996 = vpow.pop %v1995
        %v1997 = vsel %vm1421, %v1996, 0.0
        %1998 = vadd.xlane.f32.xlu0 %v1997
        %v1999 = vpop.xlane.xlu0 %1998
        %v2000 = vrcp.pop %v1999
        %v2001 = vmul.f32 %v1996, %v2000
        %2002 = vrot.lane.b32.xlu0 %v1411, 104
        %v2003 = vpop.permute.xlu0 %2002
        %v2006 = vsel %vm1421, %v2001, 0
        %2008 = vmatprep.subr.mxu0 0.0
        %2009 = vmatpush1.msra.mxu0 %v2003
        %2010 = vmatprep.subr.mxu0 0.0
        %2011 = vmatpush1.msra.mxu0 0.0
        %2012 = vmatprep.subr.mxu0 0.0
        %2013 = vmatpush1.msra.mxu0 0.0
        %2014 = vmatprep.subr.mxu0 0.0
        %2015 = vmatpush1.msra.mxu0 0.0
        %2016 = vmatprep.subr.mxu0 0.0
        %2017 = vmatpush1.msra.mxu0 0.0
        %2018 = vmatprep.subr.mxu0 0.0
        %2019 = vmatpush1.msra.mxu0 0.0
        %2020 = vmatprep.subr.mxu0 0.0
        %2021 = vmatpush1.msra.mxu0 0.0
        %2022 = vmatprep.subr.mxu0 0.0
        %2023 = vmatpush1.msra.mxu0 0.0
        %2024 = vmatprep.subr.mxu0 0.0
        %2025 = vmatpush1.msra.mxu0 0.0
        %2026 = vmatprep.subr.mxu0 0.0
        %2027 = vmatpush1.msra.mxu0 0.0
        %2028 = vmatprep.subr.mxu0 0.0
        %2029 = vmatpush1.msra.mxu0 0.0
        %2030 = vmatprep.subr.mxu0 0.0
        %2031 = vmatpush1.msra.mxu0 0.0
        %2032 = vmatprep.subr.mxu0 0.0
        %2033 = vmatpush1.msra.mxu0 0.0
        %2034 = vmatprep.subr.mxu0 0.0
        %2035 = vmatpush1.msra.mxu0 0.0
        %2036 = vmatprep.subr.mxu0 0.0
        %2037 = vmatpush1.msra.mxu0 0.0
        %2038 = vmatprep.subr.mxu0 0.0
        %2039 = vmatpush1.msra.mxu0 0.0
        %2040 = vmatprep.subr.mxu0 0.0
        %2041 = vmatpush1.msra.mxu0 0.0
        %2042 = vmatprep.subr.mxu0 0.0
        %2043 = vmatpush1.msra.mxu0 0.0
        %2044 = vmatprep.subr.mxu0 0.0
        %2045 = vmatpush1.msra.mxu0 0.0
        %2046 = vmatprep.subr.mxu0 0.0
        %2047 = vmatpush1.msra.mxu0 0.0
        %2048 = vmatprep.subr.mxu0 0.0
        %2049 = vmatpush1.msra.mxu0 0.0
        %2050 = vmatprep.subr.mxu0 0.0
        %2051 = vmatpush1.msra.mxu0 0.0
        %2052 = vmatprep.subr.mxu0 0.0
        %2053 = vmatpush1.msra.mxu0 0.0
        %2054 = vmatprep.subr.mxu0 0.0
        %2055 = vmatpush1.msra.mxu0 0.0
        %2056 = vmatprep.subr.mxu0 0.0
        %2057 = vmatpush1.msra.mxu0 0.0
        %2058 = vmatprep.subr.mxu0 0.0
        %2059 = vmatpush1.msra.mxu0 0.0
        %2060 = vmatprep.subr.mxu0 0.0
        %2061 = vmatpush1.msra.mxu0 0.0
        %2062 = vmatprep.subr.mxu0 0.0
        %2063 = vmatpush1.msra.mxu0 0.0
        %2064 = vmatprep.subr.mxu0 0.0
        %2065 = vmatpush1.msra.mxu0 0.0
        %2066 = vmatprep.subr.mxu0 0.0
        %2067 = vmatpush1.msra.mxu0 0.0
        %2068 = vmatprep.subr.mxu0 0.0
        %2069 = vmatpush1.msra.mxu0 0.0
        %2070 = vmatprep.subr.mxu0 0.0
        %2071 = vmatpush1.msra.mxu0 0.0
        %2072 = vmatprep.mubr.f32.mxu0 0.0
        %2073 = vmatmul.mubr.f32.gmra.mrb[0].mxu0 %v2006
        %v2074 = vpop.f32.mrb[0].mxu0
        %v2075 = vadd.f32 0.0, %v2074
        %v2076 = vpop.f32.mrb[0].mxu0
        %2077 = vdwg.mxu0
        %2079 = vrot.lane.b32.xlu0 %v1745, 8
        %v2080 = vpop.permute.xlu0 %2079
        %2083 = vrot.lane.b32.xlu0 %v1910, 16
        %v2084 = vpop.permute.xlu0 %2083
        %2087 = vrot.lane.b32.xlu0 %v2075, 24
        %v2088 = vpop.permute.xlu0 %2087
        %v2090 = vsel %vm1421, %v1579, %v2080
        %vm2091 = vcmask 130048
        %v2092 = vsel %vm2091, %v2090, %v2084
        %vm2093 = vcmask 195584
        %v2094 = vsel %vm2093, %v2092, %v2088
        %vm2095 = vcmask 261120
        %v2096 = vsel %vm2095, %v2094, 0.0
        %v2097 = vld [vmem:[%s899] sm:$0xff]
        %v2098 = vld [vmem:[%s899 + $0x8] sm:$0xff]
        %v2099 = vld [vmem:[%s899 + $0x10] sm:$0xff]
        %v2100 = vld [vmem:[%s899 + $0x18] sm:$0xff]
        %v2101 = vld [vmem:[%s899 + $0x20] sm:$0xff]
        %v2102 = vld [vmem:[%s899 + $0x28] sm:$0xff]
        %v2103 = vld [vmem:[%s899 + $0x30] sm:$0xff]
        %v2104 = vld [vmem:[%s899 + $0x38] sm:$0xff]
        %v2105 = vld [vmem:[%s899 + $0x40] sm:$0xff]
        %v2106 = vld [vmem:[%s899 + $0x48] sm:$0xff]
        %v2107 = vld [vmem:[%s899 + $0x50] sm:$0xff]
        %v2108 = vld [vmem:[%s899 + $0x58] sm:$0xff]
        %v2109 = vld [vmem:[%s899 + $0x60] sm:$0xff]
        %v2110 = vld [vmem:[%s899 + $0x68] sm:$0xff]
        %v2111 = vld [vmem:[%s899 + $0x70] sm:$0xff]
        %v2112 = vld [vmem:[%s899 + $0x78] sm:$0xff]
        %v2113 = vld [vmem:[%s1063] sm:$0x1]
        %v2115 = vlaneseq
        %v2116 = vshrl.u32 %v2115, 7
        %v2117 = vsub.s32 0, %v2116
        %v2118 = vrot.slane %v2113, %v2117
        %2120 = vmatprep.subr.mxu0 0.0
        %2121 = vmatpush1.msra.mxu0 %v2097
        %2122 = vmatprep.subr.mxu0 0.0
        %2123 = vmatpush1.msra.mxu0 %v2098
        %2124 = vmatprep.subr.mxu0 0.0
        %2125 = vmatpush1.msra.mxu0 %v2099
        %2126 = vmatprep.subr.mxu0 0.0
        %2127 = vmatpush1.msra.mxu0 %v2100
        %2128 = vmatprep.subr.mxu0 0.0
        %2129 = vmatpush1.msra.mxu0 %v2101
        %2130 = vmatprep.subr.mxu0 0.0
        %2131 = vmatpush1.msra.mxu0 %v2102
        %2132 = vmatprep.subr.mxu0 0.0
        %2133 = vmatpush1.msra.mxu0 %v2103
        %2134 = vmatprep.subr.mxu0 0.0
        %2135 = vmatpush1.msra.mxu0 %v2104
        %2136 = vmatprep.subr.mxu0 0.0
        %2137 = vmatpush1.msra.mxu0 %v2105
        %2138 = vmatprep.subr.mxu0 0.0
        %2139 = vmatpush1.msra.mxu0 %v2106
        %2140 = vmatprep.subr.mxu0 0.0
        %2141 = vmatpush1.msra.mxu0 %v2107
        %2142 = vmatprep.subr.mxu0 0.0
        %2143 = vmatpush1.msra.mxu0 %v2108
        %2144 = vmatprep.subr.mxu0 0.0
        %2145 = vmatpush1.msra.mxu0 %v2109
        %2146 = vmatprep.subr.mxu0 0.0
        %2147 = vmatpush1.msra.mxu0 %v2110
        %2148 = vmatprep.subr.mxu0 0.0
        %2149 = vmatpush1.msra.mxu0 %v2111
        %2150 = vmatprep.subr.mxu0 0.0
        %2151 = vmatpush1.msra.mxu0 %v2112
        %2152 = vmatprep.subr.mxu0 0.0
        %2153 = vmatpush1.msra.mxu0 0.0
        %2154 = vmatprep.subr.mxu0 0.0
        %2155 = vmatpush1.msra.mxu0 0.0
        %2156 = vmatprep.subr.mxu0 0.0
        %2157 = vmatpush1.msra.mxu0 0.0
        %2158 = vmatprep.subr.mxu0 0.0
        %2159 = vmatpush1.msra.mxu0 0.0
        %2160 = vmatprep.subr.mxu0 0.0
        %2161 = vmatpush1.msra.mxu0 0.0
        %2162 = vmatprep.subr.mxu0 0.0
        %2163 = vmatpush1.msra.mxu0 0.0
        %2164 = vmatprep.subr.mxu0 0.0
        %2165 = vmatpush1.msra.mxu0 0.0
        %2166 = vmatprep.subr.mxu0 0.0
        %2167 = vmatpush1.msra.mxu0 0.0
        %2168 = vmatprep.subr.mxu0 0.0
        %2169 = vmatpush1.msra.mxu0 0.0
        %2170 = vmatprep.subr.mxu0 0.0
        %2171 = vmatpush1.msra.mxu0 0.0
        %2172 = vmatprep.subr.mxu0 0.0
        %2173 = vmatpush1.msra.mxu0 0.0
        %2174 = vmatprep.subr.mxu0 0.0
        %2175 = vmatpush1.msra.mxu0 0.0
        %2176 = vmatprep.subr.mxu0 0.0
        %2177 = vmatpush1.msra.mxu0 0.0
        %2178 = vmatprep.subr.mxu0 0.0
        %2179 = vmatpush1.msra.mxu0 0.0
        %2180 = vmatprep.subr.mxu0 0.0
        %2181 = vmatpush1.msra.mxu0 0.0
        %2182 = vmatprep.subr.mxu0 0.0
        %2183 = vmatpush1.msra.mxu0 0.0
        %2184 = vmatprep.mubr.f32.mxu0 0.0
        %2185 = vmatmul.mubr.f32.gmra.mrb[0].mxu0 %v2096
        %v2186 = vpop.f32.mrb[0].mxu0
        %v2187 = vadd.f32 %v2118, %v2186
        %v2188 = vpop.f32.mrb[0].mxu0
        %2189 = vdwg.mxu0
        %v2190 = vadd.f32 %v1177, %v2187
        %v2191 = vld [vmem:[%s1066] sm:$0x1]
        %v2192 = vld [vmem:[%s1069] sm:$0x1]
        %2193 = vadd.xlane.f32.xlu0 %v2190
        %v2194 = vpop.xlane.xlu0 %2193
        %v2195 = vmul.f32 %v2194, 0.03125
        %v2196 = vmul.f32 %v2190, %v2190
        %2197 = vadd.xlane.f32.xlu0 %v2196
        %v2198 = vpop.xlane.xlu0 %2197
        %v2199 = vmul.f32 %v2198, 0.03125
        %v2200 = vmul.f32 %v2195, %v2195
        %v2201 = vsub.f32 %v2199, %v2200
        %v2202 = vmax.f32 %v2201, 0.0
        %v2203 = vsub.f32 %v2190, %v2195
        %v2204 = vadd.f32 %v2202, 1e-06
        %v2205 = vrsqrt.pop %v2204
        %v2206 = vmul.f32 %v2203, %v2205
        %v2208 = vlaneseq
        %v2209 = vshrl.u32 %v2208, 7
        %v2210 = vsub.s32 0, %v2209
        %v2211 = vrot.slane %v2191, %v2210
        %v2213 = vmul.f32 %v2206, %v2211
        %v2215 = vlaneseq
        %v2216 = vshrl.u32 %v2215, 7
        %v2217 = vsub.s32 0, %v2216
        %v2218 = vrot.slane %v2192, %v2217
        %v2220 = vadd.f32 %v2213, %v2218
        %v2221 = vld [vmem:[%s908] sm:$0xff]
        %v2222 = vld [vmem:[%s908 + $0x8] sm:$0xff]
        %v2223 = vld [vmem:[%s908 + $0x10] sm:$0xff]
        %v2224 = vld [vmem:[%s908 + $0x18] sm:$0xff]
        %v2225 = vld [vmem:[%s908 + $0x20] sm:$0xff]
        %v2226 = vld [vmem:[%s908 + $0x28] sm:$0xff]
        %v2227 = vld [vmem:[%s908 + $0x30] sm:$0xff]
        %v2228 = vld [vmem:[%s908 + $0x38] sm:$0xff]
        %v2229 = vld [vmem:[%s908 + $0x40] sm:$0xff]
        %v2230 = vld [vmem:[%s908 + $0x48] sm:$0xff]
        %v2231 = vld [vmem:[%s908 + $0x50] sm:$0xff]
        %v2232 = vld [vmem:[%s908 + $0x58] sm:$0xff]
        %v2233 = vld [vmem:[%s908 + $0x60] sm:$0xff]
        %v2234 = vld [vmem:[%s908 + $0x68] sm:$0xff]
        %v2235 = vld [vmem:[%s908 + $0x70] sm:$0xff]
        %v2236 = vld [vmem:[%s908 + $0x78] sm:$0xff]
        %v2237 = vld [vmem:[%s1072] sm:$0x1]
        %v2239 = vlaneseq
        %v2240 = vshrl.u32 %v2239, 7
        %v2241 = vsub.s32 0, %v2240
        %v2242 = vrot.slane %v2237, %v2241
        %2244 = vmatprep.subr.mxu0 0.0
        %2245 = vmatpush1.msra.mxu0 %v2221
        %2246 = vmatprep.subr.mxu0 0.0
        %2247 = vmatpush1.msra.mxu0 %v2222
        %2248 = vmatprep.subr.mxu0 0.0
        %2249 = vmatpush1.msra.mxu0 %v2223
        %2250 = vmatprep.subr.mxu0 0.0
        %2251 = vmatpush1.msra.mxu0 %v2224
        %2252 = vmatprep.subr.mxu0 0.0
        %2253 = vmatpush1.msra.mxu0 %v2225
        %2254 = vmatprep.subr.mxu0 0.0
        %2255 = vmatpush1.msra.mxu0 %v2226
        %2256 = vmatprep.subr.mxu0 0.0
        %2257 = vmatpush1.msra.mxu0 %v2227
        %2258 = vmatprep.subr.mxu0 0.0
        %2259 = vmatpush1.msra.mxu0 %v2228
        %2260 = vmatprep.subr.mxu0 0.0
        %2261 = vmatpush1.msra.mxu0 %v2229
        %2262 = vmatprep.subr.mxu0 0.0
        %2263 = vmatpush1.msra.mxu0 %v2230
        %2264 = vmatprep.subr.mxu0 0.0
        %2265 = vmatpush1.msra.mxu0 %v2231
        %2266 = vmatprep.subr.mxu0 0.0
        %2267 = vmatpush1.msra.mxu0 %v2232
        %2268 = vmatprep.subr.mxu0 0.0
        %2269 = vmatpush1.msra.mxu0 %v2233
        %2270 = vmatprep.subr.mxu0 0.0
        %2271 = vmatpush1.msra.mxu0 %v2234
        %2272 = vmatprep.subr.mxu0 0.0
        %2273 = vmatpush1.msra.mxu0 %v2235
        %2274 = vmatprep.subr.mxu0 0.0
        %2275 = vmatpush1.msra.mxu0 %v2236
        %2276 = vmatprep.subr.mxu0 0.0
        %2277 = vmatpush1.msra.mxu0 0.0
        %2278 = vmatprep.subr.mxu0 0.0
        %2279 = vmatpush1.msra.mxu0 0.0
        %2280 = vmatprep.subr.mxu0 0.0
        %2281 = vmatpush1.msra.mxu0 0.0
        %2282 = vmatprep.subr.mxu0 0.0
        %2283 = vmatpush1.msra.mxu0 0.0
        %2284 = vmatprep.subr.mxu0 0.0
        %2285 = vmatpush1.msra.mxu0 0.0
        %2286 = vmatprep.subr.mxu0 0.0
        %2287 = vmatpush1.msra.mxu0 0.0
        %2288 = vmatprep.subr.mxu0 0.0
        %2289 = vmatpush1.msra.mxu0 0.0
        %2290 = vmatprep.subr.mxu0 0.0
        %2291 = vmatpush1.msra.mxu0 0.0
        %2292 = vmatprep.subr.mxu0 0.0
        %2293 = vmatpush1.msra.mxu0 0.0
        %2294 = vmatprep.subr.mxu0 0.0
        %2295 = vmatpush1.msra.mxu0 0.0
        %2296 = vmatprep.subr.mxu0 0.0
        %2297 = vmatpush1.msra.mxu0 0.0
        %2298 = vmatprep.subr.mxu0 0.0
        %2299 = vmatpush1.msra.mxu0 0.0
        %2300 = vmatprep.subr.mxu0 0.0
        %2301 = vmatpush1.msra.mxu0 0.0
        %2302 = vmatprep.subr.mxu0 0.0
        %2303 = vmatpush1.msra.mxu0 0.0
        %2304 = vmatprep.subr.mxu0 0.0
        %2305 = vmatpush1.msra.mxu0 0.0
        %2306 = vmatprep.subr.mxu0 0.0
        %2307 = vmatpush1.msra.mxu0 0.0
        %2308 = vmatprep.mubr.f32.mxu0 0.0
        %2309 = vmatmul.mubr.f32.gmra.mrb[0].mxu0 %v2220
        %v2310 = vpop.f32.mrb[0].mxu0
        %v2311 = vadd.f32 %v2242, %v2310
        %v2312 = vpop.f32.mrb[0].mxu0
        %2313 = vdwg.mxu0
        %v2314 = vmax.f32 %v2311, 0.0
        %v2315 = vld [vmem:[%s917] sm:$0xff]
        %v2316 = vld [vmem:[%s917 + $0x8] sm:$0xff]
        %v2317 = vld [vmem:[%s917 + $0x10] sm:$0xff]
        %v2318 = vld [vmem:[%s917 + $0x18] sm:$0xff]
        %v2319 = vld [vmem:[%s917 + $0x20] sm:$0xff]
        %v2320 = vld [vmem:[%s917 + $0x28] sm:$0xff]
        %v2321 = vld [vmem:[%s917 + $0x30] sm:$0xff]
        %v2322 = vld [vmem:[%s917 + $0x38] sm:$0xff]
        %v2323 = vld [vmem:[%s917 + $0x40] sm:$0xff]
        %v2324 = vld [vmem:[%s917 + $0x48] sm:$0xff]
        %v2325 = vld [vmem:[%s917 + $0x50] sm:$0xff]
        %v2326 = vld [vmem:[%s917 + $0x58] sm:$0xff]
        %v2327 = vld [vmem:[%s917 + $0x60] sm:$0xff]
        %v2328 = vld [vmem:[%s917 + $0x68] sm:$0xff]
        %v2329 = vld [vmem:[%s917 + $0x70] sm:$0xff]
        %v2330 = vld [vmem:[%s917 + $0x78] sm:$0xff]
        %v2331 = vld [vmem:[%s1075] sm:$0x1]
        %v2333 = vlaneseq
        %v2334 = vshrl.u32 %v2333, 7
        %v2335 = vsub.s32 0, %v2334
        %v2336 = vrot.slane %v2331, %v2335
        %2338 = vmatprep.subr.mxu0 0.0
        %2339 = vmatpush1.msra.mxu0 %v2315
        %2340 = vmatprep.subr.mxu0 0.0
        %2341 = vmatpush1.msra.mxu0 %v2316
        %2342 = vmatprep.subr.mxu0 0.0
        %2343 = vmatpush1.msra.mxu0 %v2317
        %2344 = vmatprep.subr.mxu0 0.0
        %2345 = vmatpush1.msra.mxu0 %v2318
        %2346 = vmatprep.subr.mxu0 0.0
        %2347 = vmatpush1.msra.mxu0 %v2319
        %2348 = vmatprep.subr.mxu0 0.0
        %2349 = vmatpush1.msra.mxu0 %v2320
        %2350 = vmatprep.subr.mxu0 0.0
        %2351 = vmatpush1.msra.mxu0 %v2321
        %2352 = vmatprep.subr.mxu0 0.0
        %2353 = vmatpush1.msra.mxu0 %v2322
        %2354 = vmatprep.subr.mxu0 0.0
        %2355 = vmatpush1.msra.mxu0 %v2323
        %2356 = vmatprep.subr.mxu0 0.0
        %2357 = vmatpush1.msra.mxu0 %v2324
        %2358 = vmatprep.subr.mxu0 0.0
        %2359 = vmatpush1.msra.mxu0 %v2325
        %2360 = vmatprep.subr.mxu0 0.0
        %2361 = vmatpush1.msra.mxu0 %v2326
        %2362 = vmatprep.subr.mxu0 0.0
        %2363 = vmatpush1.msra.mxu0 %v2327
        %2364 = vmatprep.subr.mxu0 0.0
        %2365 = vmatpush1.msra.mxu0 %v2328
        %2366 = vmatprep.subr.mxu0 0.0
        %2367 = vmatpush1.msra.mxu0 %v2329
        %2368 = vmatprep.subr.mxu0 0.0
        %2369 = vmatpush1.msra.mxu0 %v2330
        %2370 = vmatprep.subr.mxu0 0.0
        %2371 = vmatpush1.msra.mxu0 0.0
        %2372 = vmatprep.subr.mxu0 0.0
        %2373 = vmatpush1.msra.mxu0 0.0
        %2374 = vmatprep.subr.mxu0 0.0
        %2375 = vmatpush1.msra.mxu0 0.0
        %2376 = vmatprep.subr.mxu0 0.0
        %2377 = vmatpush1.msra.mxu0 0.0
        %2378 = vmatprep.subr.mxu0 0.0
        %2379 = vmatpush1.msra.mxu0 0.0
        %2380 = vmatprep.subr.mxu0 0.0
        %2381 = vmatpush1.msra.mxu0 0.0
        %2382 = vmatprep.subr.mxu0 0.0
        %2383 = vmatpush1.msra.mxu0 0.0
        %2384 = vmatprep.subr.mxu0 0.0
        %2385 = vmatpush1.msra.mxu0 0.0
        %2386 = vmatprep.subr.mxu0 0.0
        %2387 = vmatpush1.msra.mxu0 0.0
        %2388 = vmatprep.subr.mxu0 0.0
        %2389 = vmatpush1.msra.mxu0 0.0
        %2390 = vmatprep.subr.mxu0 0.0
        %2391 = vmatpush1.msra.mxu0 0.0
        %2392 = vmatprep.subr.mxu0 0.0
        %2393 = vmatpush1.msra.mxu0 0.0
        %2394 = vmatprep.subr.mxu0 0.0
        %2395 = vmatpush1.msra.mxu0 0.0
        %2396 = vmatprep.subr.mxu0 0.0
        %2397 = vmatpush1.msra.mxu0 0.0
        %2398 = vmatprep.subr.mxu0 0.0
        %2399 = vmatpush1.msra.mxu0 0.0
        %2400 = vmatprep.subr.mxu0 0.0
        %2401 = vmatpush1.msra.mxu0 0.0
        %2402 = vmatprep.mubr.f32.mxu0 0.0
        %2403 = vmatmul.mubr.f32.gmra.mrb[0].mxu0 %v2314
        %v2404 = vpop.f32.mrb[0].mxu0
        %v2405 = vadd.f32 %v2336, %v2404
        %v2406 = vpop.f32.mrb[0].mxu0
        %2407 = vdwg.mxu0
        %v2408 = vadd.f32 %v2190, %v2405
        %2409 = vst [vmem:[#allocation2] sm:$0xff] %v2408
        %p2410 = scmp.eq.s32.totalorder %s53, 1
        // Predicated region
        $region145: #{pallas_classification_forward.1} parent=115 // pred_check
          %p2411 = pneg %p2410
        $region146: #{pallas_classification_forward.1} parent=115 // pred_check_branch
          %2413 = sbr.rel (%p2411) target = $region148
        $region147: #{pallas_classification_forward.1} parent=115 // pred_region
          %v2414 = vld [vmem:[%s18] sm:$0x1]
          %v2415 = vld [vmem:[%s19] sm:$0x1]
          %2416 = vadd.xlane.f32.xlu0 %v2408
          %v2417 = vpop.xlane.xlu0 %2416
          %v2418 = vmul.f32 %v2417, 0.03125
          %v2419 = vmul.f32 %v2408, %v2408
          %2420 = vadd.xlane.f32.xlu0 %v2419
          %v2421 = vpop.xlane.xlu0 %2420
          %v2422 = vmul.f32 %v2421, 0.03125
          %v2423 = vmul.f32 %v2418, %v2418
          %v2424 = vsub.f32 %v2422, %v2423
          %v2425 = vmax.f32 %v2424, 0.0
          %v2426 = vsub.f32 %v2408, %v2418
          %v2427 = vadd.f32 %v2425, 1e-06
          %v2428 = vrsqrt.pop %v2427
          %v2429 = vmul.f32 %v2426, %v2428
          %v2431 = vlaneseq
          %v2432 = vshrl.u32 %v2431, 7
          %v2433 = vsub.s32 0, %v2432
          %v2434 = vrot.slane %v2414, %v2433
          %v2436 = vmul.f32 %v2429, %v2434
          %v2438 = vlaneseq
          %v2439 = vshrl.u32 %v2438, 7
          %v2440 = vsub.s32 0, %v2439
          %v2441 = vrot.slane %v2415, %v2440
          %v2443 = vadd.f32 %v2436, %v2441
          %v2444 = vld [vmem:[%s1050] sm:$0xff]
          %vm2445 = vcmask 7168
          %v2446 = vsel %vm2445, %v2444, 0.0
          %v2447 = vrot.slane %v2446, 4
          %v2448 = vadd.f32 %v2446, %v2447
          %v2449 = vrot.slane %v2448, 2
          %v2450 = vadd.f32 %v2448, %v2449
          %v2451 = vrot.slane %v2450, 1
          %v2452 = vadd.f32 %v2450, %v2451
          %v2453 = vmax.f32 %v2452, 1.0
          %2455 = vset.pattern.permute.xlu0 0
          %2456 = vperm.xlu0 %2455, %v2444
          %v2457 = vpop.permute.xlu0 %2456
          %v2459 = vmul.f32 %v2443, %v2457
          %v2460 = vrot.slane %v2459, 4
          %v2461 = vadd.f32 %v2459, %v2460
          %v2462 = vrot.slane %v2461, 2
          %v2463 = vadd.f32 %v2461, %v2462
          %v2464 = vrot.slane %v2463, 1
          %v2465 = vadd.f32 %v2463, %v2464
          %2467 = vset.pattern.permute.xlu0 0
          %2468 = vperm.xlu0 %2467, %v2453
          %v2469 = vpop.permute.xlu0 %2468
          %v2471 = vrcp.pop %v2469
          %v2472 = vmul.f32 %v2465, %v2471
          %v2473 = vld [vmem:[#allocation11] sm:$0xff]
          %v2474 = vld [vmem:[#allocation11 + $0x8] sm:$0xff]
          %v2475 = vld [vmem:[#allocation11 + $0x10] sm:$0xff]
          %v2476 = vld [vmem:[#allocation11 + $0x18] sm:$0xff]
          %v2477 = vld [vmem:[#allocation11 + $0x20] sm:$0xff]
          %v2478 = vld [vmem:[#allocation11 + $0x28] sm:$0xff]
          %v2479 = vld [vmem:[#allocation11 + $0x30] sm:$0xff]
          %v2480 = vld [vmem:[#allocation11 + $0x38] sm:$0xff]
          %v2481 = vld [vmem:[#allocation11 + $0x40] sm:$0xff]
          %v2482 = vld [vmem:[#allocation11 + $0x48] sm:$0xff]
          %v2483 = vld [vmem:[#allocation11 + $0x50] sm:$0xff]
          %v2484 = vld [vmem:[#allocation11 + $0x58] sm:$0xff]
          %v2485 = vld [vmem:[#allocation11 + $0x60] sm:$0xff]
          %v2486 = vld [vmem:[#allocation11 + $0x68] sm:$0xff]
          %v2487 = vld [vmem:[#allocation11 + $0x70] sm:$0xff]
          %v2488 = vld [vmem:[#allocation11 + $0x78] sm:$0xff]
          %v2489 = vld [vmem:[%s21] sm:$0x1]
          %2490 = vmatprep.subr.mxu0 0.0
          %2491 = vmatpush1.msra.mxu0 %v2473
          %2492 = vmatprep.subr.mxu0 0.0
          %2493 = vmatpush1.msra.mxu0 %v2474
          %2494 = vmatprep.subr.mxu0 0.0
          %2495 = vmatpush1.msra.mxu0 %v2475
          %2496 = vmatprep.subr.mxu0 0.0
          %2497 = vmatpush1.msra.mxu0 %v2476
          %2498 = vmatprep.subr.mxu0 0.0
          %2499 = vmatpush1.msra.mxu0 %v2477
          %2500 = vmatprep.subr.mxu0 0.0
          %2501 = vmatpush1.msra.mxu0 %v2478
          %2502 = vmatprep.subr.mxu0 0.0
          %2503 = vmatpush1.msra.mxu0 %v2479
          %2504 = vmatprep.subr.mxu0 0.0
          %2505 = vmatpush1.msra.mxu0 %v2480
          %2506 = vmatprep.subr.mxu0 0.0
          %2507 = vmatpush1.msra.mxu0 %v2481
          %2508 = vmatprep.subr.mxu0 0.0
          %2509 = vmatpush1.msra.mxu0 %v2482
          %2510 = vmatprep.subr.mxu0 0.0
          %2511 = vmatpush1.msra.mxu0 %v2483
          %2512 = vmatprep.subr.mxu0 0.0
          %2513 = vmatpush1.msra.mxu0 %v2484
          %2514 = vmatprep.subr.mxu0 0.0
          %2515 = vmatpush1.msra.mxu0 %v2485
          %2516 = vmatprep.subr.mxu0 0.0
          %2517 = vmatpush1.msra.mxu0 %v2486
          %2518 = vmatprep.subr.mxu0 0.0
          %2519 = vmatpush1.msra.mxu0 %v2487
          %2520 = vmatprep.subr.mxu0 0.0
          %2521 = vmatpush1.msra.mxu0 %v2488
          %2522 = vmatprep.subr.mxu0 0.0
          %2523 = vmatpush1.msra.mxu0 0.0
          %2524 = vmatprep.subr.mxu0 0.0
          %2525 = vmatpush1.msra.mxu0 0.0
          %2526 = vmatprep.subr.mxu0 0.0
          %2527 = vmatpush1.msra.mxu0 0.0
          %2528 = vmatprep.subr.mxu0 0.0
          %2529 = vmatpush1.msra.mxu0 0.0
          %2530 = vmatprep.subr.mxu0 0.0
          %2531 = vmatpush1.msra.mxu0 0.0
          %2532 = vmatprep.subr.mxu0 0.0
          %2533 = vmatpush1.msra.mxu0 0.0
          %2534 = vmatprep.subr.mxu0 0.0
          %2535 = vmatpush1.msra.mxu0 0.0
          %2536 = vmatprep.subr.mxu0 0.0
          %2537 = vmatpush1.msra.mxu0 0.0
          %2538 = vmatprep.subr.mxu0 0.0
          %2539 = vmatpush1.msra.mxu0 0.0
          %2540 = vmatprep.subr.mxu0 0.0
          %2541 = vmatpush1.msra.mxu0 0.0
          %2542 = vmatprep.subr.mxu0 0.0
          %2543 = vmatpush1.msra.mxu0 0.0
          %2544 = vmatprep.subr.mxu0 0.0
          %2545 = vmatpush1.msra.mxu0 0.0
          %2546 = vmatprep.subr.mxu0 0.0
          %2547 = vmatpush1.msra.mxu0 0.0
          %2548 = vmatprep.subr.mxu0 0.0
          %2549 = vmatpush1.msra.mxu0 0.0
          %2550 = vmatprep.subr.mxu0 0.0
          %2551 = vmatpush1.msra.mxu0 0.0
          %2552 = vmatprep.subr.mxu0 0.0
          %2553 = vmatpush1.msra.mxu0 0.0
          %2554 = vmatprep.mubr.f32.mxu0 0.0
          %2555 = vmatmul.mubr.f32.gmra.mrb[0].mxu0 %v2472
          %v2556 = vpop.f32.mrb[0].mxu0
          %v2557 = vadd.f32 %v2489, %v2556
          %v2558 = vpop.f32.mrb[0].mxu0
          %2559 = vdwg.mxu0
          %v2560 = vmax.f32 %v2557, 0.0
          %v2561 = vld [vmem:[#allocation12] sm:$0xff]
          %v2562 = vld [vmem:[#allocation12 + $0x8] sm:$0xff]
          %v2563 = vld [vmem:[#allocation12 + $0x10] sm:$0xff]
          %v2564 = vld [vmem:[#allocation12 + $0x18] sm:$0xff]
          %v2565 = vld [vmem:[#allocation12 + $0x20] sm:$0xff]
          %v2566 = vld [vmem:[#allocation12 + $0x28] sm:$0xff]
          %v2567 = vld [vmem:[#allocation12 + $0x30] sm:$0xff]
          %v2568 = vld [vmem:[#allocation12 + $0x38] sm:$0xff]
          %v2569 = vld [vmem:[#allocation12 + $0x40] sm:$0xff]
          %v2570 = vld [vmem:[#allocation12 + $0x48] sm:$0xff]
          %v2571 = vld [vmem:[#allocation12 + $0x50] sm:$0xff]
          %v2572 = vld [vmem:[#allocation12 + $0x58] sm:$0xff]
          %v2573 = vld [vmem:[#allocation12 + $0x60] sm:$0xff]
          %v2574 = vld [vmem:[#allocation12 + $0x68] sm:$0xff]
          %v2575 = vld [vmem:[#allocation12 + $0x70] sm:$0xff]
          %v2576 = vld [vmem:[#allocation12 + $0x78] sm:$0xff]
          %v2577 = vld [vmem:[%s23] sm:$0x1]
          %2578 = vmatprep.subr.mxu0 0.0
          %2579 = vmatpush1.msra.mxu0 %v2561
          %2580 = vmatprep.subr.mxu0 0.0
          %2581 = vmatpush1.msra.mxu0 %v2562
          %2582 = vmatprep.subr.mxu0 0.0
          %2583 = vmatpush1.msra.mxu0 %v2563
          %2584 = vmatprep.subr.mxu0 0.0
          %2585 = vmatpush1.msra.mxu0 %v2564
          %2586 = vmatprep.subr.mxu0 0.0
          %2587 = vmatpush1.msra.mxu0 %v2565
          %2588 = vmatprep.subr.mxu0 0.0
          %2589 = vmatpush1.msra.mxu0 %v2566
          %2590 = vmatprep.subr.mxu0 0.0
          %2591 = vmatpush1.msra.mxu0 %v2567
          %2592 = vmatprep.subr.mxu0 0.0
          %2593 = vmatpush1.msra.mxu0 %v2568
          %2594 = vmatprep.subr.mxu0 0.0
          %2595 = vmatpush1.msra.mxu0 %v2569
          %2596 = vmatprep.subr.mxu0 0.0
          %2597 = vmatpush1.msra.mxu0 %v2570
          %2598 = vmatprep.subr.mxu0 0.0
          %2599 = vmatpush1.msra.mxu0 %v2571
          %2600 = vmatprep.subr.mxu0 0.0
          %2601 = vmatpush1.msra.mxu0 %v2572
          %2602 = vmatprep.subr.mxu0 0.0
          %2603 = vmatpush1.msra.mxu0 %v2573
          %2604 = vmatprep.subr.mxu0 0.0
          %2605 = vmatpush1.msra.mxu0 %v2574
          %2606 = vmatprep.subr.mxu0 0.0
          %2607 = vmatpush1.msra.mxu0 %v2575
          %2608 = vmatprep.subr.mxu0 0.0
          %2609 = vmatpush1.msra.mxu0 %v2576
          %2610 = vmatprep.subr.mxu0 0.0
          %2611 = vmatpush1.msra.mxu0 0.0
          %2612 = vmatprep.subr.mxu0 0.0
          %2613 = vmatpush1.msra.mxu0 0.0
          %2614 = vmatprep.subr.mxu0 0.0
          %2615 = vmatpush1.msra.mxu0 0.0
          %2616 = vmatprep.subr.mxu0 0.0
          %2617 = vmatpush1.msra.mxu0 0.0
          %2618 = vmatprep.subr.mxu0 0.0
          %2619 = vmatpush1.msra.mxu0 0.0
          %2620 = vmatprep.subr.mxu0 0.0
          %2621 = vmatpush1.msra.mxu0 0.0
          %2622 = vmatprep.subr.mxu0 0.0
          %2623 = vmatpush1.msra.mxu0 0.0
          %2624 = vmatprep.subr.mxu0 0.0
          %2625 = vmatpush1.msra.mxu0 0.0
          %2626 = vmatprep.subr.mxu0 0.0
          %2627 = vmatpush1.msra.mxu0 0.0
          %2628 = vmatprep.subr.mxu0 0.0
          %2629 = vmatpush1.msra.mxu0 0.0
          %2630 = vmatprep.subr.mxu0 0.0
          %2631 = vmatpush1.msra.mxu0 0.0
          %2632 = vmatprep.subr.mxu0 0.0
          %2633 = vmatpush1.msra.mxu0 0.0
          %2634 = vmatprep.subr.mxu0 0.0
          %2635 = vmatpush1.msra.mxu0 0.0
          %2636 = vmatprep.subr.mxu0 0.0
          %2637 = vmatpush1.msra.mxu0 0.0
          %2638 = vmatprep.subr.mxu0 0.0
          %2639 = vmatpush1.msra.mxu0 0.0
          %2640 = vmatprep.subr.mxu0 0.0
          %2641 = vmatpush1.msra.mxu0 0.0
          %2642 = vmatprep.mubr.f32.mxu0 0.0
          %2643 = vmatmul.mubr.f32.gmra.mrb[0].mxu0 %v2560
          %v2644 = vpop.f32.mrb[0].mxu0
          %v2645 = vadd.f32 %v2577, %v2644
          %v2646 = vpop.f32.mrb[0].mxu0
          %2647 = vdwg.mxu0
          %2648 = vst [vmem:[%s1039] sm:$0x1] %v2645
        $region148: #{pallas_classification_forward.1} parent=115 // pred_fallthru
          _
        %s2649 = sand.u32 %s647, 1
        %s2650 = scalar_lea.sflag [#allocation5], %s2649
        %s2651 = sand.u32 %s647, 1
        %s2652 = scalar_lea.vmem [#allocation14], %s2651
        // Predicated region
        $region149: #{pallas_classification_forward.1} parent=115 // pred_check
          %p2653 = pneg %p657
        $region150: #{pallas_classification_forward.1} parent=115 // pred_check_branch
          %2655 = sbr.rel (%p2653) target = $region152
        $region151: #{pallas_classification_forward.1} parent=115 // pred_region
          %s2657 = ssub.s32 16, 16
          %2658 = vsyncadd %s2650, %s2657
          %s2659 = smul.addr %s52, 16
          %s2660 = scalar_lea.hbm %s24, %s2659
          %s2662 = sshll.u32 %s2652, 4
          %s2663 = int_to_ptr.vmem [resolvable:$true] %s2662
          %2665 = dma.vmem_to_hbm [thread:$0]  %s2663, 16, %s2660, %s2650
        $region152: #{pallas_classification_forward.1} parent=115 // pred_fallthru
          _
      $region116: #{pallas_classification_forward.1} parent=5 // pred_fallthru
        _
      %p2666 = scmp.le.s32.totalorder 2, %s43
      // Predicated region
      $region153: #{pallas_classification_forward.1} parent=5 // pred_check
        %p2667 = pneg %p2666
      $region154: #{pallas_classification_forward.1} parent=5 // pred_check_branch
        %2669 = sbr.rel (%p2667) target = $region156
      $region155: #{pallas_classification_forward.1} parent=5 // pred_region
        %s2670 = ssub.s32 %s43, 2
        // Predicated region
        $region157: #{pallas_classification_forward.1} parent=155 // pred_check
          %p2671 = pneg %p663
        $region158: #{pallas_classification_forward.1} parent=155 // pred_check_branch
          %2673 = sbr.rel (%p2671) target = $region160
        $region159: #{pallas_classification_forward.1} parent=155 // pred_region
          %s2674 = sand.u32 %s648, 1
          %s2675 = scalar_lea.sflag [#allocation5], %s2674
          %s2676 = sand.u32 %s648, 1
          %s2677 = scalar_lea.vmem [#allocation14], %s2676
          %2678 = dma.done %s2675, 16
        $region160: #{pallas_classification_forward.1} parent=155 // pred_fallthru
          _
      $region156: #{pallas_classification_forward.1} parent=5 // pred_fallthru
        _
    $region6: #{pallas_classification_forward.1} parent=1 // loop_footer
      %s47 = sadd.s32 1, %s43
    $region7: #{pallas_classification_forward.1} parent=1 // loop_footer_branch
      %42 = sbr.rel target = $region3
    $region8: #{pallas_classification_forward.1} parent=1 // loop_exit
      _
    %2679 = vsyncpa [#allocation4], 1
    %s2680 = scalar_lea.sflag [#allocation4], 1
    %2681 = vsyncpa %s2680, 1
    %2682 = vsyncpa [#allocation7], 1
    %s2683 = scalar_lea.sflag [#allocation7], 1
    %2684 = vsyncpa %s2683, 1
    %2685 = vsyncpa [#allocation10], 1
    %s2686 = scalar_lea.sflag [#allocation10], 1
    %2687 = vsyncpa %s2686, 1
    %2688 = vsyncpa [#allocation13], 1
    %2689 = vsyncpa [#allocation5], 1
    %s2690 = scalar_lea.sflag [#allocation5], 1
    %2691 = vsyncpa %s2690, 1

</llo_original>
